<compile_context>
chip_gen: v6e
topology: v6e:2x2x1
jax: 0.10.0
libtpu: 0.0.40
codegen_flags: <defaults>
</compile_context>

<pallas_src>
import functools
import math

import jax
import jax.numpy as jnp
import numpy as np
from jax.experimental import pallas as pl
from jax.experimental.pallas import tpu as pltpu

PAD = 0
LN_EPS = 1e-5        # torch.nn.LayerNorm default eps
NEG_INF = -1e9       # finite stand-in for masked_fill(-inf); kept in f32 always


# ----------------------------------------------------------------------------
# Compiler-param helper
# ----------------------------------------------------------------------------
def _vmem_limit_bytes():
    # Raise the scoped-VMEM limit toward physical capacity (v5e/v6e default is
    # 16/32 MiB of 128 MiB; v7x 32 of 64 MiB).  Fail soft if the query is absent.
    try:
        return int(pltpu.get_tpu_info().vmem_capacity_bytes * 3 // 4)
    except Exception:
        return None


def _compiler_params(dim_sem):
    kwargs = dict(dimension_semantics=dim_sem)
    lim = _vmem_limit_bytes()
    if lim is not None:
        kwargs["vmem_limit_bytes"] = lim
    return pltpu.CompilerParams(**kwargs)


# ----------------------------------------------------------------------------
# In-kernel helpers
# ----------------------------------------------------------------------------
def _layer_norm(y, gamma, beta):
    mean = jnp.mean(y, axis=-1, keepdims=True)
    var = jnp.mean((y - mean) ** 2, axis=-1, keepdims=True)
    return (y - mean) * jax.lax.rsqrt(var + LN_EPS) * gamma + beta


def _mha_core(q, k, v, bias, *, n_head, d_k, d_v, cdt, approx_recip):
    """Per-head softmax attention over packed (L, H*d) activations.

    Heads are static lane-axis slices; scores/softmax stay f32; probabilities are
    cast to the MXU dtype before the PV dot.  Context is re-packed lane-dense
    (L, H*d_v) for the output projection.
    """
    inv_temp = jnp.float32(1.0 / math.sqrt(d_k))
    ctx = []
    for h in range(n_head):
        qh = q[:, h * d_k:(h + 1) * d_k].astype(cdt)
        kh = k[:, h * d_k:(h + 1) * d_k].astype(cdt)
        vh = v[:, h * d_v:(h + 1) * d_v].astype(cdt)
        s = jax.lax.dot_general(qh, kh, (((1,), (1,)), ((), ())),
                                preferred_element_type=jnp.float32)
        s = s * inv_temp + bias
        s = s - jnp.max(s, axis=-1, keepdims=True)
        p = jnp.exp(s)
        p = p * pl.reciprocal(jnp.sum(p, axis=-1, keepdims=True),
                              approx=approx_recip)
        ctx.append(jnp.dot(p.astype(cdt), vh,
                           preferred_element_type=jnp.float32))
    return jnp.concatenate(ctx, axis=-1)          # (L, H*d_v), lane-dense


# ----------------------------------------------------------------------------
# Kernels (one fused kernel per sub-layer, grid over batch [+ L rows for FFN])
# ----------------------------------------------------------------------------
def _self_attn_layer_kernel(x_ref, wqkv_ref, bqkv_ref, wo_ref, bo_ref,
                            g_ref, beta_ref, kp_ref, np_ref, o_ref,
                            *, n_head, d_k, d_v, approx_recip):
    # x: (L, d_model); wqkv: (d_model, H*(2*d_k+d_v)); wo: (H*d_v, d_model)
    # kp: (1, L) key-pad row; np: (L, 1) query non-pad column.
    x = x_ref[...]
    L = x.shape[0]
    cdt = wqkv_ref.dtype

    qkv = jnp.dot(x.astype(cdt), wqkv_ref[...],
                  preferred_element_type=jnp.float32) + bqkv_ref[...]
    hdk = n_head * d_k
    q = qkv[:, :hdk]
    k = qkv[:, hdk:2 * hdk]
    v = qkv[:, 2 * hdk:]

    # Causal + key-pad bias built in-kernel (no (B, L, L) HBM bias tensor).
    rows = jax.lax.broadcasted_iota(jnp.int32, (L, L), 0)
    cols = jax.lax.broadcasted_iota(jnp.int32, (L, L), 1)
    masked = jnp.logical_or(cols > rows, kp_ref[...] > 0.5)
    bias = jnp.where(masked, jnp.float32(NEG_INF), jnp.float32(0.0))

    ctx = _mha_core(q, k, v, bias, n_head=n_head, d_k=d_k, d_v=d_v,
                    cdt=cdt, approx_recip=approx_recip)

    y = jnp.dot(ctx.astype(cdt), wo_ref[...],
                preferred_element_type=jnp.float32) + bo_ref[...] + x
    y = _layer_norm(y, g_ref[...], beta_ref[...])
    o_ref[...] = (y * np_ref[...]).astype(o_ref.dtype)


def _cross_attn_layer_kernel(x_ref, enc_ref, wq_ref, bq_ref, wkv_ref, bkv_ref,
                             wo_ref, bo_ref, g_ref, beta_ref, kp_ref, np_ref,
                             o_ref, *, n_head, d_k, d_v, approx_recip):
    # x: (Lq, d_model); enc: (Ls, d_model); kp: (1, Ls) src key-pad row.
    x = x_ref[...]
    cdt = wq_ref.dtype

    q = jnp.dot(x.astype(cdt), wq_ref[...],
                preferred_element_type=jnp.float32) + bq_ref[...]
    kv = jnp.dot(enc_ref[...].astype(cdt), wkv_ref[...],
                 preferred_element_type=jnp.float32) + bkv_ref[...]
    hdk = n_head * d_k
    k = kv[:, :hdk]
    v = kv[:, hdk:]

    bias = jnp.where(kp_ref[...] > 0.5, jnp.float32(NEG_INF),
                     jnp.float32(0.0))                 # (1, Ls) row, broadcasts

    ctx = _mha_core(q, k, v, bias, n_head=n_head, d_k=d_k, d_v=d_v,
                    cdt=cdt, approx_recip=approx_recip)

    y = jnp.dot(ctx.astype(cdt), wo_ref[...],
                preferred_element_type=jnp.float32) + bo_ref[...] + x
    y = _layer_norm(y, g_ref[...], beta_ref[...])
    o_ref[...] = (y * np_ref[...]).astype(o_ref.dtype)


def _ffn_layer_kernel(x_ref, w1_ref, b1_ref, w2_ref, b2_ref, g_ref, beta_ref,
                      np_ref, o_ref):
    # LayerNorm(relu(x @ w1 + b1) @ w2 + b2 + x) * non_pad  on an L-row tile.
    x = x_ref[...]
    cdt = w1_ref.dtype
    h = jnp.dot(x.astype(cdt), w1_ref[...],
                preferred_element_type=jnp.float32) + b1_ref[...]
    h = jnp.maximum(h, 0.0)
    y = jnp.dot(h.astype(cdt), w2_ref[...],
                preferred_element_type=jnp.float32) + b2_ref[...] + x
    y = _layer_norm(y, g_ref[...], beta_ref[...])
    o_ref[...] = (y * np_ref[...]).astype(o_ref.dtype)


# ----------------------------------------------------------------------------
# pallas_call wrappers
# ----------------------------------------------------------------------------
def _self_attention(x, p, kp, np_col, *, n_head, d_k, d_v, approx_recip):
    B, L, d_model = x.shape
    d_qkv = p["w_qkv"].shape[1]
    d_ctx = p["wo"].shape[0]
    kern = functools.partial(_self_attn_layer_kernel, n_head=n_head, d_k=d_k,
                             d_v=d_v, approx_recip=approx_recip)
    return pl.pallas_call(
        kern,
        out_shape=jax.ShapeDtypeStruct((B, L, d_model), x.dtype),
        grid_spec=pltpu.PrefetchScalarGridSpec(
            num_scalar_prefetch=0,
            grid=(B,),
            in_specs=[
                pl.BlockSpec((None, L, d_model), lambda b: (b, 0, 0)),   # x
                pl.BlockSpec((d_model, d_qkv), lambda b: (0, 0)),        # w_qkv
                pl.BlockSpec((1, d_qkv), lambda b: (0, 0)),              # b_qkv
                pl.BlockSpec((d_ctx, d_model), lambda b: (0, 0)),        # wo
                pl.BlockSpec((1, d_model), lambda b: (0, 0)),            # bo
                pl.BlockSpec((1, d_model), lambda b: (0, 0)),            # ln_g
                pl.BlockSpec((1, d_model), lambda b: (0, 0)),            # ln_b
                pl.BlockSpec((None, 1, L), lambda b: (b, 0, 0)),         # key pad
                # query non-pad kept as a tiny (L, 1) block: in-kernel derivation
                # would need a lane->sublane relayout of the (1, L) pad row.
                pl.BlockSpec((None, L, 1), lambda b: (b, 0, 0)),
            ],
            out_specs=pl.BlockSpec((None, L, d_model), lambda b: (b, 0, 0)),
        ),
        compiler_params=_compiler_params(("parallel",)),
    )(x, p["w_qkv"], p["b_qkv"], p["wo"], p["bo"], p["ln_g"], p["ln_b"],
      kp, np_col)


def _cross_attention(x, enc, p, kp, np_col, *, n_head, d_k, d_v, approx_recip):
    B, L, d_model = x.shape
    Ls = enc.shape[1]
    d_q = p["wq"].shape[1]
    d_kv = p["w_kv"].shape[1]
    d_ctx = p["wo"].shape[0]
    kern = functools.partial(_cross_attn_layer_kernel, n_head=n_head, d_k=d_k,
                             d_v=d_v, approx_recip=approx_recip)
    return pl.pallas_call(
        kern,
        out_shape=jax.ShapeDtypeStruct((B, L, d_model), x.dtype),
        grid_spec=pltpu.PrefetchScalarGridSpec(
            num_scalar_prefetch=0,
            grid=(B,),
            in_specs=[
                pl.BlockSpec((None, L, d_model), lambda b: (b, 0, 0)),   # x
                pl.BlockSpec((None, Ls, d_model), lambda b: (b, 0, 0)),  # enc
                pl.BlockSpec((d_model, d_q), lambda b: (0, 0)),          # wq
                pl.BlockSpec((1, d_q), lambda b: (0, 0)),                # bq
                pl.BlockSpec((d_model, d_kv), lambda b: (0, 0)),         # w_kv
                pl.BlockSpec((1, d_kv), lambda b: (0, 0)),               # b_kv
                pl.BlockSpec((d_ctx, d_model), lambda b: (0, 0)),        # wo
                pl.BlockSpec((1, d_model), lambda b: (0, 0)),            # bo
                pl.BlockSpec((1, d_model), lambda b: (0, 0)),            # ln_g
                pl.BlockSpec((1, d_model), lambda b: (0, 0)),            # ln_b
                pl.BlockSpec((None, 1, Ls), lambda b: (b, 0, 0)),        # src key pad
                pl.BlockSpec((None, L, 1), lambda b: (b, 0, 0)),         # non pad
            ],
            out_specs=pl.BlockSpec((None, L, d_model), lambda b: (b, 0, 0)),
        ),
        compiler_params=_compiler_params(("parallel",)),
    )(x, enc, p["wq"], p["bq"], p["w_kv"], p["b_kv"], p["wo"], p["bo"],
      p["ln_g"], p["ln_b"], kp, np_col)


def _ffn(x, p, np_col):
    B, L, d_model = x.shape
    d_inner = p["w1"].shape[1]
    tl = L if L <= 128 else 128      # L-row tiles (also shards onto v7x's 2nd TC)
    assert L % tl == 0
    return pl.pallas_call(
        _ffn_layer_kernel,
        out_shape=jax.ShapeDtypeStruct((B, L, d_model), x.dtype),
        grid_spec=pltpu.PrefetchScalarGridSpec(
            num_scalar_prefetch=0,
            grid=(B, L // tl),
            in_specs=[
                pl.BlockSpec((None, tl, d_model), lambda b, l: (b, l, 0)),
                pl.BlockSpec((d_model, d_inner), lambda b, l: (0, 0)),
                pl.BlockSpec((1, d_inner), lambda b, l: (0, 0)),
                pl.BlockSpec((d_inner, d_model), lambda b, l: (0, 0)),
                pl.BlockSpec((1, d_model), lambda b, l: (0, 0)),
                pl.BlockSpec((1, d_model), lambda b, l: (0, 0)),
                pl.BlockSpec((1, d_model), lambda b, l: (0, 0)),
                pl.BlockSpec((None, tl, 1), lambda b, l: (b, l, 0)),
            ],
            out_specs=pl.BlockSpec((None, tl, d_model), lambda b, l: (b, l, 0)),
        ),
        compiler_params=_compiler_params(("parallel", "parallel")),
    )(x, p["w1"], p["b1"], p["w2"], p["b2"], p["ln_g"], p["ln_b"], np_col)


# ----------------------------------------------------------------------------
# Model wiring
# ----------------------------------------------------------------------------
@functools.partial(jax.jit, static_argnames=("n_head", "d_k", "d_v"))
def decoder_forward(packed, tgt_seq, tgt_pos, tgt_sen_pos, src_sen_pos,
                    enc_output, *, n_head, d_k, d_v):
    act_dtype = packed["layers"][0]["slf"]["w_qkv"].dtype
    # f32 "debug precision" path uses the exact reciprocal; bf16 uses the EUP approx.
    approx_recip = act_dtype != jnp.float32

    # Thin masks only (no (B, L, L) bias tensors are materialized).
    np_col = (tgt_seq != PAD).astype(jnp.float32)[:, :, None]        # (B, L, 1)
    kp_slf = (tgt_seq == PAD).astype(jnp.float32)[:, None, :]        # (B, 1, L)
    kp_enc = (src_sen_pos == PAD).astype(jnp.float32)[:, None, :]    # (B, 1, Ls)

    # TODO(synk): embedding lookups are data-dependent row gathers; done with
    # jnp.take in the wrapper instead of a Pallas gather kernel.
    dec = (jnp.take(packed["word_emb"], tgt_seq, axis=0)
           + jnp.take(packed["pos_table"], tgt_pos, axis=0)
           + jnp.take(packed["sen_emb"], tgt_sen_pos, axis=0)).astype(act_dtype)
    enc = enc_output.astype(act_dtype)

    # TODO(synk): dropout omitted (inference / eval semantics).
    for lp in packed["layers"]:
        dec = _self_attention(dec, lp["slf"], kp_slf, np_col,
                              n_head=n_head, d_k=d_k, d_v=d_v,
                              approx_recip=approx_recip)
        dec = _cross_attention(dec, enc, lp["enc"], kp_enc, np_col,
                               n_head=n_head, d_k=d_k, d_v=d_v,
                               approx_recip=approx_recip)
        dec = _ffn(dec, lp["ffn"], np_col)
    return dec


# ----------------------------------------------------------------------------
# Parameters
# ----------------------------------------------------------------------------
def get_sinusoid_encoding_table(n_position, d_hid, padding_idx=None):
    position = np.arange(n_position, dtype=np.float64)[:, None]
    hid = np.arange(d_hid, dtype=np.float64)[None, :]
    angle = position / np.power(10000.0, 2.0 * np.floor(hid / 2.0) / d_hid)
    table = np.zeros((n_position, d_hid), dtype=np.float64)
    table[:, 0::2] = np.sin(angle[:, 0::2])
    table[:, 1::2] = np.cos(angle[:, 1::2])
    if padding_idx is not None:
        table[padding_idx] = 0.0
    return jnp.asarray(table, dtype=jnp.float32)


def init_params(key, *, n_tgt_vocab, len_max_seq, d_word_vec, n_layers, n_head,
                d_k, d_v, d_model, d_inner):
    assert d_word_vec == d_model
    keys = iter(jax.random.split(key, 8 + n_layers * 32))

    def normal(shape, scale):
        return scale * jax.random.normal(next(keys), shape, jnp.float32)

    word_emb = normal((n_tgt_vocab, d_word_vec), 0.3).at[PAD].set(0.0)
    sen_emb = normal((6, d_word_vec), 0.3).at[PAD].set(0.0)
    pos_table = get_sinusoid_encoding_table(len_max_seq + 1, d_word_vec,
                                            padding_idx=0)

    def attn_params():
        return dict(
            wq=normal((d_model, n_head * d_k), 0.2),
            bq=normal((n_head * d_k,), 0.05),
            wk=normal((d_model, n_head * d_k), 0.2),
            bk=normal((n_head * d_k,), 0.05),
            wv=normal((d_model, n_head * d_v), 0.2),
            bv=normal((n_head * d_v,), 0.05),
            wo=normal((n_head * d_v, d_model), 0.2),
            bo=normal((d_model,), 0.05),
            ln_g=1.0 + normal((d_model,), 0.05),
            ln_b=normal((d_model,), 0.05),
        )

    def ffn_params():
        return dict(
            w1=normal((d_model, d_inner), 0.2),
            b1=normal((d_inner,), 0.05),
            w2=normal((d_inner, d_model), 0.2),
            b2=normal((d_model,), 0.05),
            ln_g=1.0 + normal((d_model,), 0.05),
            ln_b=normal((d_model,), 0.05),
        )

    layers = [dict(slf=attn_params(), enc=attn_params(), ffn=ffn_params())
              for _ in range(n_layers)]
    return dict(word_emb=word_emb, pos_table=pos_table, sen_emb=sen_emb,
                layers=layers)


def pack_params(params, compute_dtype=jnp.float32):
    """Pre-pack fused QKV / KV projections and cast matmul weights ONCE (not per
    forward).  Biases, LN params, embeddings and masks stay f32 (f32 epilogues)."""
    cd = compute_dtype
    f32 = jnp.float32

    def pack_attn(p, fuse_qkv):
        out = dict(
            wo=p["wo"].astype(cd),
            bo=p["bo"].reshape(1, -1).astype(f32),
            ln_g=p["ln_g"].reshape(1, -1).astype(f32),
            ln_b=p["ln_b"].reshape(1, -1).astype(f32),
        )
        if fuse_qkv:
            out["w_qkv"] = jnp.concatenate([p["wq"], p["wk"], p["wv"]],
                                           axis=1).astype(cd)
            out["b_qkv"] = jnp.concatenate([p["bq"], p["bk"], p["bv"]],
                                           axis=0).reshape(1, -1).astype(f32)
        else:
            out["wq"] = p["wq"].astype(cd)
            out["bq"] = p["bq"].reshape(1, -1).astype(f32)
            out["w_kv"] = jnp.concatenate([p["wk"], p["wv"]], axis=1).astype(cd)
            out["b_kv"] = jnp.concatenate([p["bk"], p["bv"]],
                                          axis=0).reshape(1, -1).astype(f32)
        return out

    def pack_ffn(p):
        return dict(
            w1=p["w1"].astype(cd), b1=p["b1"].reshape(1, -1).astype(f32),
            w2=p["w2"].astype(cd), b2=p["b2"].reshape(1, -1).astype(f32),
            ln_g=p["ln_g"].reshape(1, -1).astype(f32),
            ln_b=p["ln_b"].reshape(1, -1).astype(f32),
        )

    layers = [dict(slf=pack_attn(lp["slf"], True),
                   enc=pack_attn(lp["enc"], False),
                   ffn=pack_ffn(lp["ffn"]))
              for lp in params["layers"]]
    return dict(word_emb=params["word_emb"], pos_table=params["pos_table"],
                sen_emb=params["sen_emb"], layers=layers)


# ----------------------------------------------------------------------------
# Plain-JAX reference (mirrors the PyTorch forward, eval semantics)
# ----------------------------------------------------------------------------
def _ln_ref(y, g, b):
    m = jnp.mean(y, axis=-1, keepdims=True)
    v = jnp.mean((y - m) ** 2, axis=-1, keepdims=True)
    return (y - m) / jnp.sqrt(v + LN_EPS) * g + b


def _reference_decoder(params, tgt_seq, tgt_pos, tgt_sen_pos, src_sen_pos,
                       enc_output, *, n_head, d_k, d_v):
    B, L = tgt_seq.shape
    Ls = src_sen_pos.shape[1]
    hi = "highest"

    non_pad = (tgt_seq != PAD).astype(jnp.float32)[:, :, None]
    key_pad = (tgt_seq == PAD)[:, None, :]
    subseq = (jnp.triu(jnp.ones((L, L), jnp.int32), k=1) > 0)[None]
    slf_bias = jnp.where(jnp.logical_or(key_pad, subseq), NEG_INF, 0.0)
    enc_bias = jnp.where(
        jnp.broadcast_to((src_sen_pos == PAD)[:, None, :], (B, L, Ls)),
        NEG_INF, 0.0)

    dec = (params["word_emb"][tgt_seq] + params["pos_table"][tgt_pos]
           + params["sen_emb"][tgt_sen_pos])

    def proj(x, w, b):
        return jnp.einsum("bld,de->ble", x, w, precision=hi) + b

    def mha(x_q, x_kv, bias, p):
        Bq, Lq, _ = x_q.shape
        Lk = x_kv.shape[1]
        q = proj(x_q, p["wq"], p["bq"]).reshape(Bq, Lq, n_head, d_k).transpose(0, 2, 1, 3)
        k = proj(x_kv, p["wk"], p["bk"]).reshape(Bq, Lk, n_head, d_k).transpose(0, 2, 1, 3)
        v = proj(x_kv, p["wv"], p["bv"]).reshape(Bq, Lk, n_head, d_v).transpose(0, 2, 1, 3)
        s = jnp.einsum("bhqd,bhkd->bhqk", q, k, precision=hi) / math.sqrt(d_k)
        s = s + bias[:, None]
        a = jax.nn.softmax(s, axis=-1)
        ctx = jnp.einsum("bhqk,bhkd->bhqd", a, v, precision=hi)
        ctx = ctx.transpose(0, 2, 1, 3).reshape(Bq, Lq, n_head * d_v)
        y = jnp.einsum("ble,ed->bld", ctx, p["wo"], precision=hi) + p["bo"] + x_q
        return _ln_ref(y, p["ln_g"], p["ln_b"])

    def ffn(x, p):
        h = jax.nn.relu(jnp.einsum("bld,de->ble", x, p["w1"], precision=hi) + p["b1"])
        y = jnp.einsum("ble,ed->bld", h, p["w2"], precision=hi) + p["b2"] + x
        return _ln_ref(y, p["ln_g"], p["ln_b"])

    for lp in params["layers"]:
        dec = mha(dec, dec, slf_bias, lp["slf"]) * non_pad
        dec = mha(dec, enc_output, enc_bias, lp["enc"]) * non_pad
        dec = ffn(dec, lp["ffn"]) * non_pad
    return dec


# ----------------------------------------------------------------------------
# Demo
# ----------------------------------------------------------------------------
if __name__ == "__main__":
    n_tgt_vocab = 50
    len_max_seq = 8
    d_word_vec = d_model = 32
    n_layers = 2
    n_head = 4
    d_k = d_v = 8
    d_inner = 64
    B, L, Ls = 2, len_max_seq, 6

    key = jax.random.PRNGKey(0)
    key, pkey, ekey = jax.random.split(key, 3)

    params = init_params(
        pkey, n_tgt_vocab=n_tgt_vocab, len_max_seq=len_max_seq,
        d_word_vec=d_word_vec, n_layers=n_layers, n_head=n_head,
        d_k=d_k, d_v=d_v, d_model=d_model, d_inner=d_inner)

    tgt_seq = jnp.array([[3, 5, 7, 9, 4, 0, 0, 0],
                         [6, 8, 2, 11, 0, 0, 0, 0]], dtype=jnp.int32)
    tgt_pos = jnp.array([[1, 2, 3, 4, 5, 0, 0, 0],
                         [1, 2, 3, 4, 0, 0, 0, 0]], dtype=jnp.int32)
    tgt_sen_pos = jnp.array([[1, 1, 2, 2, 3, 0, 0, 0],
                             [1, 2, 2, 3, 0, 0, 0, 0]], dtype=jnp.int32)
    src_sen_pos = jnp.array([[1, 1, 2, 2, 3, 0],
                             [1, 2, 3, 0, 0, 0]], dtype=jnp.int32)
    enc_output = 0.5 * jax.random.normal(ekey, (B, Ls, d_model), jnp.float32)

    ref = _reference_decoder(params, tgt_seq, tgt_pos, tgt_sen_pos, src_sen_pos,
                             enc_output, n_head=n_head, d_k=d_k, d_v=d_v)

    # f32 "debug precision" path — tight check against the exact-f32 reference.
    packed_f32 = pack_params(params, jnp.float32)
    out = decoder_forward(packed_f32, tgt_seq, tgt_pos, tgt_sen_pos, src_sen_pos,
                          enc_output, n_head=n_head, d_k=d_k, d_v=d_v)
    out = jax.block_until_ready(out)
    assert out.shape == (B, L, d_model)
    err = float(jnp.max(jnp.abs(out - ref)))
    assert err < 3e-3, f"f32 mismatch vs reference: {err}"

    # bf16 MXU-input path (production streaming dtype) — looser tolerance.
    packed_bf16 = pack_params(params, jnp.bfloat16)
    out_bf16 = decoder_forward(packed_bf16, tgt_seq, tgt_pos, tgt_sen_pos,
                               src_sen_pos, enc_output,
                               n_head=n_head, d_k=d_k, d_v=d_v)
    out_bf16 = jax.block_until_ready(out_bf16)
    assert out_bf16.shape == (B, L, d_model)
    err_bf16 = float(jnp.max(jnp.abs(out_bf16.astype(jnp.float32) - ref)))
    assert err_bf16 < 0.5, f"bf16 mismatch vs reference: {err_bf16}"

    print("KERNEL_OK")
</pallas_src>

<mosaic_0001>
module attributes {stable_mosaic.version = 11 : i64} {
  func.func @_self_attn_layer_kernel(%arg0: i32, %arg1: memref<1x8x32xf32, #tpu.memory_space<vmem>>, %arg2: memref<32x96xf32, #tpu.memory_space<vmem>>, %arg3: memref<1x96xf32, #tpu.memory_space<vmem>>, %arg4: memref<32x32xf32, #tpu.memory_space<vmem>>, %arg5: memref<1x32xf32, #tpu.memory_space<vmem>>, %arg6: memref<1x32xf32, #tpu.memory_space<vmem>>, %arg7: memref<1x32xf32, #tpu.memory_space<vmem>>, %arg8: memref<1x1x8xf32, #tpu.memory_space<vmem>>, %arg9: memref<1x8x1xf32, #tpu.memory_space<vmem>>, %arg10: memref<1x8x32xf32, #tpu.memory_space<vmem>>) attributes {dimension_semantics = [#tpu.dimension_semantics<parallel>], iteration_bounds = array<i64: 2>, scalar_prefetch = 0 : i64, scratch_operands = 0 : i64, tpu.core_type = #tpu.core_type<tc>, window_params = [{transform_indices = @transform_0, window_bounds = array<i64: 1, 8, 32>}, {pipeline_mode = #tpu.pipeline_mode<synchronous>, transform_indices = @transform_1, window_bounds = array<i64: 32, 96>}, {pipeline_mode = #tpu.pipeline_mode<synchronous>, transform_indices = @transform_2, window_bounds = array<i64: 1, 96>}, {pipeline_mode = #tpu.pipeline_mode<synchronous>, transform_indices = @transform_3, window_bounds = array<i64: 32, 32>}, {pipeline_mode = #tpu.pipeline_mode<synchronous>, transform_indices = @transform_4, window_bounds = array<i64: 1, 32>}, {pipeline_mode = #tpu.pipeline_mode<synchronous>, transform_indices = @transform_5, window_bounds = array<i64: 1, 32>}, {pipeline_mode = #tpu.pipeline_mode<synchronous>, transform_indices = @transform_6, window_bounds = array<i64: 1, 32>}, {transform_indices = @transform_7, window_bounds = array<i64: 1, 1, 8>}, {transform_indices = @transform_8, window_bounds = array<i64: 1, 8, 1>}, {transform_indices = @transform_9, window_bounds = array<i64: 1, 8, 32>}]} {
    %c0 = arith.constant 0 : index
    %c0_0 = arith.constant 0 : index
    %c0_1 = arith.constant 0 : index
    %0 = vector.load %arg1[%c0, %c0_0, %c0_1] : memref<1x8x32xf32, #tpu.memory_space<vmem>>, vector<1x8x32xf32>
    %1 = vector.shape_cast %0 : vector<1x8x32xf32> to vector<8x32xf32>
    %c0_2 = arith.constant 0 : index
    %c0_3 = arith.constant 0 : index
    %2 = vector.load %arg2[%c0_2, %c0_3] : memref<32x96xf32, #tpu.memory_space<vmem>>, vector<32x96xf32>
    %cst = arith.constant dense<0.000000e+00> : vector<8x96xf32>
    %3 = tpu.matmul %1, %2, %cst {dimension_numbers = #tpu.dot_dimension_numbers<[1], [0], [0], [1], [0, 0, 1, 1], [], []>} : vector<8x32xf32>, vector<32x96xf32>, vector<8x96xf32> -> vector<8x96xf32>
    %c0_4 = arith.constant 0 : index
    %c0_5 = arith.constant 0 : index
    %4 = vector.load %arg3[%c0_4, %c0_5] : memref<1x96xf32, #tpu.memory_space<vmem>>, vector<1x96xf32>
    %5 = vector.broadcast %4 : vector<1x96xf32> to vector<8x96xf32>
    %6 = arith.addf %3, %5 : vector<8x96xf32>
    %7 = vector.extract_strided_slice %6 {offsets = [0, 0], sizes = [8, 32], strides = [1, 1]} : vector<8x96xf32> to vector<8x32xf32>
    %8 = vector.extract_strided_slice %6 {offsets = [0, 32], sizes = [8, 32], strides = [1, 1]} : vector<8x96xf32> to vector<8x32xf32>
    %9 = vector.extract_strided_slice %6 {offsets = [0, 64], sizes = [8, 32], strides = [1, 1]} : vector<8x96xf32> to vector<8x32xf32>
    %10 = tpu.iota {dimensions = array<i32: 0>} : vector<8x8xi32>
    %11 = tpu.iota {dimensions = array<i32: 1>} : vector<8x8xi32>
    %12 = arith.cmpi sgt, %11, %10 : vector<8x8xi32>
    %c0_6 = arith.constant 0 : index
    %c0_7 = arith.constant 0 : index
    %c0_8 = arith.constant 0 : index
    %13 = vector.load %arg8[%c0_6, %c0_7, %c0_8] : memref<1x1x8xf32, #tpu.memory_space<vmem>>, vector<1x1x8xf32>
    %14 = vector.shape_cast %13 : vector<1x1x8xf32> to vector<1x8xf32>
    %cst_9 = arith.constant 5.000000e-01 : f32
    %15 = vector.broadcast %cst_9 : f32 to vector<1x8xf32>
    %16 = arith.cmpf ogt, %14, %15 : vector<1x8xf32>
    %17 = vector.broadcast %16 : vector<1x8xi1> to vector<8x8xi1>
    %18 = arith.ori %12, %17 : vector<8x8xi1>
    %cst_10 = arith.constant -1.000000e+09 : f32
    %cst_11 = arith.constant 0.000000e+00 : f32
    %19 = vector.broadcast %cst_10 : f32 to vector<8x8xf32>
    %20 = vector.broadcast %cst_11 : f32 to vector<8x8xf32>
    %21 = arith.select %18, %19, %20 : vector<8x8xi1>, vector<8x8xf32>
    %22 = vector.extract_strided_slice %7 {offsets = [0, 0], sizes = [8, 8], strides = [1, 1]} : vector<8x32xf32> to vector<8x8xf32>
    %23 = vector.extract_strided_slice %8 {offsets = [0, 0], sizes = [8, 8], strides = [1, 1]} : vector<8x32xf32> to vector<8x8xf32>
    %24 = vector.extract_strided_slice %9 {offsets = [0, 0], sizes = [8, 8], strides = [1, 1]} : vector<8x32xf32> to vector<8x8xf32>
    %cst_12 = arith.constant dense<0.000000e+00> : vector<8x8xf32>
    %25 = tpu.matmul %22, %23, %cst_12 {dimension_numbers = #tpu.dot_dimension_numbers<[1], [1], [0], [0], [0, 0, 1, 0], [], []>} : vector<8x8xf32>, vector<8x8xf32>, vector<8x8xf32> -> vector<8x8xf32>
    %cst_13 = arith.constant 0.353553385 : f32
    %26 = vector.broadcast %cst_13 : f32 to vector<8x8xf32>
    %27 = arith.mulf %25, %26 : vector<8x8xf32>
    %28 = arith.addf %27, %21 : vector<8x8xf32>
    %cst_14 = arith.constant dense<0xFF800000> : vector<8xf32>
    %29 = vector.multi_reduction <maximumf>, %28, %cst_14 [1] : vector<8x8xf32> to vector<8xf32>
    %30 = vector.shape_cast %29 : vector<8xf32> to vector<8x1xf32>
    %31 = vector.broadcast %30 : vector<8x1xf32> to vector<8x8xf32>
    %32 = arith.subf %28, %31 : vector<8x8xf32>
    %33 = math.exp %32 : vector<8x8xf32>
    %cst_15 = arith.constant dense<0.000000e+00> : vector<8xf32>
    %34 = vector.multi_reduction <add>, %33, %cst_15 [1] : vector<8x8xf32> to vector<8xf32>
    %35 = vector.shape_cast %34 : vector<8xf32> to vector<8x1xf32>
    %36 = tpu.reciprocal %35 : vector<8x1xf32> -> vector<8x1xf32>
    %37 = vector.broadcast %36 : vector<8x1xf32> to vector<8x8xf32>
    %38 = arith.mulf %33, %37 : vector<8x8xf32>
    %cst_16 = arith.constant dense<0.000000e+00> : vector<8x8xf32>
    %39 = tpu.matmul %38, %24, %cst_16 {dimension_numbers = #tpu.dot_dimension_numbers<[1], [0], [0], [1], [0, 0, 1, 1], [], []>} : vector<8x8xf32>, vector<8x8xf32>, vector<8x8xf32> -> vector<8x8xf32>
    %40 = vector.extract_strided_slice %7 {offsets = [0, 8], sizes = [8, 8], strides = [1, 1]} : vector<8x32xf32> to vector<8x8xf32>
    %41 = vector.extract_strided_slice %8 {offsets = [0, 8], sizes = [8, 8], strides = [1, 1]} : vector<8x32xf32> to vector<8x8xf32>
    %42 = vector.extract_strided_slice %9 {offsets = [0, 8], sizes = [8, 8], strides = [1, 1]} : vector<8x32xf32> to vector<8x8xf32>
    %cst_17 = arith.constant dense<0.000000e+00> : vector<8x8xf32>
    %43 = tpu.matmul %40, %41, %cst_17 {dimension_numbers = #tpu.dot_dimension_numbers<[1], [1], [0], [0], [0, 0, 1, 0], [], []>} : vector<8x8xf32>, vector<8x8xf32>, vector<8x8xf32> -> vector<8x8xf32>
    %cst_18 = arith.constant 0.353553385 : f32
    %44 = vector.broadcast %cst_18 : f32 to vector<8x8xf32>
    %45 = arith.mulf %43, %44 : vector<8x8xf32>
    %46 = arith.addf %45, %21 : vector<8x8xf32>
    %cst_19 = arith.constant dense<0xFF800000> : vector<8xf32>
    %47 = vector.multi_reduction <maximumf>, %46, %cst_19 [1] : vector<8x8xf32> to vector<8xf32>
    %48 = vector.shape_cast %47 : vector<8xf32> to vector<8x1xf32>
    %49 = vector.broadcast %48 : vector<8x1xf32> to vector<8x8xf32>
    %50 = arith.subf %46, %49 : vector<8x8xf32>
    %51 = math.exp %50 : vector<8x8xf32>
    %cst_20 = arith.constant dense<0.000000e+00> : vector<8xf32>
    %52 = vector.multi_reduction <add>, %51, %cst_20 [1] : vector<8x8xf32> to vector<8xf32>
    %53 = vector.shape_cast %52 : vector<8xf32> to vector<8x1xf32>
    %54 = tpu.reciprocal %53 : vector<8x1xf32> -> vector<8x1xf32>
    %55 = vector.broadcast %54 : vector<8x1xf32> to vector<8x8xf32>
    %56 = arith.mulf %51, %55 : vector<8x8xf32>
    %cst_21 = arith.constant dense<0.000000e+00> : vector<8x8xf32>
    %57 = tpu.matmul %56, %42, %cst_21 {dimension_numbers = #tpu.dot_dimension_numbers<[1], [0], [0], [1], [0, 0, 1, 1], [], []>} : vector<8x8xf32>, vector<8x8xf32>, vector<8x8xf32> -> vector<8x8xf32>
    %58 = vector.extract_strided_slice %7 {offsets = [0, 16], sizes = [8, 8], strides = [1, 1]} : vector<8x32xf32> to vector<8x8xf32>
    %59 = vector.extract_strided_slice %8 {offsets = [0, 16], sizes = [8, 8], strides = [1, 1]} : vector<8x32xf32> to vector<8x8xf32>
    %60 = vector.extract_strided_slice %9 {offsets = [0, 16], sizes = [8, 8], strides = [1, 1]} : vector<8x32xf32> to vector<8x8xf32>
    %cst_22 = arith.constant dense<0.000000e+00> : vector<8x8xf32>
    %61 = tpu.matmul %58, %59, %cst_22 {dimension_numbers = #tpu.dot_dimension_numbers<[1], [1], [0], [0], [0, 0, 1, 0], [], []>} : vector<8x8xf32>, vector<8x8xf32>, vector<8x8xf32> -> vector<8x8xf32>
    %cst_23 = arith.constant 0.353553385 : f32
    %62 = vector.broadcast %cst_23 : f32 to vector<8x8xf32>
    %63 = arith.mulf %61, %62 : vector<8x8xf32>
    %64 = arith.addf %63, %21 : vector<8x8xf32>
    %cst_24 = arith.constant dense<0xFF800000> : vector<8xf32>
    %65 = vector.multi_reduction <maximumf>, %64, %cst_24 [1] : vector<8x8xf32> to vector<8xf32>
    %66 = vector.shape_cast %65 : vector<8xf32> to vector<8x1xf32>
    %67 = vector.broadcast %66 : vector<8x1xf32> to vector<8x8xf32>
    %68 = arith.subf %64, %67 : vector<8x8xf32>
    %69 = math.exp %68 : vector<8x8xf32>
    %cst_25 = arith.constant dense<0.000000e+00> : vector<8xf32>
    %70 = vector.multi_reduction <add>, %69, %cst_25 [1] : vector<8x8xf32> to vector<8xf32>
    %71 = vector.shape_cast %70 : vector<8xf32> to vector<8x1xf32>
    %72 = tpu.reciprocal %71 : vector<8x1xf32> -> vector<8x1xf32>
    %73 = vector.broadcast %72 : vector<8x1xf32> to vector<8x8xf32>
    %74 = arith.mulf %69, %73 : vector<8x8xf32>
    %cst_26 = arith.constant dense<0.000000e+00> : vector<8x8xf32>
    %75 = tpu.matmul %74, %60, %cst_26 {dimension_numbers = #tpu.dot_dimension_numbers<[1], [0], [0], [1], [0, 0, 1, 1], [], []>} : vector<8x8xf32>, vector<8x8xf32>, vector<8x8xf32> -> vector<8x8xf32>
    %76 = vector.extract_strided_slice %7 {offsets = [0, 24], sizes = [8, 8], strides = [1, 1]} : vector<8x32xf32> to vector<8x8xf32>
    %77 = vector.extract_strided_slice %8 {offsets = [0, 24], sizes = [8, 8], strides = [1, 1]} : vector<8x32xf32> to vector<8x8xf32>
    %78 = vector.extract_strided_slice %9 {offsets = [0, 24], sizes = [8, 8], strides = [1, 1]} : vector<8x32xf32> to vector<8x8xf32>
    %cst_27 = arith.constant dense<0.000000e+00> : vector<8x8xf32>
    %79 = tpu.matmul %76, %77, %cst_27 {dimension_numbers = #tpu.dot_dimension_numbers<[1], [1], [0], [0], [0, 0, 1, 0], [], []>} : vector<8x8xf32>, vector<8x8xf32>, vector<8x8xf32> -> vector<8x8xf32>
    %cst_28 = arith.constant 0.353553385 : f32
    %80 = vector.broadcast %cst_28 : f32 to vector<8x8xf32>
    %81 = arith.mulf %79, %80 : vector<8x8xf32>
    %82 = arith.addf %81, %21 : vector<8x8xf32>
    %cst_29 = arith.constant dense<0xFF800000> : vector<8xf32>
    %83 = vector.multi_reduction <maximumf>, %82, %cst_29 [1] : vector<8x8xf32> to vector<8xf32>
    %84 = vector.shape_cast %83 : vector<8xf32> to vector<8x1xf32>
    %85 = vector.broadcast %84 : vector<8x1xf32> to vector<8x8xf32>
    %86 = arith.subf %82, %85 : vector<8x8xf32>
    %87 = math.exp %86 : vector<8x8xf32>
    %cst_30 = arith.constant dense<0.000000e+00> : vector<8xf32>
    %88 = vector.multi_reduction <add>, %87, %cst_30 [1] : vector<8x8xf32> to vector<8xf32>
    %89 = vector.shape_cast %88 : vector<8xf32> to vector<8x1xf32>
    %90 = tpu.reciprocal %89 : vector<8x1xf32> -> vector<8x1xf32>
    %91 = vector.broadcast %90 : vector<8x1xf32> to vector<8x8xf32>
    %92 = arith.mulf %87, %91 : vector<8x8xf32>
    %cst_31 = arith.constant dense<0.000000e+00> : vector<8x8xf32>
    %93 = tpu.matmul %92, %78, %cst_31 {dimension_numbers = #tpu.dot_dimension_numbers<[1], [0], [0], [1], [0, 0, 1, 1], [], []>} : vector<8x8xf32>, vector<8x8xf32>, vector<8x8xf32> -> vector<8x8xf32>
    %94 = tpu.concatenate %39, %57, %75, %93 in 1 : vector<8x8xf32>, vector<8x8xf32>, vector<8x8xf32>, vector<8x8xf32> -> vector<8x32xf32>
    %c0_32 = arith.constant 0 : index
    %c0_33 = arith.constant 0 : index
    %95 = vector.load %arg4[%c0_32, %c0_33] : memref<32x32xf32, #tpu.memory_space<vmem>>, vector<32x32xf32>
    %cst_34 = arith.constant dense<0.000000e+00> : vector<8x32xf32>
    %96 = tpu.matmul %94, %95, %cst_34 {dimension_numbers = #tpu.dot_dimension_numbers<[1], [0], [0], [1], [0, 0, 1, 1], [], []>} : vector<8x32xf32>, vector<32x32xf32>, vector<8x32xf32> -> vector<8x32xf32>
    %c0_35 = arith.constant 0 : index
    %c0_36 = arith.constant 0 : index
    %97 = vector.load %arg5[%c0_35, %c0_36] : memref<1x32xf32, #tpu.memory_space<vmem>>, vector<1x32xf32>
    %98 = vector.broadcast %97 : vector<1x32xf32> to vector<8x32xf32>
    %99 = arith.addf %96, %98 : vector<8x32xf32>
    %100 = arith.addf %99, %1 : vector<8x32xf32>
    %c0_37 = arith.constant 0 : index
    %c0_38 = arith.constant 0 : index
    %101 = vector.load %arg6[%c0_37, %c0_38] : memref<1x32xf32, #tpu.memory_space<vmem>>, vector<1x32xf32>
    %c0_39 = arith.constant 0 : index
    %c0_40 = arith.constant 0 : index
    %102 = vector.load %arg7[%c0_39, %c0_40] : memref<1x32xf32, #tpu.memory_space<vmem>>, vector<1x32xf32>
    %cst_41 = arith.constant dense<0.000000e+00> : vector<8xf32>
    %103 = vector.multi_reduction <add>, %100, %cst_41 [1] : vector<8x32xf32> to vector<8xf32>
    %104 = vector.shape_cast %103 : vector<8xf32> to vector<8x1xf32>
    %cst_42 = arith.constant 3.200000e+01 : f32
    %105 = vector.broadcast %cst_42 : f32 to vector<8x1xf32>
    %106 = arith.divf %104, %105 : vector<8x1xf32>
    %107 = vector.broadcast %106 : vector<8x1xf32> to vector<8x32xf32>
    %108 = arith.subf %100, %107 : vector<8x32xf32>
    %109 = arith.mulf %108, %108 : vector<8x32xf32>
    %cst_43 = arith.constant dense<0.000000e+00> : vector<8xf32>
    %110 = vector.multi_reduction <add>, %109, %cst_43 [1] : vector<8x32xf32> to vector<8xf32>
    %111 = vector.shape_cast %110 : vector<8xf32> to vector<8x1xf32>
    %cst_44 = arith.constant 3.200000e+01 : f32
    %112 = vector.broadcast %cst_44 : f32 to vector<8x1xf32>
    %113 = arith.divf %111, %112 : vector<8x1xf32>
    %114 = vector.broadcast %106 : vector<8x1xf32> to vector<8x32xf32>
    %115 = arith.subf %100, %114 : vector<8x32xf32>
    %cst_45 = arith.constant 9.99999974E-6 : f32
    %116 = vector.broadcast %cst_45 : f32 to vector<8x1xf32>
    %117 = arith.addf %113, %116 : vector<8x1xf32>
    %118 = math.rsqrt %117 : vector<8x1xf32>
    %119 = vector.broadcast %118 : vector<8x1xf32> to vector<8x32xf32>
    %120 = arith.mulf %115, %119 : vector<8x32xf32>
    %121 = vector.broadcast %101 : vector<1x32xf32> to vector<8x32xf32>
    %122 = arith.mulf %120, %121 : vector<8x32xf32>
    %123 = vector.broadcast %102 : vector<1x32xf32> to vector<8x32xf32>
    %124 = arith.addf %122, %123 : vector<8x32xf32>
    %c0_46 = arith.constant 0 : index
    %c0_47 = arith.constant 0 : index
    %c0_48 = arith.constant 0 : index
    %125 = vector.load %arg9[%c0_46, %c0_47, %c0_48] : memref<1x8x1xf32, #tpu.memory_space<vmem>>, vector<1x8x1xf32>
    %126 = vector.shape_cast %125 : vector<1x8x1xf32> to vector<8x1xf32>
    %127 = vector.broadcast %126 : vector<8x1xf32> to vector<8x32xf32>
    %128 = arith.mulf %124, %127 : vector<8x32xf32>
    %c0_49 = arith.constant 0 : index
    %c0_50 = arith.constant 0 : index
    %c0_51 = arith.constant 0 : index
    %129 = vector.load %arg10[%c0_49, %c0_50, %c0_51] : memref<1x8x32xf32, #tpu.memory_space<vmem>>, vector<1x8x32xf32>
    %130 = vector.shape_cast %129 : vector<1x8x32xf32> to vector<8x32xf32>
    %131 = vector.shape_cast %128 : vector<8x32xf32> to vector<1x8x32xf32>
    tpu.vector_store %arg10[%c0_49, %c0_50, %c0_51], %131 {strides = array<i32>} : memref<1x8x32xf32, #tpu.memory_space<vmem>>, vector<1x8x32xf32>,
    return
  }
  func.func @transform_0(%arg0: i32) -> (i32, i32, i32) {
    %c0_i32 = arith.constant 0 : i32
    %c0_i32_0 = arith.constant 0 : i32
    %c0_i32_1 = arith.constant 0 : i32
    return %arg0, %c0_i32, %c0_i32_0 : i32, i32, i32
  }
  func.func @transform_1(%arg0: i32) -> (i32, i32) {
    %c0_i32 = arith.constant 0 : i32
    %c0_i32_0 = arith.constant 0 : i32
    %c0_i32_1 = arith.constant 0 : i32
    return %c0_i32, %c0_i32_0 : i32, i32
  }
  func.func @transform_2(%arg0: i32) -> (i32, i32) {
    %c0_i32 = arith.constant 0 : i32
    %c0_i32_0 = arith.constant 0 : i32
    %c0_i32_1 = arith.constant 0 : i32
    return %c0_i32, %c0_i32_0 : i32, i32
  }
  func.func @transform_3(%arg0: i32) -> (i32, i32) {
    %c0_i32 = arith.constant 0 : i32
    %c0_i32_0 = arith.constant 0 : i32
    %c0_i32_1 = arith.constant 0 : i32
    return %c0_i32, %c0_i32_0 : i32, i32
  }
  func.func @transform_4(%arg0: i32) -> (i32, i32) {
    %c0_i32 = arith.constant 0 : i32
    %c0_i32_0 = arith.constant 0 : i32
    %c0_i32_1 = arith.constant 0 : i32
    return %c0_i32, %c0_i32_0 : i32, i32
  }
  func.func @transform_5(%arg0: i32) -> (i32, i32) {
    %c0_i32 = arith.constant 0 : i32
    %c0_i32_0 = arith.constant 0 : i32
    %c0_i32_1 = arith.constant 0 : i32
    return %c0_i32, %c0_i32_0 : i32, i32
  }
  func.func @transform_6(%arg0: i32) -> (i32, i32) {
    %c0_i32 = arith.constant 0 : i32
    %c0_i32_0 = arith.constant 0 : i32
    %c0_i32_1 = arith.constant 0 : i32
    return %c0_i32, %c0_i32_0 : i32, i32
  }
  func.func @transform_7(%arg0: i32) -> (i32, i32, i32) {
    %c0_i32 = arith.constant 0 : i32
    %c0_i32_0 = arith.constant 0 : i32
    %c0_i32_1 = arith.constant 0 : i32
    return %arg0, %c0_i32, %c0_i32_0 : i32, i32, i32
  }
  func.func @transform_8(%arg0: i32) -> (i32, i32, i32) {
    %c0_i32 = arith.constant 0 : i32
    %c0_i32_0 = arith.constant 0 : i32
    %c0_i32_1 = arith.constant 0 : i32
    return %arg0, %c0_i32, %c0_i32_0 : i32, i32, i32
  }
  func.func @transform_9(%arg0: i32) -> (i32, i32, i32) {
    %c0_i32 = arith.constant 0 : i32
    %c0_i32_0 = arith.constant 0 : i32
    %c0_i32_1 = arith.constant 0 : i32
    return %arg0, %c0_i32, %c0_i32_0 : i32, i32, i32
  }
}

module attributes {stable_mosaic.version = 11 : i64} {
  func.func @_ffn_layer_kernel(%arg0: i32, %arg1: i32, %arg2: memref<1x8x32xf32, #tpu.memory_space<vmem>>, %arg3: memref<32x64xf32, #tpu.memory_space<vmem>>, %arg4: memref<1x64xf32, #tpu.memory_space<vmem>>, %arg5: memref<64x32xf32, #tpu.memory_space<vmem>>, %arg6: memref<1x32xf32, #tpu.memory_space<vmem>>, %arg7: memref<1x32xf32, #tpu.memory_space<vmem>>, %arg8: memref<1x32xf32, #tpu.memory_space<vmem>>, %arg9: memref<1x8x1xf32, #tpu.memory_space<vmem>>, %arg10: memref<1x8x32xf32, #tpu.memory_space<vmem>>) attributes {dimension_semantics = [#tpu.dimension_semantics<parallel>, #tpu.dimension_semantics<parallel>], iteration_bounds = array<i64: 2, 1>, scalar_prefetch = 0 : i64, scratch_operands = 0 : i64, tpu.core_type = #tpu.core_type<tc>, window_params = [{transform_indices = @transform_0, window_bounds = array<i64: 1, 8, 32>}, {pipeline_mode = #tpu.pipeline_mode<synchronous>, transform_indices = @transform_1, window_bounds = array<i64: 32, 64>}, {pipeline_mode = #tpu.pipeline_mode<synchronous>, transform_indices = @transform_2, window_bounds = array<i64: 1, 64>}, {pipeline_mode = #tpu.pipeline_mode<synchronous>, transform_indices = @transform_3, window_bounds = array<i64: 64, 32>}, {pipeline_mode = #tpu.pipeline_mode<synchronous>, transform_indices = @transform_4, window_bounds = array<i64: 1, 32>}, {pipeline_mode = #tpu.pipeline_mode<synchronous>, transform_indices = @transform_5, window_bounds = array<i64: 1, 32>}, {pipeline_mode = #tpu.pipeline_mode<synchronous>, transform_indices = @transform_6, window_bounds = array<i64: 1, 32>}, {transform_indices = @transform_7, window_bounds = array<i64: 1, 8, 1>}, {transform_indices = @transform_8, window_bounds = array<i64: 1, 8, 32>}]} {
    %c0 = arith.constant 0 : index
    %c0_0 = arith.constant 0 : index
    %c0_1 = arith.constant 0 : index
    %0 = vector.load %arg2[%c0, %c0_0, %c0_1] : memref<1x8x32xf32, #tpu.memory_space<vmem>>, vector<1x8x32xf32>
    %1 = vector.shape_cast %0 : vector<1x8x32xf32> to vector<8x32xf32>
    %c0_2 = arith.constant 0 : index
    %c0_3 = arith.constant 0 : index
    %2 = vector.load %arg3[%c0_2, %c0_3] : memref<32x64xf32, #tpu.memory_space<vmem>>, vector<32x64xf32>
    %cst = arith.constant dense<0.000000e+00> : vector<8x64xf32>
    %3 = tpu.matmul %1, %2, %cst {dimension_numbers = #tpu.dot_dimension_numbers<[1], [0], [0], [1], [0, 0, 1, 1], [], []>} : vector<8x32xf32>, vector<32x64xf32>, vector<8x64xf32> -> vector<8x64xf32>
    %c0_4 = arith.constant 0 : index
    %c0_5 = arith.constant 0 : index
    %4 = vector.load %arg4[%c0_4, %c0_5] : memref<1x64xf32, #tpu.memory_space<vmem>>, vector<1x64xf32>
    %5 = vector.broadcast %4 : vector<1x64xf32> to vector<8x64xf32>
    %6 = arith.addf %3, %5 : vector<8x64xf32>
    %cst_6 = arith.constant 0.000000e+00 : f32
    %7 = vector.broadcast %cst_6 : f32 to vector<8x64xf32>
    %8 = arith.maximumf %6, %7 : vector<8x64xf32>
    %c0_7 = arith.constant 0 : index
    %c0_8 = arith.constant 0 : index
    %9 = vector.load %arg5[%c0_7, %c0_8] : memref<64x32xf32, #tpu.memory_space<vmem>>, vector<64x32xf32>
    %cst_9 = arith.constant dense<0.000000e+00> : vector<8x32xf32>
    %10 = tpu.matmul %8, %9, %cst_9 {dimension_numbers = #tpu.dot_dimension_numbers<[1], [0], [0], [1], [0, 0, 1, 1], [], []>} : vector<8x64xf32>, vector<64x32xf32>, vector<8x32xf32> -> vector<8x32xf32>
    %c0_10 = arith.constant 0 : index
    %c0_11 = arith.constant 0 : index
    %11 = vector.load %arg6[%c0_10, %c0_11] : memref<1x32xf32, #tpu.memory_space<vmem>>, vector<1x32xf32>
    %12 = vector.broadcast %11 : vector<1x32xf32> to vector<8x32xf32>
    %13 = arith.addf %10, %12 : vector<8x32xf32>
    %14 = arith.addf %13, %1 : vector<8x32xf32>
    %c0_12 = arith.constant 0 : index
    %c0_13 = arith.constant 0 : index
    %15 = vector.load %arg7[%c0_12, %c0_13] : memref<1x32xf32, #tpu.memory_space<vmem>>, vector<1x32xf32>
    %c0_14 = arith.constant 0 : index
    %c0_15 = arith.constant 0 : index
    %16 = vector.load %arg8[%c0_14, %c0_15] : memref<1x32xf32, #tpu.memory_space<vmem>>, vector<1x32xf32>
    %cst_16 = arith.constant dense<0.000000e+00> : vector<8xf32>
    %17 = vector.multi_reduction <add>, %14, %cst_16 [1] : vector<8x32xf32> to vector<8xf32>
    %18 = vector.shape_cast %17 : vector<8xf32> to vector<8x1xf32>
    %cst_17 = arith.constant 3.200000e+01 : f32
    %19 = vector.broadcast %cst_17 : f32 to vector<8x1xf32>
    %20 = arith.divf %18, %19 : vector<8x1xf32>
    %21 = vector.broadcast %20 : vector<8x1xf32> to vector<8x32xf32>
    %22 = arith.subf %14, %21 : vector<8x32xf32>
    %23 = arith.mulf %22, %22 : vector<8x32xf32>
    %cst_18 = arith.constant dense<0.000000e+00> : vector<8xf32>
    %24 = vector.multi_reduction <add>, %23, %cst_18 [1] : vector<8x32xf32> to vector<8xf32>
    %25 = vector.shape_cast %24 : vector<8xf32> to vector<8x1xf32>
    %cst_19 = arith.constant 3.200000e+01 : f32
    %26 = vector.broadcast %cst_19 : f32 to vector<8x1xf32>
    %27 = arith.divf %25, %26 : vector<8x1xf32>
    %28 = vector.broadcast %20 : vector<8x1xf32> to vector<8x32xf32>
    %29 = arith.subf %14, %28 : vector<8x32xf32>
    %cst_20 = arith.constant 9.99999974E-6 : f32
    %30 = vector.broadcast %cst_20 : f32 to vector<8x1xf32>
    %31 = arith.addf %27, %30 : vector<8x1xf32>
    %32 = math.rsqrt %31 : vector<8x1xf32>
    %33 = vector.broadcast %32 : vector<8x1xf32> to vector<8x32xf32>
    %34 = arith.mulf %29, %33 : vector<8x32xf32>
    %35 = vector.broadcast %15 : vector<1x32xf32> to vector<8x32xf32>
    %36 = arith.mulf %34, %35 : vector<8x32xf32>
    %37 = vector.broadcast %16 : vector<1x32xf32> to vector<8x32xf32>
    %38 = arith.addf %36, %37 : vector<8x32xf32>
    %c0_21 = arith.constant 0 : index
    %c0_22 = arith.constant 0 : index
    %c0_23 = arith.constant 0 : index
    %39 = vector.load %arg9[%c0_21, %c0_22, %c0_23] : memref<1x8x1xf32, #tpu.memory_space<vmem>>, vector<1x8x1xf32>
    %40 = vector.shape_cast %39 : vector<1x8x1xf32> to vector<8x1xf32>
    %41 = vector.broadcast %40 : vector<8x1xf32> to vector<8x32xf32>
    %42 = arith.mulf %38, %41 : vector<8x32xf32>
    %c0_24 = arith.constant 0 : index
    %c0_25 = arith.constant 0 : index
    %c0_26 = arith.constant 0 : index
    %43 = vector.load %arg10[%c0_24, %c0_25, %c0_26] : memref<1x8x32xf32, #tpu.memory_space<vmem>>, vector<1x8x32xf32>
    %44 = vector.shape_cast %43 : vector<1x8x32xf32> to vector<8x32xf32>
    %45 = vector.shape_cast %42 : vector<8x32xf32> to vector<1x8x32xf32>
    tpu.vector_store %arg10[%c0_24, %c0_25, %c0_26], %45 {strides = array<i32>} : memref<1x8x32xf32, #tpu.memory_space<vmem>>, vector<1x8x32xf32>,
    return
  }
  func.func @transform_0(%arg0: i32, %arg1: i32) -> (i32, i32, i32) {
    %c0_i32 = arith.constant 0 : i32
    %c0_i32_0 = arith.constant 0 : i32
    return %arg0, %arg1, %c0_i32 : i32, i32, i32
  }
  func.func @transform_1(%arg0: i32, %arg1: i32) -> (i32, i32) {
    %c0_i32 = arith.constant 0 : i32
    %c0_i32_0 = arith.constant 0 : i32
    %c0_i32_1 = arith.constant 0 : i32
    return %c0_i32, %c0_i32_0 : i32, i32
  }
  func.func @transform_2(%arg0: i32, %arg1: i32) -> (i32, i32) {
    %c0_i32 = arith.constant 0 : i32
    %c0_i32_0 = arith.constant 0 : i32
    %c0_i32_1 = arith.constant 0 : i32
    return %c0_i32, %c0_i32_0 : i32, i32
  }
  func.func @transform_3(%arg0: i32, %arg1: i32) -> (i32, i32) {
    %c0_i32 = arith.constant 0 : i32
    %c0_i32_0 = arith.constant 0 : i32
    %c0_i32_1 = arith.constant 0 : i32
    return %c0_i32, %c0_i32_0 : i32, i32
  }
  func.func @transform_4(%arg0: i32, %arg1: i32) -> (i32, i32) {
    %c0_i32 = arith.constant 0 : i32
    %c0_i32_0 = arith.constant 0 : i32
    %c0_i32_1 = arith.constant 0 : i32
    return %c0_i32, %c0_i32_0 : i32, i32
  }
  func.func @transform_5(%arg0: i32, %arg1: i32) -> (i32, i32) {
    %c0_i32 = arith.constant 0 : i32
    %c0_i32_0 = arith.constant 0 : i32
    %c0_i32_1 = arith.constant 0 : i32
    return %c0_i32, %c0_i32_0 : i32, i32
  }
  func.func @transform_6(%arg0: i32, %arg1: i32) -> (i32, i32) {
    %c0_i32 = arith.constant 0 : i32
    %c0_i32_0 = arith.constant 0 : i32
    %c0_i32_1 = arith.constant 0 : i32
    return %c0_i32, %c0_i32_0 : i32, i32
  }
  func.func @transform_7(%arg0: i32, %arg1: i32) -> (i32, i32, i32) {
    %c0_i32 = arith.constant 0 : i32
    %c0_i32_0 = arith.constant 0 : i32
    return %arg0, %arg1, %c0_i32 : i32, i32, i32
  }
  func.func @transform_8(%arg0: i32, %arg1: i32) -> (i32, i32, i32) {
    %c0_i32 = arith.constant 0 : i32
    %c0_i32_0 = arith.constant 0 : i32
    return %arg0, %arg1, %c0_i32 : i32, i32, i32
  }
}

module attributes {stable_mosaic.version = 11 : i64} {
  func.func @_ffn_layer_kernel(%arg0: i32, %arg1: i32, %arg2: memref<1x8x32xf32, #tpu.memory_space<vmem>>, %arg3: memref<32x64xf32, #tpu.memory_space<vmem>>, %arg4: memref<1x64xf32, #tpu.memory_space<vmem>>, %arg5: memref<64x32xf32, #tpu.memory_space<vmem>>, %arg6: memref<1x32xf32, #tpu.memory_space<vmem>>, %arg7: memref<1x32xf32, #tpu.memory_space<vmem>>, %arg8: memref<1x32xf32, #tpu.memory_space<vmem>>, %arg9: memref<1x8x1xf32, #tpu.memory_space<vmem>>, %arg10: memref<1x8x32xf32, #tpu.memory_space<vmem>>) attributes {dimension_semantics = [#tpu.dimension_semantics<parallel>, #tpu.dimension_semantics<parallel>], iteration_bounds = array<i64: 2, 1>, scalar_prefetch = 0 : i64, scratch_operands = 0 : i64, tpu.core_type = #tpu.core_type<tc>, window_params = [{transform_indices = @transform_0, window_bounds = array<i64: 1, 8, 32>}, {pipeline_mode = #tpu.pipeline_mode<synchronous>, transform_indices = @transform_1, window_bounds = array<i64: 32, 64>}, {pipeline_mode = #tpu.pipeline_mode<synchronous>, transform_indices = @transform_2, window_bounds = array<i64: 1, 64>}, {pipeline_mode = #tpu.pipeline_mode<synchronous>, transform_indices = @transform_3, window_bounds = array<i64: 64, 32>}, {pipeline_mode = #tpu.pipeline_mode<synchronous>, transform_indices = @transform_4, window_bounds = array<i64: 1, 32>}, {pipeline_mode = #tpu.pipeline_mode<synchronous>, transform_indices = @transform_5, window_bounds = array<i64: 1, 32>}, {pipeline_mode = #tpu.pipeline_mode<synchronous>, transform_indices = @transform_6, window_bounds = array<i64: 1, 32>}, {transform_indices = @transform_7, window_bounds = array<i64: 1, 8, 1>}, {transform_indices = @transform_8, window_bounds = array<i64: 1, 8, 32>}]} {
    %c0 = arith.constant 0 : index
    %c0_0 = arith.constant 0 : index
    %c0_1 = arith.constant 0 : index
    %0 = vector.load %arg2[%c0, %c0_0, %c0_1] : memref<1x8x32xf32, #tpu.memory_space<vmem>>, vector<1x8x32xf32>
    %1 = vector.shape_cast %0 : vector<1x8x32xf32> to vector<8x32xf32>
    %c0_2 = arith.constant 0 : index
    %c0_3 = arith.constant 0 : index
    %2 = vector.load %arg3[%c0_2, %c0_3] : memref<32x64xf32, #tpu.memory_space<vmem>>, vector<32x64xf32>
    %cst = arith.constant dense<0.000000e+00> : vector<8x64xf32>
    %3 = tpu.matmul %1, %2, %cst {dimension_numbers = #tpu.dot_dimension_numbers<[1], [0], [0], [1], [0, 0, 1, 1], [], []>} : vector<8x32xf32>, vector<32x64xf32>, vector<8x64xf32> -> vector<8x64xf32>
    %c0_4 = arith.constant 0 : index
    %c0_5 = arith.constant 0 : index
    %4 = vector.load %arg4[%c0_4, %c0_5] : memref<1x64xf32, #tpu.memory_space<vmem>>, vector<1x64xf32>
    %5 = vector.broadcast %4 : vector<1x64xf32> to vector<8x64xf32>
    %6 = arith.addf %3, %5 : vector<8x64xf32>
    %cst_6 = arith.constant 0.000000e+00 : f32
    %7 = vector.broadcast %cst_6 : f32 to vector<8x64xf32>
    %8 = arith.maximumf %6, %7 : vector<8x64xf32>
    %c0_7 = arith.constant 0 : index
    %c0_8 = arith.constant 0 : index
    %9 = vector.load %arg5[%c0_7, %c0_8] : memref<64x32xf32, #tpu.memory_space<vmem>>, vector<64x32xf32>
    %cst_9 = arith.constant dense<0.000000e+00> : vector<8x32xf32>
    %10 = tpu.matmul %8, %9, %cst_9 {dimension_numbers = #tpu.dot_dimension_numbers<[1], [0], [0], [1], [0, 0, 1, 1], [], []>} : vector<8x64xf32>, vector<64x32xf32>, vector<8x32xf32> -> vector<8x32xf32>
    %c0_10 = arith.constant 0 : index
    %c0_11 = arith.constant 0 : index
    %11 = vector.load %arg6[%c0_10, %c0_11] : memref<1x32xf32, #tpu.memory_space<vmem>>, vector<1x32xf32>
    %12 = vector.broadcast %11 : vector<1x32xf32> to vector<8x32xf32>
    %13 = arith.addf %10, %12 : vector<8x32xf32>
    %14 = arith.addf %13, %1 : vector<8x32xf32>
    %c0_12 = arith.constant 0 : index
    %c0_13 = arith.constant 0 : index
    %15 = vector.load %arg7[%c0_12, %c0_13] : memref<1x32xf32, #tpu.memory_space<vmem>>, vector<1x32xf32>
    %c0_14 = arith.constant 0 : index
    %c0_15 = arith.constant 0 : index
    %16 = vector.load %arg8[%c0_14, %c0_15] : memref<1x32xf32, #tpu.memory_space<vmem>>, vector<1x32xf32>
    %cst_16 = arith.constant dense<0.000000e+00> : vector<8xf32>
    %17 = vector.multi_reduction <add>, %14, %cst_16 [1] : vector<8x32xf32> to vector<8xf32>
    %18 = vector.shape_cast %17 : vector<8xf32> to vector<8x1xf32>
    %cst_17 = arith.constant 3.200000e+01 : f32
    %19 = vector.broadcast %cst_17 : f32 to vector<8x1xf32>
    %20 = arith.divf %18, %19 : vector<8x1xf32>
    %21 = vector.broadcast %20 : vector<8x1xf32> to vector<8x32xf32>
    %22 = arith.subf %14, %21 : vector<8x32xf32>
    %23 = arith.mulf %22, %22 : vector<8x32xf32>
    %cst_18 = arith.constant dense<0.000000e+00> : vector<8xf32>
    %24 = vector.multi_reduction <add>, %23, %cst_18 [1] : vector<8x32xf32> to vector<8xf32>
    %25 = vector.shape_cast %24 : vector<8xf32> to vector<8x1xf32>
    %cst_19 = arith.constant 3.200000e+01 : f32
    %26 = vector.broadcast %cst_19 : f32 to vector<8x1xf32>
    %27 = arith.divf %25, %26 : vector<8x1xf32>
    %28 = vector.broadcast %20 : vector<8x1xf32> to vector<8x32xf32>
    %29 = arith.subf %14, %28 : vector<8x32xf32>
    %cst_20 = arith.constant 9.99999974E-6 : f32
    %30 = vector.broadcast %cst_20 : f32 to vector<8x1xf32>
    %31 = arith.addf %27, %30 : vector<8x1xf32>
    %32 = math.rsqrt %31 : vector<8x1xf32>
    %33 = vector.broadcast %32 : vector<8x1xf32> to vector<8x32xf32>
    %34 = arith.mulf %29, %33 : vector<8x32xf32>
    %35 = vector.broadcast %15 : vector<1x32xf32> to vector<8x32xf32>
    %36 = arith.mulf %34, %35 : vector<8x32xf32>
    %37 = vector.broadcast %16 : vector<1x32xf32> to vector<8x32xf32>
    %38 = arith.addf %36, %37 : vector<8x32xf32>
    %c0_21 = arith.constant 0 : index
    %c0_22 = arith.constant 0 : index
    %c0_23 = arith.constant 0 : index
    %39 = vector.load %arg9[%c0_21, %c0_22, %c0_23] : memref<1x8x1xf32, #tpu.memory_space<vmem>>, vector<1x8x1xf32>
    %40 = vector.shape_cast %39 : vector<1x8x1xf32> to vector<8x1xf32>
    %41 = vector.broadcast %40 : vector<8x1xf32> to vector<8x32xf32>
    %42 = arith.mulf %38, %41 : vector<8x32xf32>
    %c0_24 = arith.constant 0 : index
    %c0_25 = arith.constant 0 : index
    %c0_26 = arith.constant 0 : index
    %43 = vector.load %arg10[%c0_24, %c0_25, %c0_26] : memref<1x8x32xf32, #tpu.memory_space<vmem>>, vector<1x8x32xf32>
    %44 = vector.shape_cast %43 : vector<1x8x32xf32> to vector<8x32xf32>
    %45 = vector.shape_cast %42 : vector<8x32xf32> to vector<1x8x32xf32>
    tpu.vector_store %arg10[%c0_24, %c0_25, %c0_26], %45 {strides = array<i32>} : memref<1x8x32xf32, #tpu.memory_space<vmem>>, vector<1x8x32xf32>,
    return
  }
  func.func @transform_0(%arg0: i32, %arg1: i32) -> (i32, i32, i32) {
    %c0_i32 = arith.constant 0 : i32
    %c0_i32_0 = arith.constant 0 : i32
    return %arg0, %arg1, %c0_i32 : i32, i32, i32
  }
  func.func @transform_1(%arg0: i32, %arg1: i32) -> (i32, i32) {
    %c0_i32 = arith.constant 0 : i32
    %c0_i32_0 = arith.constant 0 : i32
    %c0_i32_1 = arith.constant 0 : i32
    return %c0_i32, %c0_i32_0 : i32, i32
  }
  func.func @transform_2(%arg0: i32, %arg1: i32) -> (i32, i32) {
    %c0_i32 = arith.constant 0 : i32
    %c0_i32_0 = arith.constant 0 : i32
    %c0_i32_1 = arith.constant 0 : i32
    return %c0_i32, %c0_i32_0 : i32, i32
  }
  func.func @transform_3(%arg0: i32, %arg1: i32) -> (i32, i32) {
    %c0_i32 = arith.constant 0 : i32
    %c0_i32_0 = arith.constant 0 : i32
    %c0_i32_1 = arith.constant 0 : i32
    return %c0_i32, %c0_i32_0 : i32, i32
  }
  func.func @transform_4(%arg0: i32, %arg1: i32) -> (i32, i32) {
    %c0_i32 = arith.constant 0 : i32
    %c0_i32_0 = arith.constant 0 : i32
    %c0_i32_1 = arith.constant 0 : i32
    return %c0_i32, %c0_i32_0 : i32, i32
  }
  func.func @transform_5(%arg0: i32, %arg1: i32) -> (i32, i32) {
    %c0_i32 = arith.constant 0 : i32
    %c0_i32_0 = arith.constant 0 : i32
    %c0_i32_1 = arith.constant 0 : i32
    return %c0_i32, %c0_i32_0 : i32, i32
  }
  func.func @transform_6(%arg0: i32, %arg1: i32) -> (i32, i32) {
    %c0_i32 = arith.constant 0 : i32
    %c0_i32_0 = arith.constant 0 : i32
    %c0_i32_1 = arith.constant 0 : i32
    return %c0_i32, %c0_i32_0 : i32, i32
  }
  func.func @transform_7(%arg0: i32, %arg1: i32) -> (i32, i32, i32) {
    %c0_i32 = arith.constant 0 : i32
    %c0_i32_0 = arith.constant 0 : i32
    return %arg0, %arg1, %c0_i32 : i32, i32, i32
  }
  func.func @transform_8(%arg0: i32, %arg1: i32) -> (i32, i32, i32) {
    %c0_i32 = arith.constant 0 : i32
    %c0_i32_0 = arith.constant 0 : i32
    return %arg0, %arg1, %c0_i32 : i32, i32, i32
  }
}

module attributes {stable_mosaic.version = 11 : i64} {
  func.func @_cross_attn_layer_kernel(%arg0: i32, %arg1: memref<1x8x32xf32, #tpu.memory_space<vmem>>, %arg2: memref<1x6x32xf32, #tpu.memory_space<vmem>>, %arg3: memref<32x32xf32, #tpu.memory_space<vmem>>, %arg4: memref<1x32xf32, #tpu.memory_space<vmem>>, %arg5: memref<32x64xf32, #tpu.memory_space<vmem>>, %arg6: memref<1x64xf32, #tpu.memory_space<vmem>>, %arg7: memref<32x32xf32, #tpu.memory_space<vmem>>, %arg8: memref<1x32xf32, #tpu.memory_space<vmem>>, %arg9: memref<1x32xf32, #tpu.memory_space<vmem>>, %arg10: memref<1x32xf32, #tpu.memory_space<vmem>>, %arg11: memref<1x1x6xf32, #tpu.memory_space<vmem>>, %arg12: memref<1x8x1xf32, #tpu.memory_space<vmem>>, %arg13: memref<1x8x32xf32, #tpu.memory_space<vmem>>) attributes {dimension_semantics = [#tpu.dimension_semantics<parallel>], iteration_bounds = array<i64: 2>, scalar_prefetch = 0 : i64, scratch_operands = 0 : i64, tpu.core_type = #tpu.core_type<tc>, window_params = [{transform_indices = @transform_0, window_bounds = array<i64: 1, 8, 32>}, {transform_indices = @transform_1, window_bounds = array<i64: 1, 6, 32>}, {pipeline_mode = #tpu.pipeline_mode<synchronous>, transform_indices = @transform_2, window_bounds = array<i64: 32, 32>}, {pipeline_mode = #tpu.pipeline_mode<synchronous>, transform_indices = @transform_3, window_bounds = array<i64: 1, 32>}, {pipeline_mode = #tpu.pipeline_mode<synchronous>, transform_indices = @transform_4, window_bounds = array<i64: 32, 64>}, {pipeline_mode = #tpu.pipeline_mode<synchronous>, transform_indices = @transform_5, window_bounds = array<i64: 1, 64>}, {pipeline_mode = #tpu.pipeline_mode<synchronous>, transform_indices = @transform_6, window_bounds = array<i64: 32, 32>}, {pipeline_mode = #tpu.pipeline_mode<synchronous>, transform_indices = @transform_7, window_bounds = array<i64: 1, 32>}, {pipeline_mode = #tpu.pipeline_mode<synchronous>, transform_indices = @transform_8, window_bounds = array<i64: 1, 32>}, {pipeline_mode = #tpu.pipeline_mode<synchronous>, transform_indices = @transform_9, window_bounds = array<i64: 1, 32>}, {transform_indices = @transform_10, window_bounds = array<i64: 1, 1, 6>}, {transform_indices = @transform_11, window_bounds = array<i64: 1, 8, 1>}, {transform_indices = @transform_12, window_bounds = array<i64: 1, 8, 32>}]} {
    %c0 = arith.constant 0 : index
    %c0_0 = arith.constant 0 : index
    %c0_1 = arith.constant 0 : index
    %0 = vector.load %arg1[%c0, %c0_0, %c0_1] : memref<1x8x32xf32, #tpu.memory_space<vmem>>, vector<1x8x32xf32>
    %1 = vector.shape_cast %0 : vector<1x8x32xf32> to vector<8x32xf32>
    %c0_2 = arith.constant 0 : index
    %c0_3 = arith.constant 0 : index
    %2 = vector.load %arg3[%c0_2, %c0_3] : memref<32x32xf32, #tpu.memory_space<vmem>>, vector<32x32xf32>
    %cst = arith.constant dense<0.000000e+00> : vector<8x32xf32>
    %3 = tpu.matmul %1, %2, %cst {dimension_numbers = #tpu.dot_dimension_numbers<[1], [0], [0], [1], [0, 0, 1, 1], [], []>} : vector<8x32xf32>, vector<32x32xf32>, vector<8x32xf32> -> vector<8x32xf32>
    %c0_4 = arith.constant 0 : index
    %c0_5 = arith.constant 0 : index
    %4 = vector.load %arg4[%c0_4, %c0_5] : memref<1x32xf32, #tpu.memory_space<vmem>>, vector<1x32xf32>
    %5 = vector.broadcast %4 : vector<1x32xf32> to vector<8x32xf32>
    %6 = arith.addf %3, %5 : vector<8x32xf32>
    %c0_6 = arith.constant 0 : index
    %c0_7 = arith.constant 0 : index
    %c0_8 = arith.constant 0 : index
    %7 = vector.load %arg2[%c0_6, %c0_7, %c0_8] : memref<1x6x32xf32, #tpu.memory_space<vmem>>, vector<1x6x32xf32>
    %8 = vector.shape_cast %7 : vector<1x6x32xf32> to vector<6x32xf32>
    %c0_9 = arith.constant 0 : index
    %c0_10 = arith.constant 0 : index
    %9 = vector.load %arg5[%c0_9, %c0_10] : memref<32x64xf32, #tpu.memory_space<vmem>>, vector<32x64xf32>
    %cst_11 = arith.constant dense<0.000000e+00> : vector<6x64xf32>
    %10 = tpu.matmul %8, %9, %cst_11 {dimension_numbers = #tpu.dot_dimension_numbers<[1], [0], [0], [1], [0, 0, 1, 1], [], []>} : vector<6x32xf32>, vector<32x64xf32>, vector<6x64xf32> -> vector<6x64xf32>
    %c0_12 = arith.constant 0 : index
    %c0_13 = arith.constant 0 : index
    %11 = vector.load %arg6[%c0_12, %c0_13] : memref<1x64xf32, #tpu.memory_space<vmem>>, vector<1x64xf32>
    %12 = vector.broadcast %11 : vector<1x64xf32> to vector<6x64xf32>
    %13 = arith.addf %10, %12 : vector<6x64xf32>
    %14 = vector.extract_strided_slice %13 {offsets = [0, 0], sizes = [6, 32], strides = [1, 1]} : vector<6x64xf32> to vector<6x32xf32>
    %15 = vector.extract_strided_slice %13 {offsets = [0, 32], sizes = [6, 32], strides = [1, 1]} : vector<6x64xf32> to vector<6x32xf32>
    %c0_14 = arith.constant 0 : index
    %c0_15 = arith.constant 0 : index
    %c0_16 = arith.constant 0 : index
    %16 = vector.load %arg11[%c0_14, %c0_15, %c0_16] : memref<1x1x6xf32, #tpu.memory_space<vmem>>, vector<1x1x6xf32>
    %17 = vector.shape_cast %16 : vector<1x1x6xf32> to vector<1x6xf32>
    %cst_17 = arith.constant 5.000000e-01 : f32
    %18 = vector.broadcast %cst_17 : f32 to vector<1x6xf32>
    %19 = arith.cmpf ogt, %17, %18 : vector<1x6xf32>
    %cst_18 = arith.constant -1.000000e+09 : f32
    %cst_19 = arith.constant 0.000000e+00 : f32
    %20 = vector.broadcast %cst_18 : f32 to vector<1x6xf32>
    %21 = vector.broadcast %cst_19 : f32 to vector<1x6xf32>
    %22 = arith.select %19, %20, %21 : vector<1x6xi1>, vector<1x6xf32>
    %23 = vector.extract_strided_slice %6 {offsets = [0, 0], sizes = [8, 8], strides = [1, 1]} : vector<8x32xf32> to vector<8x8xf32>
    %24 = vector.extract_strided_slice %14 {offsets = [0, 0], sizes = [6, 8], strides = [1, 1]} : vector<6x32xf32> to vector<6x8xf32>
    %25 = vector.extract_strided_slice %15 {offsets = [0, 0], sizes = [6, 8], strides = [1, 1]} : vector<6x32xf32> to vector<6x8xf32>
    %cst_20 = arith.constant dense<0.000000e+00> : vector<8x6xf32>
    %26 = tpu.matmul %23, %24, %cst_20 {dimension_numbers = #tpu.dot_dimension_numbers<[1], [1], [0], [0], [0, 0, 1, 0], [], []>} : vector<8x8xf32>, vector<6x8xf32>, vector<8x6xf32> -> vector<8x6xf32>
    %cst_21 = arith.constant 0.353553385 : f32
    %27 = vector.broadcast %cst_21 : f32 to vector<8x6xf32>
    %28 = arith.mulf %26, %27 : vector<8x6xf32>
    %29 = vector.broadcast %22 : vector<1x6xf32> to vector<8x6xf32>
    %30 = arith.addf %28, %29 : vector<8x6xf32>
    %cst_22 = arith.constant dense<0xFF800000> : vector<8xf32>
    %31 = vector.multi_reduction <maximumf>, %30, %cst_22 [1] : vector<8x6xf32> to vector<8xf32>
    %32 = vector.shape_cast %31 : vector<8xf32> to vector<8x1xf32>
    %33 = vector.broadcast %32 : vector<8x1xf32> to vector<8x6xf32>
    %34 = arith.subf %30, %33 : vector<8x6xf32>
    %35 = math.exp %34 : vector<8x6xf32>
    %cst_23 = arith.constant dense<0.000000e+00> : vector<8xf32>
    %36 = vector.multi_reduction <add>, %35, %cst_23 [1] : vector<8x6xf32> to vector<8xf32>
    %37 = vector.shape_cast %36 : vector<8xf32> to vector<8x1xf32>
    %38 = tpu.reciprocal %37 : vector<8x1xf32> -> vector<8x1xf32>
    %39 = vector.broadcast %38 : vector<8x1xf32> to vector<8x6xf32>
    %40 = arith.mulf %35, %39 : vector<8x6xf32>
    %cst_24 = arith.constant dense<0.000000e+00> : vector<8x8xf32>
    %41 = tpu.matmul %40, %25, %cst_24 {dimension_numbers = #tpu.dot_dimension_numbers<[1], [0], [0], [1], [0, 0, 1, 1], [], []>} : vector<8x6xf32>, vector<6x8xf32>, vector<8x8xf32> -> vector<8x8xf32>
    %42 = vector.extract_strided_slice %6 {offsets = [0, 8], sizes = [8, 8], strides = [1, 1]} : vector<8x32xf32> to vector<8x8xf32>
    %43 = vector.extract_strided_slice %14 {offsets = [0, 8], sizes = [6, 8], strides = [1, 1]} : vector<6x32xf32> to vector<6x8xf32>
    %44 = vector.extract_strided_slice %15 {offsets = [0, 8], sizes = [6, 8], strides = [1, 1]} : vector<6x32xf32> to vector<6x8xf32>
    %cst_25 = arith.constant dense<0.000000e+00> : vector<8x6xf32>
    %45 = tpu.matmul %42, %43, %cst_25 {dimension_numbers = #tpu.dot_dimension_numbers<[1], [1], [0], [0], [0, 0, 1, 0], [], []>} : vector<8x8xf32>, vector<6x8xf32>, vector<8x6xf32> -> vector<8x6xf32>
    %cst_26 = arith.constant 0.353553385 : f32
    %46 = vector.broadcast %cst_26 : f32 to vector<8x6xf32>
    %47 = arith.mulf %45, %46 : vector<8x6xf32>
    %48 = vector.broadcast %22 : vector<1x6xf32> to vector<8x6xf32>
    %49 = arith.addf %47, %48 : vector<8x6xf32>
    %cst_27 = arith.constant dense<0xFF800000> : vector<8xf32>
    %50 = vector.multi_reduction <maximumf>, %49, %cst_27 [1] : vector<8x6xf32> to vector<8xf32>
    %51 = vector.shape_cast %50 : vector<8xf32> to vector<8x1xf32>
    %52 = vector.broadcast %51 : vector<8x1xf32> to vector<8x6xf32>
    %53 = arith.subf %49, %52 : vector<8x6xf32>
    %54 = math.exp %53 : vector<8x6xf32>
    %cst_28 = arith.constant dense<0.000000e+00> : vector<8xf32>
    %55 = vector.multi_reduction <add>, %54, %cst_28 [1] : vector<8x6xf32> to vector<8xf32>
    %56 = vector.shape_cast %55 : vector<8xf32> to vector<8x1xf32>
    %57 = tpu.reciprocal %56 : vector<8x1xf32> -> vector<8x1xf32>
    %58 = vector.broadcast %57 : vector<8x1xf32> to vector<8x6xf32>
    %59 = arith.mulf %54, %58 : vector<8x6xf32>
    %cst_29 = arith.constant dense<0.000000e+00> : vector<8x8xf32>
    %60 = tpu.matmul %59, %44, %cst_29 {dimension_numbers = #tpu.dot_dimension_numbers<[1], [0], [0], [1], [0, 0, 1, 1], [], []>} : vector<8x6xf32>, vector<6x8xf32>, vector<8x8xf32> -> vector<8x8xf32>
    %61 = vector.extract_strided_slice %6 {offsets = [0, 16], sizes = [8, 8], strides = [1, 1]} : vector<8x32xf32> to vector<8x8xf32>
    %62 = vector.extract_strided_slice %14 {offsets = [0, 16], sizes = [6, 8], strides = [1, 1]} : vector<6x32xf32> to vector<6x8xf32>
    %63 = vector.extract_strided_slice %15 {offsets = [0, 16], sizes = [6, 8], strides = [1, 1]} : vector<6x32xf32> to vector<6x8xf32>
    %cst_30 = arith.constant dense<0.000000e+00> : vector<8x6xf32>
    %64 = tpu.matmul %61, %62, %cst_30 {dimension_numbers = #tpu.dot_dimension_numbers<[1], [1], [0], [0], [0, 0, 1, 0], [], []>} : vector<8x8xf32>, vector<6x8xf32>, vector<8x6xf32> -> vector<8x6xf32>
    %cst_31 = arith.constant 0.353553385 : f32
    %65 = vector.broadcast %cst_31 : f32 to vector<8x6xf32>
    %66 = arith.mulf %64, %65 : vector<8x6xf32>
    %67 = vector.broadcast %22 : vector<1x6xf32> to vector<8x6xf32>
    %68 = arith.addf %66, %67 : vector<8x6xf32>
    %cst_32 = arith.constant dense<0xFF800000> : vector<8xf32>
    %69 = vector.multi_reduction <maximumf>, %68, %cst_32 [1] : vector<8x6xf32> to vector<8xf32>
    %70 = vector.shape_cast %69 : vector<8xf32> to vector<8x1xf32>
    %71 = vector.broadcast %70 : vector<8x1xf32> to vector<8x6xf32>
    %72 = arith.subf %68, %71 : vector<8x6xf32>
    %73 = math.exp %72 : vector<8x6xf32>
    %cst_33 = arith.constant dense<0.000000e+00> : vector<8xf32>
    %74 = vector.multi_reduction <add>, %73, %cst_33 [1] : vector<8x6xf32> to vector<8xf32>
    %75 = vector.shape_cast %74 : vector<8xf32> to vector<8x1xf32>
    %76 = tpu.reciprocal %75 : vector<8x1xf32> -> vector<8x1xf32>
    %77 = vector.broadcast %76 : vector<8x1xf32> to vector<8x6xf32>
    %78 = arith.mulf %73, %77 : vector<8x6xf32>
    %cst_34 = arith.constant dense<0.000000e+00> : vector<8x8xf32>
    %79 = tpu.matmul %78, %63, %cst_34 {dimension_numbers = #tpu.dot_dimension_numbers<[1], [0], [0], [1], [0, 0, 1, 1], [], []>} : vector<8x6xf32>, vector<6x8xf32>, vector<8x8xf32> -> vector<8x8xf32>
    %80 = vector.extract_strided_slice %6 {offsets = [0, 24], sizes = [8, 8], strides = [1, 1]} : vector<8x32xf32> to vector<8x8xf32>
    %81 = vector.extract_strided_slice %14 {offsets = [0, 24], sizes = [6, 8], strides = [1, 1]} : vector<6x32xf32> to vector<6x8xf32>
    %82 = vector.extract_strided_slice %15 {offsets = [0, 24], sizes = [6, 8], strides = [1, 1]} : vector<6x32xf32> to vector<6x8xf32>
    %cst_35 = arith.constant dense<0.000000e+00> : vector<8x6xf32>
    %83 = tpu.matmul %80, %81, %cst_35 {dimension_numbers = #tpu.dot_dimension_numbers<[1], [1], [0], [0], [0, 0, 1, 0], [], []>} : vector<8x8xf32>, vector<6x8xf32>, vector<8x6xf32> -> vector<8x6xf32>
    %cst_36 = arith.constant 0.353553385 : f32
    %84 = vector.broadcast %cst_36 : f32 to vector<8x6xf32>
    %85 = arith.mulf %83, %84 : vector<8x6xf32>
    %86 = vector.broadcast %22 : vector<1x6xf32> to vector<8x6xf32>
    %87 = arith.addf %85, %86 : vector<8x6xf32>
    %cst_37 = arith.constant dense<0xFF800000> : vector<8xf32>
    %88 = vector.multi_reduction <maximumf>, %87, %cst_37 [1] : vector<8x6xf32> to vector<8xf32>
    %89 = vector.shape_cast %88 : vector<8xf32> to vector<8x1xf32>
    %90 = vector.broadcast %89 : vector<8x1xf32> to vector<8x6xf32>
    %91 = arith.subf %87, %90 : vector<8x6xf32>
    %92 = math.exp %91 : vector<8x6xf32>
    %cst_38 = arith.constant dense<0.000000e+00> : vector<8xf32>
    %93 = vector.multi_reduction <add>, %92, %cst_38 [1] : vector<8x6xf32> to vector<8xf32>
    %94 = vector.shape_cast %93 : vector<8xf32> to vector<8x1xf32>
    %95 = tpu.reciprocal %94 : vector<8x1xf32> -> vector<8x1xf32>
    %96 = vector.broadcast %95 : vector<8x1xf32> to vector<8x6xf32>
    %97 = arith.mulf %92, %96 : vector<8x6xf32>
    %cst_39 = arith.constant dense<0.000000e+00> : vector<8x8xf32>
    %98 = tpu.matmul %97, %82, %cst_39 {dimension_numbers = #tpu.dot_dimension_numbers<[1], [0], [0], [1], [0, 0, 1, 1], [], []>} : vector<8x6xf32>, vector<6x8xf32>, vector<8x8xf32> -> vector<8x8xf32>
    %99 = tpu.concatenate %41, %60, %79, %98 in 1 : vector<8x8xf32>, vector<8x8xf32>, vector<8x8xf32>, vector<8x8xf32> -> vector<8x32xf32>
    %c0_40 = arith.constant 0 : index
    %c0_41 = arith.constant 0 : index
    %100 = vector.load %arg7[%c0_40, %c0_41] : memref<32x32xf32, #tpu.memory_space<vmem>>, vector<32x32xf32>
    %cst_42 = arith.constant dense<0.000000e+00> : vector<8x32xf32>
    %101 = tpu.matmul %99, %100, %cst_42 {dimension_numbers = #tpu.dot_dimension_numbers<[1], [0], [0], [1], [0, 0, 1, 1], [], []>} : vector<8x32xf32>, vector<32x32xf32>, vector<8x32xf32> -> vector<8x32xf32>
    %c0_43 = arith.constant 0 : index
    %c0_44 = arith.constant 0 : index
    %102 = vector.load %arg8[%c0_43, %c0_44] : memref<1x32xf32, #tpu.memory_space<vmem>>, vector<1x32xf32>
    %103 = vector.broadcast %102 : vector<1x32xf32> to vector<8x32xf32>
    %104 = arith.addf %101, %103 : vector<8x32xf32>
    %105 = arith.addf %104, %1 : vector<8x32xf32>
    %c0_45 = arith.constant 0 : index
    %c0_46 = arith.constant 0 : index
    %106 = vector.load %arg9[%c0_45, %c0_46] : memref<1x32xf32, #tpu.memory_space<vmem>>, vector<1x32xf32>
    %c0_47 = arith.constant 0 : index
    %c0_48 = arith.constant 0 : index
    %107 = vector.load %arg10[%c0_47, %c0_48] : memref<1x32xf32, #tpu.memory_space<vmem>>, vector<1x32xf32>
    %cst_49 = arith.constant dense<0.000000e+00> : vector<8xf32>
    %108 = vector.multi_reduction <add>, %105, %cst_49 [1] : vector<8x32xf32> to vector<8xf32>
    %109 = vector.shape_cast %108 : vector<8xf32> to vector<8x1xf32>
    %cst_50 = arith.constant 3.200000e+01 : f32
    %110 = vector.broadcast %cst_50 : f32 to vector<8x1xf32>
    %111 = arith.divf %109, %110 : vector<8x1xf32>
    %112 = vector.broadcast %111 : vector<8x1xf32> to vector<8x32xf32>
    %113 = arith.subf %105, %112 : vector<8x32xf32>
    %114 = arith.mulf %113, %113 : vector<8x32xf32>
    %cst_51 = arith.constant dense<0.000000e+00> : vector<8xf32>
    %115 = vector.multi_reduction <add>, %114, %cst_51 [1] : vector<8x32xf32> to vector<8xf32>
    %116 = vector.shape_cast %115 : vector<8xf32> to vector<8x1xf32>
    %cst_52 = arith.constant 3.200000e+01 : f32
    %117 = vector.broadcast %cst_52 : f32 to vector<8x1xf32>
    %118 = arith.divf %116, %117 : vector<8x1xf32>
    %119 = vector.broadcast %111 : vector<8x1xf32> to vector<8x32xf32>
    %120 = arith.subf %105, %119 : vector<8x32xf32>
    %cst_53 = arith.constant 9.99999974E-6 : f32
    %121 = vector.broadcast %cst_53 : f32 to vector<8x1xf32>
    %122 = arith.addf %118, %121 : vector<8x1xf32>
    %123 = math.rsqrt %122 : vector<8x1xf32>
    %124 = vector.broadcast %123 : vector<8x1xf32> to vector<8x32xf32>
    %125 = arith.mulf %120, %124 : vector<8x32xf32>
    %126 = vector.broadcast %106 : vector<1x32xf32> to vector<8x32xf32>
    %127 = arith.mulf %125, %126 : vector<8x32xf32>
    %128 = vector.broadcast %107 : vector<1x32xf32> to vector<8x32xf32>
    %129 = arith.addf %127, %128 : vector<8x32xf32>
    %c0_54 = arith.constant 0 : index
    %c0_55 = arith.constant 0 : index
    %c0_56 = arith.constant 0 : index
    %130 = vector.load %arg12[%c0_54, %c0_55, %c0_56] : memref<1x8x1xf32, #tpu.memory_space<vmem>>, vector<1x8x1xf32>
    %131 = vector.shape_cast %130 : vector<1x8x1xf32> to vector<8x1xf32>
    %132 = vector.broadcast %131 : vector<8x1xf32> to vector<8x32xf32>
    %133 = arith.mulf %129, %132 : vector<8x32xf32>
    %c0_57 = arith.constant 0 : index
    %c0_58 = arith.constant 0 : index
    %c0_59 = arith.constant 0 : index
    %134 = vector.load %arg13[%c0_57, %c0_58, %c0_59] : memref<1x8x32xf32, #tpu.memory_space<vmem>>, vector<1x8x32xf32>
    %135 = vector.shape_cast %134 : vector<1x8x32xf32> to vector<8x32xf32>
    %136 = vector.shape_cast %133 : vector<8x32xf32> to vector<1x8x32xf32>
    tpu.vector_store %arg13[%c0_57, %c0_58, %c0_59], %136 {strides = array<i32>} : memref<1x8x32xf32, #tpu.memory_space<vmem>>, vector<1x8x32xf32>,
    return
  }
  func.func @transform_0(%arg0: i32) -> (i32, i32, i32) {
    %c0_i32 = arith.constant 0 : i32
    %c0_i32_0 = arith.constant 0 : i32
    %c0_i32_1 = arith.constant 0 : i32
    return %arg0, %c0_i32, %c0_i32_0 : i32, i32, i32
  }
  func.func @transform_1(%arg0: i32) -> (i32, i32, i32) {
    %c0_i32 = arith.constant 0 : i32
    %c0_i32_0 = arith.constant 0 : i32
    %c0_i32_1 = arith.constant 0 : i32
    return %arg0, %c0_i32, %c0_i32_0 : i32, i32, i32
  }
  func.func @transform_2(%arg0: i32) -> (i32, i32) {
    %c0_i32 = arith.constant 0 : i32
    %c0_i32_0 = arith.constant 0 : i32
    %c0_i32_1 = arith.constant 0 : i32
    return %c0_i32, %c0_i32_0 : i32, i32
  }
  func.func @transform_3(%arg0: i32) -> (i32, i32) {
    %c0_i32 = arith.constant 0 : i32
    %c0_i32_0 = arith.constant 0 : i32
    %c0_i32_1 = arith.constant 0 : i32
    return %c0_i32, %c0_i32_0 : i32, i32
  }
  func.func @transform_4(%arg0: i32) -> (i32, i32) {
    %c0_i32 = arith.constant 0 : i32
    %c0_i32_0 = arith.constant 0 : i32
    %c0_i32_1 = arith.constant 0 : i32
    return %c0_i32, %c0_i32_0 : i32, i32
  }
  func.func @transform_5(%arg0: i32) -> (i32, i32) {
    %c0_i32 = arith.constant 0 : i32
    %c0_i32_0 = arith.constant 0 : i32
    %c0_i32_1 = arith.constant 0 : i32
    return %c0_i32, %c0_i32_0 : i32, i32
  }
  func.func @transform_6(%arg0: i32) -> (i32, i32) {
    %c0_i32 = arith.constant 0 : i32
    %c0_i32_0 = arith.constant 0 : i32
    %c0_i32_1 = arith.constant 0 : i32
    return %c0_i32, %c0_i32_0 : i32, i32
  }
  func.func @transform_7(%arg0: i32) -> (i32, i32) {
    %c0_i32 = arith.constant 0 : i32
    %c0_i32_0 = arith.constant 0 : i32
    %c0_i32_1 = arith.constant 0 : i32
    return %c0_i32, %c0_i32_0 : i32, i32
  }
  func.func @transform_8(%arg0: i32) -> (i32, i32) {
    %c0_i32 = arith.constant 0 : i32
    %c0_i32_0 = arith.constant 0 : i32
    %c0_i32_1 = arith.constant 0 : i32
    return %c0_i32, %c0_i32_0 : i32, i32
  }
  func.func @transform_9(%arg0: i32) -> (i32, i32) {
    %c0_i32 = arith.constant 0 : i32
    %c0_i32_0 = arith.constant 0 : i32
    %c0_i32_1 = arith.constant 0 : i32
    return %c0_i32, %c0_i32_0 : i32, i32
  }
  func.func @transform_10(%arg0: i32) -> (i32, i32, i32) {
    %c0_i32 = arith.constant 0 : i32
    %c0_i32_0 = arith.constant 0 : i32
    %c0_i32_1 = arith.constant 0 : i32
    return %arg0, %c0_i32, %c0_i32_0 : i32, i32, i32
  }
  func.func @transform_11(%arg0: i32) -> (i32, i32, i32) {
    %c0_i32 = arith.constant 0 : i32
    %c0_i32_0 = arith.constant 0 : i32
    %c0_i32_1 = arith.constant 0 : i32
    return %arg0, %c0_i32, %c0_i32_0 : i32, i32, i32
  }
  func.func @transform_12(%arg0: i32) -> (i32, i32, i32) {
    %c0_i32 = arith.constant 0 : i32
    %c0_i32_0 = arith.constant 0 : i32
    %c0_i32_1 = arith.constant 0 : i32
    return %arg0, %c0_i32, %c0_i32_0 : i32, i32, i32
  }
}

</mosaic_0001>

<llo_original>
// kernel: decoder_forward.8
$region0: #{decoder_forward.8}
  #allocation0 [shape = 'u32[]', space=smem, size = 0x4, offset = 0x4, fixed_abs, tag = 'smem constant byte address 0x4 - core index']
  #allocation1 [shape = 'u32[144,128]{1,0:T(1,128)}', space=vmem, size = 0x12000, scoped, tag = 'internal scratch']
  %s0 = inlined_call_operand.vmem [shape: f32[2,8,32], index: 0, kind: input, shape index: {}]
  %s1 = inlined_call_operand.vmem [shape: f32[32,64], index: 1, kind: input, shape index: {}]
  %s2 = inlined_call_operand.vmem [shape: f32[1,64], index: 2, kind: input, shape index: {}]
  %s3 = inlined_call_operand.vmem [shape: f32[64,32], index: 3, kind: input, shape index: {}]
  %s4 = inlined_call_operand.vmem [shape: f32[1,32], index: 4, kind: input, shape index: {}]
  %s5 = inlined_call_operand.vmem [shape: f32[1,32], index: 5, kind: input, shape index: {}]
  %s6 = inlined_call_operand.vmem [shape: f32[1,32], index: 6, kind: input, shape index: {}]
  %s7 = inlined_call_operand.vmem [shape: f32[2,8,1], index: 7, kind: input, shape index: {}]
  %s8 = inlined_call_operand.vmem [shape: f32[2,8,32], index: 8, kind: output, shape index: {}]
  %s9 = sld [smem:[#allocation0]]
  $region65: #{decoder_forward.8} parent=0
    _
  %s11 = ssub.s32 1, %s9
  %s12 = scalar_select 0, %s11, %s9
  loop: start=0, step=1, limit=4
  $region2: #{decoder_forward.8} parent=0 // loop_pre_header
    _
  $region3: #{decoder_forward.8} parent=0 // loop_header
    %s14 = sphi 0, %s18
    %p15 = scmp.ge.s32.totalorder %s14, 4
    %s21 = sphi 0, %s33
    %s22 = sphi 0, %s29
    %s23 = sphi 0, %s21
    %s24 = sphi 0, %s22
    %s25 = sphi 0, %s23
    %s26 = sphi 0, %s24
    %s38 = sphi 0, %s40
    %s41 = sphi 0, %s38
    %s42 = sphi 0, %s41
    %s58 = sphi 0, %s42
    %s62 = sphi 0, %s62
    %s64 = sphi 0, %s62
    %s65 = sphi 0, %s64
    %s79 = sphi 0, %s65
    %s83 = sphi 0, %s83
    %s85 = sphi 0, %s83
    %s86 = sphi 0, %s85
    %s100 = sphi 0, %s86
    %s104 = sphi 0, %s104
    %s106 = sphi 0, %s104
    %s107 = sphi 0, %s106
    %s121 = sphi 0, %s107
    %s125 = sphi 0, %s125
    %s127 = sphi 0, %s125
    %s128 = sphi 0, %s127
    %s142 = sphi 0, %s128
    %s146 = sphi 0, %s146
    %s148 = sphi 0, %s146
    %s149 = sphi 0, %s148
    %s163 = sphi 0, %s149
    %s167 = sphi 0, %s167
    %s169 = sphi 0, %s167
    %s170 = sphi 0, %s169
    %s184 = sphi 0, %s170
    %s192 = sphi 0, %s194
    %s195 = sphi 0, %s192
    %s196 = sphi 0, %s195
    %s212 = sphi 0, %s196
    %s220 = sphi 0, %s222
    %s223 = sphi 0, %s220
    %s224 = sphi 0, %s223
    %s240 = sphi 0, %s224
  $region4: #{decoder_forward.8} parent=0 // loop_header_branch
    %17 = sbr.rel (%p15) target = $region8
  $region5: #{decoder_forward.8} parent=0 // loop_body
    %s19 = ssub.s32 %s14, 1
    %s20 = ssub.s32 %s14, 2
    %s27 = sadd.s32 1, %s22
    %p28 = scmp.ge.s32.totalorder %s27, 1
    %s29 = scalar_select %p28, 0, %s27
    %s30 = sadd.s32 1, %s21
    %s31 = scalar_select %p28, %s30, %s21
    %p32 = scmp.ge.s32.totalorder %s31, 2
    %s33 = scalar_select %p32, 0, %s31
    %s34 = ssub.s32 %s21, %s33
    %s35 = ssub.s32 %s22, %s29
    %s36 = sor.u32 %s34, %s35
    %p37 = scmp.eq.s32.totalorder %s36, 0
    %s39 = sadd.s32 %s38, 1
    %s40 = scalar_select %p37, %s38, %s39
    %p43 = pneg %p37
    %p44 = scmp.eq.s32.totalorder %s14, 1
    %p45 = por %p43, %p44
    %p46 = scmp.ne.s32.totalorder %s38, %s41
    %p47 = scmp.eq.s32.totalorder %s14, 0
    %p48 = por %p46, %p47
    %p49 = scmp.ne.s32.totalorder %s38, %s41
    %p50 = scmp.eq.s32.totalorder %s19, 1
    %p51 = por %p49, %p50
    %p52 = scmp.ne.s32.totalorder %s41, %s42
    %p53 = scmp.eq.s32.totalorder %s19, 0
    %p54 = por %p52, %p53
    %p55 = scmp.ne.s32.totalorder %s41, %s42
    %p56 = scmp.eq.s32.totalorder %s20, 1
    %p57 = por %p55, %p56
    %p59 = scmp.ne.s32.totalorder %s42, %s58
    %p60 = scmp.eq.s32.totalorder %s20, 0
    %p61 = por %p59, %p60
    %s63 = sadd.s32 %s62, 1
    %p66 = scmp.eq.s32.totalorder %s14, 1
    %p67 = scmp.ne.s32.totalorder %s62, %s64
    %p68 = scmp.eq.s32.totalorder %s14, 0
    %p69 = por %p67, %p68
    %p70 = scmp.ne.s32.totalorder %s62, %s64
    %p71 = scmp.eq.s32.totalorder %s19, 1
    %p72 = por %p70, %p71
    %p73 = scmp.ne.s32.totalorder %s64, %s65
    %p74 = scmp.eq.s32.totalorder %s19, 0
    %p75 = por %p73, %p74
    %p76 = scmp.ne.s32.totalorder %s64, %s65
    %p77 = scmp.eq.s32.totalorder %s20, 1
    %p78 = por %p76, %p77
    %p80 = scmp.ne.s32.totalorder %s65, %s79
    %p81 = scmp.eq.s32.totalorder %s20, 0
    %p82 = por %p80, %p81
    %s84 = sadd.s32 %s83, 1
    %p87 = scmp.eq.s32.totalorder %s14, 1
    %p88 = scmp.ne.s32.totalorder %s83, %s85
    %p89 = scmp.eq.s32.totalorder %s14, 0
    %p90 = por %p88, %p89
    %p91 = scmp.ne.s32.totalorder %s83, %s85
    %p92 = scmp.eq.s32.totalorder %s19, 1
    %p93 = por %p91, %p92
    %p94 = scmp.ne.s32.totalorder %s85, %s86
    %p95 = scmp.eq.s32.totalorder %s19, 0
    %p96 = por %p94, %p95
    %p97 = scmp.ne.s32.totalorder %s85, %s86
    %p98 = scmp.eq.s32.totalorder %s20, 1
    %p99 = por %p97, %p98
    %p101 = scmp.ne.s32.totalorder %s86, %s100
    %p102 = scmp.eq.s32.totalorder %s20, 0
    %p103 = por %p101, %p102
    %s105 = sadd.s32 %s104, 1
    %p108 = scmp.eq.s32.totalorder %s14, 1
    %p109 = scmp.ne.s32.totalorder %s104, %s106
    %p110 = scmp.eq.s32.totalorder %s14, 0
    %p111 = por %p109, %p110
    %p112 = scmp.ne.s32.totalorder %s104, %s106
    %p113 = scmp.eq.s32.totalorder %s19, 1
    %p114 = por %p112, %p113
    %p115 = scmp.ne.s32.totalorder %s106, %s107
    %p116 = scmp.eq.s32.totalorder %s19, 0
    %p117 = por %p115, %p116
    %p118 = scmp.ne.s32.totalorder %s106, %s107
    %p119 = scmp.eq.s32.totalorder %s20, 1
    %p120 = por %p118, %p119
    %p122 = scmp.ne.s32.totalorder %s107, %s121
    %p123 = scmp.eq.s32.totalorder %s20, 0
    %p124 = por %p122, %p123
    %s126 = sadd.s32 %s125, 1
    %p129 = scmp.eq.s32.totalorder %s14, 1
    %p130 = scmp.ne.s32.totalorder %s125, %s127
    %p131 = scmp.eq.s32.totalorder %s14, 0
    %p132 = por %p130, %p131
    %p133 = scmp.ne.s32.totalorder %s125, %s127
    %p134 = scmp.eq.s32.totalorder %s19, 1
    %p135 = por %p133, %p134
    %p136 = scmp.ne.s32.totalorder %s127, %s128
    %p137 = scmp.eq.s32.totalorder %s19, 0
    %p138 = por %p136, %p137
    %p139 = scmp.ne.s32.totalorder %s127, %s128
    %p140 = scmp.eq.s32.totalorder %s20, 1
    %p141 = por %p139, %p140
    %p143 = scmp.ne.s32.totalorder %s128, %s142
    %p144 = scmp.eq.s32.totalorder %s20, 0
    %p145 = por %p143, %p144
    %s147 = sadd.s32 %s146, 1
    %p150 = scmp.eq.s32.totalorder %s14, 1
    %p151 = scmp.ne.s32.totalorder %s146, %s148
    %p152 = scmp.eq.s32.totalorder %s14, 0
    %p153 = por %p151, %p152
    %p154 = scmp.ne.s32.totalorder %s146, %s148
    %p155 = scmp.eq.s32.totalorder %s19, 1
    %p156 = por %p154, %p155
    %p157 = scmp.ne.s32.totalorder %s148, %s149
    %p158 = scmp.eq.s32.totalorder %s19, 0
    %p159 = por %p157, %p158
    %p160 = scmp.ne.s32.totalorder %s148, %s149
    %p161 = scmp.eq.s32.totalorder %s20, 1
    %p162 = por %p160, %p161
    %p164 = scmp.ne.s32.totalorder %s149, %s163
    %p165 = scmp.eq.s32.totalorder %s20, 0
    %p166 = por %p164, %p165
    %s168 = sadd.s32 %s167, 1
    %p171 = scmp.eq.s32.totalorder %s14, 1
    %p172 = scmp.ne.s32.totalorder %s167, %s169
    %p173 = scmp.eq.s32.totalorder %s14, 0
    %p174 = por %p172, %p173
    %p175 = scmp.ne.s32.totalorder %s167, %s169
    %p176 = scmp.eq.s32.totalorder %s19, 1
    %p177 = por %p175, %p176
    %p178 = scmp.ne.s32.totalorder %s169, %s170
    %p179 = scmp.eq.s32.totalorder %s19, 0
    %p180 = por %p178, %p179
    %p181 = scmp.ne.s32.totalorder %s169, %s170
    %p182 = scmp.eq.s32.totalorder %s20, 1
    %p183 = por %p181, %p182
    %p185 = scmp.ne.s32.totalorder %s170, %s184
    %p186 = scmp.eq.s32.totalorder %s20, 0
    %p187 = por %p185, %p186
    %s188 = ssub.s32 %s21, %s33
    %s189 = ssub.s32 %s22, %s29
    %s190 = sor.u32 %s188, %s189
    %p191 = scmp.eq.s32.totalorder %s190, 0
    %s193 = sadd.s32 %s192, 1
    %s194 = scalar_select %p191, %s192, %s193
    %p197 = pneg %p191
    %p198 = scmp.eq.s32.totalorder %s14, 1
    %p199 = por %p197, %p198
    %p200 = scmp.ne.s32.totalorder %s192, %s195
    %p201 = scmp.eq.s32.totalorder %s14, 0
    %p202 = por %p200, %p201
    %p203 = scmp.ne.s32.totalorder %s192, %s195
    %p204 = scmp.eq.s32.totalorder %s19, 1
    %p205 = por %p203, %p204
    %p206 = scmp.ne.s32.totalorder %s195, %s196
    %p207 = scmp.eq.s32.totalorder %s19, 0
    %p208 = por %p206, %p207
    %p209 = scmp.ne.s32.totalorder %s195, %s196
    %p210 = scmp.eq.s32.totalorder %s20, 1
    %p211 = por %p209, %p210
    %p213 = scmp.ne.s32.totalorder %s196, %s212
    %p214 = scmp.eq.s32.totalorder %s20, 0
    %p215 = por %p213, %p214
    %s216 = ssub.s32 %s21, %s33
    %s217 = ssub.s32 %s22, %s29
    %s218 = sor.u32 %s216, %s217
    %p219 = scmp.eq.s32.totalorder %s218, 0
    %s221 = sadd.s32 %s220, 1
    %s222 = scalar_select %p219, %s220, %s221
    %p225 = pneg %p219
    %p226 = scmp.eq.s32.totalorder %s14, 1
    %p227 = por %p225, %p226
    %p228 = scmp.ne.s32.totalorder %s220, %s223
    %p229 = scmp.eq.s32.totalorder %s14, 0
    %p230 = por %p228, %p229
    %p231 = scmp.ne.s32.totalorder %s220, %s223
    %p232 = scmp.eq.s32.totalorder %s19, 1
    %p233 = por %p231, %p232
    %p234 = scmp.ne.s32.totalorder %s223, %s224
    %p235 = scmp.eq.s32.totalorder %s19, 0
    %p236 = por %p234, %p235
    %p237 = scmp.ne.s32.totalorder %s223, %s224
    %p238 = scmp.eq.s32.totalorder %s20, 1
    %p239 = por %p237, %p238
    %p241 = scmp.ne.s32.totalorder %s224, %s240
    %p242 = scmp.eq.s32.totalorder %s20, 0
    %p243 = por %p241, %p242
    %p244 = scmp.le.s32.totalorder 1, %s14
    %p245 = scmp.lt.s32.totalorder %s14, 3
    %p246 = pnand %p244, %p245
    %p247 = pneg %p246
    // Predicated region
    $region9: #{decoder_forward.8} parent=5 // pred_check
      _
    $region10: #{decoder_forward.8} parent=5 // pred_check_branch
      %249 = sbr.rel (%p246) target = $region12
    $region11: #{decoder_forward.8} parent=5 // pred_region
      %s250 = ssub.s32 %s14, 1
      // Predicated region
      $region13: #{decoder_forward.8} parent=11 // pred_check
        %p251 = pneg %p75
      $region14: #{decoder_forward.8} parent=11 // pred_check_branch
        %253 = sbr.rel (%p251) target = $region16
      $region15: #{decoder_forward.8} parent=11 // pred_region
        _
      $region16: #{decoder_forward.8} parent=11 // pred_fallthru
        _
      // Predicated region
      $region17: #{decoder_forward.8} parent=11 // pred_check
        %p254 = pneg %p96
      $region18: #{decoder_forward.8} parent=11 // pred_check_branch
        %256 = sbr.rel (%p254) target = $region20
      $region19: #{decoder_forward.8} parent=11 // pred_region
        _
      $region20: #{decoder_forward.8} parent=11 // pred_fallthru
        _
      // Predicated region
      $region21: #{decoder_forward.8} parent=11 // pred_check
        %p257 = pneg %p117
      $region22: #{decoder_forward.8} parent=11 // pred_check_branch
        %259 = sbr.rel (%p257) target = $region24
      $region23: #{decoder_forward.8} parent=11 // pred_region
        _
      $region24: #{decoder_forward.8} parent=11 // pred_fallthru
        _
      // Predicated region
      $region25: #{decoder_forward.8} parent=11 // pred_check
        %p260 = pneg %p138
      $region26: #{decoder_forward.8} parent=11 // pred_check_branch
        %262 = sbr.rel (%p260) target = $region28
      $region27: #{decoder_forward.8} parent=11 // pred_region
        _
      $region28: #{decoder_forward.8} parent=11 // pred_fallthru
        _
      // Predicated region
      $region29: #{decoder_forward.8} parent=11 // pred_check
        %p263 = pneg %p159
      $region30: #{decoder_forward.8} parent=11 // pred_check_branch
        %265 = sbr.rel (%p263) target = $region32
      $region31: #{decoder_forward.8} parent=11 // pred_region
        _
      $region32: #{decoder_forward.8} parent=11 // pred_fallthru
        _
      // Predicated region
      $region33: #{decoder_forward.8} parent=11 // pred_check
        %p266 = pneg %p180
      $region34: #{decoder_forward.8} parent=11 // pred_check_branch
        %268 = sbr.rel (%p266) target = $region36
      $region35: #{decoder_forward.8} parent=11 // pred_region
        _
      $region36: #{decoder_forward.8} parent=11 // pred_fallthru
        _
    $region12: #{decoder_forward.8} parent=5 // pred_fallthru
      _
    %p269 = scmp.lt.s32.totalorder %s14, 2
    // Predicated region
    $region37: #{decoder_forward.8} parent=5 // pred_check
      %p270 = pneg %p269
    $region38: #{decoder_forward.8} parent=5 // pred_check_branch
      %272 = sbr.rel (%p270) target = $region40
    $region39: #{decoder_forward.8} parent=5 // pred_region
      // Predicated region
      $region41: #{decoder_forward.8} parent=39 // pred_check
        %p273 = pneg %p48
      $region42: #{decoder_forward.8} parent=39 // pred_check_branch
        %275 = sbr.rel (%p273) target = $region44
      $region43: #{decoder_forward.8} parent=39 // pred_region
        %p276 = scmp.lt.s32.totalorder %s21, 1
        %s277 = scalar_select %p276, %s21, 1
        %p278 = scmp.lt.s32.totalorder %s22, 0
        %s279 = scalar_select %p278, %s22, 0
        %s280 = sadd.s32 %s279, %s277
        %s281 = smul.addr %s280, 8
        %s282 = scalar_lea.vmem %s0, %s281
      $region44: #{decoder_forward.8} parent=39 // pred_fallthru
        _
      // Predicated region
      $region45: #{decoder_forward.8} parent=39 // pred_check
        %p283 = pneg %p202
      $region46: #{decoder_forward.8} parent=39 // pred_check_branch
        %285 = sbr.rel (%p283) target = $region48
      $region47: #{decoder_forward.8} parent=39 // pred_region
        %p286 = scmp.lt.s32.totalorder %s21, 1
        %s287 = scalar_select %p286, %s21, 1
        %p288 = scmp.lt.s32.totalorder %s22, 0
        %s289 = scalar_select %p288, %s22, 0
        %s290 = sadd.s32 %s289, %s287
        %s291 = smul.addr %s290, 8
        %s292 = scalar_lea.vmem %s7, %s291
      $region48: #{decoder_forward.8} parent=39 // pred_fallthru
        _
    $region40: #{decoder_forward.8} parent=5 // pred_fallthru
      _
    %p293 = scmp.le.s32.totalorder 1, %s14
    %p294 = scmp.lt.s32.totalorder %s14, 3
    %p295 = pnand %p293, %p294
    %p296 = pneg %p295
    // Predicated region
    $region49: #{decoder_forward.8} parent=5 // pred_check
      _
    $region50: #{decoder_forward.8} parent=5 // pred_check_branch
      %298 = sbr.rel (%p295) target = $region52
    $region51: #{decoder_forward.8} parent=5 // pred_region
      %s299 = ssub.s32 %s14, 1
      %p300 = scmp.lt.s32.totalorder %s23, 1
      %s301 = scalar_select %p300, %s23, 1
      %p302 = scmp.lt.s32.totalorder %s24, 0
      %s303 = scalar_select %p302, %s24, 0
      %s304 = sadd.s32 %s303, %s301
      %s305 = smul.addr %s304, 8
      %s306 = scalar_lea.vmem %s0, %s305
      %p307 = pneg %p54
      %p308 = pneg %p51
      %p309 = pneg %p75
      %p310 = pneg %p72
      %p311 = pneg %p96
      %p312 = pneg %p93
      %p313 = pneg %p117
      %p314 = pneg %p114
      %p315 = pneg %p138
      %p316 = pneg %p135
      %p317 = pneg %p159
      %p318 = pneg %p156
      %p319 = pneg %p180
      %p320 = pneg %p177
      %p321 = scmp.lt.s32.totalorder %s23, 1
      %s322 = scalar_select %p321, %s23, 1
      %p323 = scmp.lt.s32.totalorder %s24, 0
      %s324 = scalar_select %p323, %s24, 0
      %s325 = sadd.s32 %s324, %s322
      %s326 = smul.addr %s325, 8
      %s327 = scalar_lea.vmem %s7, %s326
      %p328 = pneg %p208
      %p329 = pneg %p205
      %p330 = pneg %p236
      %p331 = pneg %p233
      %p332 = scmp.lt.s32.totalorder %s23, 1
      %s333 = scalar_select %p332, %s23, 1
      %p334 = scmp.lt.s32.totalorder %s24, 0
      %s335 = scalar_select %p334, %s24, 0
      %s336 = sadd.s32 %s335, %s333
      %s337 = smul.addr %s336, 8
      %s338 = scalar_lea.vmem %s8, %s337
      %p339 = scmp.lt.s32.totalorder %s23, 1
      %s340 = scalar_select %p339, %s23, 1
      %p341 = scmp.lt.s32.totalorder %s24, 0
      %s342 = scalar_select %p341, %s24, 0
      %s343 = sadd.s32 %s342, %s340
      %s344 = smul.addr %s343, 8
      %s345 = scalar_lea.vmem %s0, %s344
      %p346 = scmp.lt.s32.totalorder %s23, 1
      %s347 = scalar_select %p346, %s23, 1
      %p348 = scmp.lt.s32.totalorder %s24, 0
      %s349 = scalar_select %p348, %s24, 0
      %s350 = sadd.s32 %s349, %s347
      %s351 = smul.addr %s350, 8
      %s352 = scalar_lea.vmem %s7, %s351
      %p353 = scmp.lt.s32.totalorder %s23, 1
      %s354 = scalar_select %p353, %s23, 1
      %p355 = scmp.lt.s32.totalorder %s24, 0
      %s356 = scalar_select %p355, %s24, 0
      %s357 = sadd.s32 %s356, %s354
      %s358 = smul.addr %s357, 8
      %s359 = scalar_lea.vmem %s8, %s358
      %v360 = vld [vmem:[%s345] sm:$0xff]
      %v361 = vld [vmem:[%s1] sm:$0xff]
      %v362 = vld [vmem:[%s1 + $0x8] sm:$0xff]
      %v363 = vld [vmem:[%s1 + $0x10] sm:$0xff]
      %v364 = vld [vmem:[%s1 + $0x18] sm:$0xff]
      %v365 = vld [vmem:[%s2] sm:$0x1]
      %v367 = vlaneseq
      %v368 = vshrl.u32 %v367, 7
      %v369 = vsub.s32 0, %v368
      %v370 = vrot.slane %v365, %v369
      %vm372 = vcmask 261120
      %v374 = vsel %vm372, %v360, 0
      %376 = vmatprep.subr.mxu0 0.0
      %377 = vmatpush1.msra.mxu0 0.0
      %378 = vmatprep.subr.mxu0 0.0
      %379 = vmatpush1.msra.mxu0 0.0
      %380 = vmatprep.subr.mxu0 0.0
      %381 = vmatpush1.msra.mxu0 0.0
      %382 = vmatprep.subr.mxu0 0.0
      %383 = vmatpush1.msra.mxu0 0.0
      %384 = vmatprep.subr.mxu0 0.0
      %385 = vmatpush1.msra.mxu0 0.0
      %386 = vmatprep.subr.mxu0 0.0
      %387 = vmatpush1.msra.mxu0 0.0
      %388 = vmatprep.subr.mxu0 0.0
      %389 = vmatpush1.msra.mxu0 0.0
      %390 = vmatprep.subr.mxu0 0.0
      %391 = vmatpush1.msra.mxu0 0.0
      %392 = vmatprep.subr.mxu0 0.0
      %393 = vmatpush1.msra.mxu0 0.0
      %394 = vmatprep.subr.mxu0 0.0
      %395 = vmatpush1.msra.mxu0 0.0
      %396 = vmatprep.subr.mxu0 0.0
      %397 = vmatpush1.msra.mxu0 0.0
      %398 = vmatprep.subr.mxu0 0.0
      %399 = vmatpush1.msra.mxu0 0.0
      %400 = vmatprep.subr.mxu0 0.0
      %401 = vmatpush1.msra.mxu0 %v364
      %402 = vmatprep.subr.mxu0 0.0
      %403 = vmatpush1.msra.mxu0 %v363
      %404 = vmatprep.subr.mxu0 0.0
      %405 = vmatpush1.msra.mxu0 %v362
      %406 = vmatprep.subr.mxu0 0.0
      %407 = vmatpush1.msra.mxu0 %v361
      %408 = vmatprep.subr.mxu0 0.0
      %409 = vmatpush2.msra.mxu0 0.0
      %410 = vmatprep.subr.mxu0 0.0
      %411 = vmatpush2.msra.mxu0 0.0
      %412 = vmatprep.subr.mxu0 0.0
      %413 = vmatpush2.msra.mxu0 0.0
      %414 = vmatprep.subr.mxu0 0.0
      %415 = vmatpush2.msra.mxu0 0.0
      %416 = vmatprep.subr.mxu0 0.0
      %417 = vmatpush2.msra.mxu0 0.0
      %418 = vmatprep.subr.mxu0 0.0
      %419 = vmatpush2.msra.mxu0 0.0
      %420 = vmatprep.subr.mxu0 0.0
      %421 = vmatpush2.msra.mxu0 0.0
      %422 = vmatprep.subr.mxu0 0.0
      %423 = vmatpush2.msra.mxu0 0.0
      %424 = vmatprep.subr.mxu0 0.0
      %425 = vmatpush2.msra.mxu0 0.0
      %426 = vmatprep.subr.mxu0 0.0
      %427 = vmatpush2.msra.mxu0 0.0
      %428 = vmatprep.subr.mxu0 0.0
      %429 = vmatpush2.msra.mxu0 0.0
      %430 = vmatprep.subr.mxu0 0.0
      %431 = vmatpush2.msra.mxu0 0.0
      %432 = vmatprep.subr.mxu0 0.0
      %433 = vmatpush2.msra.mxu0 0.0
      %434 = vmatprep.subr.mxu0 0.0
      %435 = vmatpush2.msra.mxu0 0.0
      %436 = vmatprep.subr.mxu0 0.0
      %437 = vmatpush2.msra.mxu0 0.0
      %438 = vmatprep.subr.mxu0 0.0
      %439 = vmatpush2.msra.mxu0 0.0
      %440 = vmatprep.mubr.f32.mxu0 0.0
      %441 = vmatmul.mubr.f32.gmra.mxu0 %v374
      %v442 = vpop.f32.mrf.mxu0
      %v443 = vadd.f32 %v370, %v442
      %v444 = vpop.f32.mrf.mxu0
      %445 = vdwg.mxu0
      %v446 = vmax.f32 %v443, 0.0
      %v447 = vld [vmem:[%s3] sm:$0xff]
      %v448 = vld [vmem:[%s3 + $0x8] sm:$0xff]
      %v449 = vld [vmem:[%s3 + $0x10] sm:$0xff]
      %v450 = vld [vmem:[%s3 + $0x18] sm:$0xff]
      %v451 = vld [vmem:[%s3 + $0x20] sm:$0xff]
      %v452 = vld [vmem:[%s3 + $0x28] sm:$0xff]
      %v453 = vld [vmem:[%s3 + $0x30] sm:$0xff]
      %v454 = vld [vmem:[%s3 + $0x38] sm:$0xff]
      %v455 = vld [vmem:[%s4] sm:$0x1]
      %v457 = vlaneseq
      %v458 = vshrl.u32 %v457, 7
      %v459 = vsub.s32 0, %v458
      %v460 = vrot.slane %v455, %v459
      %vm462 = vcmask 523264
      %v464 = vsel %vm462, %v446, 0
      %466 = vmatprep.subr.mxu0 0.0
      %467 = vmatpush1.msra.mxu0 0.0
      %468 = vmatprep.subr.mxu0 0.0
      %469 = vmatpush1.msra.mxu0 0.0
      %470 = vmatprep.subr.mxu0 0.0
      %471 = vmatpush1.msra.mxu0 0.0
      %472 = vmatprep.subr.mxu0 0.0
      %473 = vmatpush1.msra.mxu0 0.0
      %474 = vmatprep.subr.mxu0 0.0
      %475 = vmatpush1.msra.mxu0 0.0
      %476 = vmatprep.subr.mxu0 0.0
      %477 = vmatpush1.msra.mxu0 0.0
      %478 = vmatprep.subr.mxu0 0.0
      %479 = vmatpush1.msra.mxu0 0.0
      %480 = vmatprep.subr.mxu0 0.0
      %481 = vmatpush1.msra.mxu0 0.0
      %482 = vmatprep.subr.mxu0 0.0
      %483 = vmatpush1.msra.mxu0 %v454
      %484 = vmatprep.subr.mxu0 0.0
      %485 = vmatpush1.msra.mxu0 %v453
      %486 = vmatprep.subr.mxu0 0.0
      %487 = vmatpush1.msra.mxu0 %v452
      %488 = vmatprep.subr.mxu0 0.0
      %489 = vmatpush1.msra.mxu0 %v451
      %490 = vmatprep.subr.mxu0 0.0
      %491 = vmatpush1.msra.mxu0 %v450
      %492 = vmatprep.subr.mxu0 0.0
      %493 = vmatpush1.msra.mxu0 %v449
      %494 = vmatprep.subr.mxu0 0.0
      %495 = vmatpush1.msra.mxu0 %v448
      %496 = vmatprep.subr.mxu0 0.0
      %497 = vmatpush1.msra.mxu0 %v447
      %498 = vmatprep.subr.mxu0 0.0
      %499 = vmatpush2.msra.mxu0 0.0
      %500 = vmatprep.subr.mxu0 0.0
      %501 = vmatpush2.msra.mxu0 0.0
      %502 = vmatprep.subr.mxu0 0.0
      %503 = vmatpush2.msra.mxu0 0.0
      %504 = vmatprep.subr.mxu0 0.0
      %505 = vmatpush2.msra.mxu0 0.0
      %506 = vmatprep.subr.mxu0 0.0
      %507 = vmatpush2.msra.mxu0 0.0
      %508 = vmatprep.subr.mxu0 0.0
      %509 = vmatpush2.msra.mxu0 0.0
      %510 = vmatprep.subr.mxu0 0.0
      %511 = vmatpush2.msra.mxu0 0.0
      %512 = vmatprep.subr.mxu0 0.0
      %513 = vmatpush2.msra.mxu0 0.0
      %514 = vmatprep.subr.mxu0 0.0
      %515 = vmatpush2.msra.mxu0 0.0
      %516 = vmatprep.subr.mxu0 0.0
      %517 = vmatpush2.msra.mxu0 0.0
      %518 = vmatprep.subr.mxu0 0.0
      %519 = vmatpush2.msra.mxu0 0.0
      %520 = vmatprep.subr.mxu0 0.0
      %521 = vmatpush2.msra.mxu0 0.0
      %522 = vmatprep.subr.mxu0 0.0
      %523 = vmatpush2.msra.mxu0 0.0
      %524 = vmatprep.subr.mxu0 0.0
      %525 = vmatpush2.msra.mxu0 0.0
      %526 = vmatprep.subr.mxu0 0.0
      %527 = vmatpush2.msra.mxu0 0.0
      %528 = vmatprep.subr.mxu0 0.0
      %529 = vmatpush2.msra.mxu0 0.0
      %530 = vmatprep.mubr.f32.mxu0 0.0
      %531 = vmatmul.mubr.f32.gmra.mxu0 %v464
      %v532 = vpop.f32.mrf.mxu0
      %v533 = vadd.f32 %v460, %v532
      %v534 = vpop.f32.mrf.mxu0
      %535 = vdwg.mxu0
      %v536 = vadd.f32 %v533, %v360
      %v537 = vld [vmem:[%s5] sm:$0x1]
      %v538 = vld [vmem:[%s6] sm:$0x1]
      %v539 = vsel %vm372, %v536, 0.0
      %540 = vadd.xlane.f32.xlu0 %v539
      %v541 = vpop.xlane.xlu0 %540
      %v542 = vrcp.pop 32.0
      %v543 = vmul.f32 %v541, %v542
      %v544 = vsub.f32 %v536, %v543
      %v545 = vmul.f32 %v544, %v544
      %v546 = vsel %vm372, %v545, 0.0
      %547 = vadd.xlane.f32.xlu0 %v546
      %v548 = vpop.xlane.xlu0 %547
      %v549 = vmul.f32 %v548, %v542
      %v550 = vadd.f32 %v549, 1e-05
      %v551 = vrsqrt.pop %v550
      %v552 = vmul.f32 %v544, %v551
      %v554 = vlaneseq
      %v555 = vshrl.u32 %v554, 7
      %v556 = vsub.s32 0, %v555
      %v557 = vrot.slane %v537, %v556
      %v559 = vmul.f32 %v552, %v557
      %v561 = vlaneseq
      %v562 = vshrl.u32 %v561, 7
      %v563 = vsub.s32 0, %v562
      %v564 = vrot.slane %v538, %v563
      %v566 = vadd.f32 %v559, %v564
      %v567 = vld [vmem:[%s352] sm:$0xff]
      %569 = vset.pattern.permute.xlu0 0
      %570 = vperm.xlu0 %569, %v567
      %v571 = vpop.permute.xlu0 %570
      %v573 = vmul.f32 %v566, %v571
      %574 = vst.msk [vmem:[%s359] sm:$0xff] %vm372, %v573
      %p575 = scmp.lt.s32.totalorder %s23, 1
      %s576 = scalar_select %p575, %s23, 1
      %p577 = scmp.lt.s32.totalorder %s24, 0
      %s578 = scalar_select %p577, %s24, 0
      %s579 = sadd.s32 %s578, %s576
      %s580 = smul.addr %s579, 8
      %s581 = scalar_lea.vmem %s8, %s580
      // Predicated region
      $region53: #{decoder_forward.8} parent=51 // pred_check
        %p582 = pneg %p233
      $region54: #{decoder_forward.8} parent=51 // pred_check_branch
        %584 = sbr.rel (%p582) target = $region56
      $region55: #{decoder_forward.8} parent=51 // pred_region
        _
      $region56: #{decoder_forward.8} parent=51 // pred_fallthru
        _
    $region52: #{decoder_forward.8} parent=5 // pred_fallthru
      _
    %p585 = scmp.le.s32.totalorder 2, %s14
    // Predicated region
    $region57: #{decoder_forward.8} parent=5 // pred_check
      %p586 = pneg %p585
    $region58: #{decoder_forward.8} parent=5 // pred_check_branch
      %588 = sbr.rel (%p586) target = $region60
    $region59: #{decoder_forward.8} parent=5 // pred_region
      %s589 = ssub.s32 %s14, 2
      // Predicated region
      $region61: #{decoder_forward.8} parent=59 // pred_check
        %p590 = pneg %p239
      $region62: #{decoder_forward.8} parent=59 // pred_check_branch
        %592 = sbr.rel (%p590) target = $region64
      $region63: #{decoder_forward.8} parent=59 // pred_region
        %p593 = scmp.lt.s32.totalorder %s25, 1
        %s594 = scalar_select %p593, %s25, 1
        %p595 = scmp.lt.s32.totalorder %s26, 0
        %s596 = scalar_select %p595, %s26, 0
        %s597 = sadd.s32 %s596, %s594
        %s598 = smul.addr %s597, 8
        %s599 = scalar_lea.vmem %s8, %s598
      $region64: #{decoder_forward.8} parent=59 // pred_fallthru
        _
    $region60: #{decoder_forward.8} parent=5 // pred_fallthru
      _
  $region6: #{decoder_forward.8} parent=0 // loop_footer
    %s18 = sadd.s32 1, %s14
  $region7: #{decoder_forward.8} parent=0 // loop_footer_branch
    %13 = sbr.rel target = $region3
  $region8: #{decoder_forward.8} parent=0 // loop_exit
    _

// kernel: decoder_forward.11
$region0: #{decoder_forward.11}
  #allocation0 [shape = 'u32[]', space=smem, size = 0x4, offset = 0x4, fixed_abs, tag = 'smem constant byte address 0x4 - core index']
  #allocation1 [shape = 'u32[144,128]{1,0:T(1,128)}', space=vmem, size = 0x12000, scoped, tag = 'internal scratch']
  %s0 = inlined_call_operand.vmem [shape: f32[2,8,32], index: 0, kind: input, shape index: {}]
  %s1 = inlined_call_operand.vmem [shape: f32[32,64], index: 1, kind: input, shape index: {}]
  %s2 = inlined_call_operand.vmem [shape: f32[1,64], index: 2, kind: input, shape index: {}]
  %s3 = inlined_call_operand.vmem [shape: f32[64,32], index: 3, kind: input, shape index: {}]
  %s4 = inlined_call_operand.vmem [shape: f32[1,32], index: 4, kind: input, shape index: {}]
  %s5 = inlined_call_operand.vmem [shape: f32[1,32], index: 5, kind: input, shape index: {}]
  %s6 = inlined_call_operand.vmem [shape: f32[1,32], index: 6, kind: input, shape index: {}]
  %s7 = inlined_call_operand.vmem [shape: f32[2,8,1], index: 7, kind: input, shape index: {}]
  %s8 = inlined_call_operand.hbm [shape: f32[2,8,32], index: 8, kind: output, shape index: {}]
  %s9 = sld [smem:[#allocation0]]
  $region65: #{decoder_forward.11} parent=0
    _
  %s11 = ssub.s32 1, %s9
  %s12 = scalar_select 0, %s11, %s9
  $region1: #{decoder_forward.11} parent=0
    #allocation2 [shape = 'u8[8192]{0}', space=vmem, size = 0x2000, scoped, tag = 'output window, operand 0']
    #allocation3 [shape = 's32[2]{0}', space=sflag, size = 0x8, scoped, tag = 'scoped memory for decoder_forward.11']
    %13 = vsyncpa [#allocation3], 0
    %s14 = scalar_lea.sflag [#allocation3], 1
    %15 = vsyncpa %s14, 0
    loop: start=0, step=1, limit=4
    $region2: #{decoder_forward.11} parent=1 // loop_pre_header
      _
    $region3: #{decoder_forward.11} parent=1 // loop_header
      %s17 = sphi 0, %s21
      %p18 = scmp.ge.s32.totalorder %s17, 4
      %s24 = sphi 0, %s36
      %s25 = sphi 0, %s32
      %s26 = sphi 0, %s24
      %s27 = sphi 0, %s25
      %s28 = sphi 0, %s26
      %s29 = sphi 0, %s27
      %s41 = sphi 0, %s43
      %s44 = sphi 0, %s41
      %s45 = sphi 0, %s44
      %s61 = sphi 0, %s45
      %s65 = sphi 0, %s65
      %s67 = sphi 0, %s65
      %s68 = sphi 0, %s67
      %s82 = sphi 0, %s68
      %s86 = sphi 0, %s86
      %s88 = sphi 0, %s86
      %s89 = sphi 0, %s88
      %s103 = sphi 0, %s89
      %s107 = sphi 0, %s107
      %s109 = sphi 0, %s107
      %s110 = sphi 0, %s109
      %s124 = sphi 0, %s110
      %s128 = sphi 0, %s128
      %s130 = sphi 0, %s128
      %s131 = sphi 0, %s130
      %s145 = sphi 0, %s131
      %s149 = sphi 0, %s149
      %s151 = sphi 0, %s149
      %s152 = sphi 0, %s151
      %s166 = sphi 0, %s152
      %s170 = sphi 0, %s170
      %s172 = sphi 0, %s170
      %s173 = sphi 0, %s172
      %s187 = sphi 0, %s173
      %s195 = sphi 0, %s197
      %s198 = sphi 0, %s195
      %s199 = sphi 0, %s198
      %s215 = sphi 0, %s199
      %s223 = sphi 0, %s225
      %s226 = sphi 0, %s223
      %s227 = sphi 0, %s226
      %s243 = sphi 0, %s227
    $region4: #{decoder_forward.11} parent=1 // loop_header_branch
      %20 = sbr.rel (%p18) target = $region8
    $region5: #{decoder_forward.11} parent=1 // loop_body
      %s22 = ssub.s32 %s17, 1
      %s23 = ssub.s32 %s17, 2
      %s30 = sadd.s32 1, %s25
      %p31 = scmp.ge.s32.totalorder %s30, 1
      %s32 = scalar_select %p31, 0, %s30
      %s33 = sadd.s32 1, %s24
      %s34 = scalar_select %p31, %s33, %s24
      %p35 = scmp.ge.s32.totalorder %s34, 2
      %s36 = scalar_select %p35, 0, %s34
      %s37 = ssub.s32 %s24, %s36
      %s38 = ssub.s32 %s25, %s32
      %s39 = sor.u32 %s37, %s38
      %p40 = scmp.eq.s32.totalorder %s39, 0
      %s42 = sadd.s32 %s41, 1
      %s43 = scalar_select %p40, %s41, %s42
      %p46 = pneg %p40
      %p47 = scmp.eq.s32.totalorder %s17, 1
      %p48 = por %p46, %p47
      %p49 = scmp.ne.s32.totalorder %s41, %s44
      %p50 = scmp.eq.s32.totalorder %s17, 0
      %p51 = por %p49, %p50
      %p52 = scmp.ne.s32.totalorder %s41, %s44
      %p53 = scmp.eq.s32.totalorder %s22, 1
      %p54 = por %p52, %p53
      %p55 = scmp.ne.s32.totalorder %s44, %s45
      %p56 = scmp.eq.s32.totalorder %s22, 0
      %p57 = por %p55, %p56
      %p58 = scmp.ne.s32.totalorder %s44, %s45
      %p59 = scmp.eq.s32.totalorder %s23, 1
      %p60 = por %p58, %p59
      %p62 = scmp.ne.s32.totalorder %s45, %s61
      %p63 = scmp.eq.s32.totalorder %s23, 0
      %p64 = por %p62, %p63
      %s66 = sadd.s32 %s65, 1
      %p69 = scmp.eq.s32.totalorder %s17, 1
      %p70 = scmp.ne.s32.totalorder %s65, %s67
      %p71 = scmp.eq.s32.totalorder %s17, 0
      %p72 = por %p70, %p71
      %p73 = scmp.ne.s32.totalorder %s65, %s67
      %p74 = scmp.eq.s32.totalorder %s22, 1
      %p75 = por %p73, %p74
      %p76 = scmp.ne.s32.totalorder %s67, %s68
      %p77 = scmp.eq.s32.totalorder %s22, 0
      %p78 = por %p76, %p77
      %p79 = scmp.ne.s32.totalorder %s67, %s68
      %p80 = scmp.eq.s32.totalorder %s23, 1
      %p81 = por %p79, %p80
      %p83 = scmp.ne.s32.totalorder %s68, %s82
      %p84 = scmp.eq.s32.totalorder %s23, 0
      %p85 = por %p83, %p84
      %s87 = sadd.s32 %s86, 1
      %p90 = scmp.eq.s32.totalorder %s17, 1
      %p91 = scmp.ne.s32.totalorder %s86, %s88
      %p92 = scmp.eq.s32.totalorder %s17, 0
      %p93 = por %p91, %p92
      %p94 = scmp.ne.s32.totalorder %s86, %s88
      %p95 = scmp.eq.s32.totalorder %s22, 1
      %p96 = por %p94, %p95
      %p97 = scmp.ne.s32.totalorder %s88, %s89
      %p98 = scmp.eq.s32.totalorder %s22, 0
      %p99 = por %p97, %p98
      %p100 = scmp.ne.s32.totalorder %s88, %s89
      %p101 = scmp.eq.s32.totalorder %s23, 1
      %p102 = por %p100, %p101
      %p104 = scmp.ne.s32.totalorder %s89, %s103
      %p105 = scmp.eq.s32.totalorder %s23, 0
      %p106 = por %p104, %p105
      %s108 = sadd.s32 %s107, 1
      %p111 = scmp.eq.s32.totalorder %s17, 1
      %p112 = scmp.ne.s32.totalorder %s107, %s109
      %p113 = scmp.eq.s32.totalorder %s17, 0
      %p114 = por %p112, %p113
      %p115 = scmp.ne.s32.totalorder %s107, %s109
      %p116 = scmp.eq.s32.totalorder %s22, 1
      %p117 = por %p115, %p116
      %p118 = scmp.ne.s32.totalorder %s109, %s110
      %p119 = scmp.eq.s32.totalorder %s22, 0
      %p120 = por %p118, %p119
      %p121 = scmp.ne.s32.totalorder %s109, %s110
      %p122 = scmp.eq.s32.totalorder %s23, 1
      %p123 = por %p121, %p122
      %p125 = scmp.ne.s32.totalorder %s110, %s124
      %p126 = scmp.eq.s32.totalorder %s23, 0
      %p127 = por %p125, %p126
      %s129 = sadd.s32 %s128, 1
      %p132 = scmp.eq.s32.totalorder %s17, 1
      %p133 = scmp.ne.s32.totalorder %s128, %s130
      %p134 = scmp.eq.s32.totalorder %s17, 0
      %p135 = por %p133, %p134
      %p136 = scmp.ne.s32.totalorder %s128, %s130
      %p137 = scmp.eq.s32.totalorder %s22, 1
      %p138 = por %p136, %p137
      %p139 = scmp.ne.s32.totalorder %s130, %s131
      %p140 = scmp.eq.s32.totalorder %s22, 0
      %p141 = por %p139, %p140
      %p142 = scmp.ne.s32.totalorder %s130, %s131
      %p143 = scmp.eq.s32.totalorder %s23, 1
      %p144 = por %p142, %p143
      %p146 = scmp.ne.s32.totalorder %s131, %s145
      %p147 = scmp.eq.s32.totalorder %s23, 0
      %p148 = por %p146, %p147
      %s150 = sadd.s32 %s149, 1
      %p153 = scmp.eq.s32.totalorder %s17, 1
      %p154 = scmp.ne.s32.totalorder %s149, %s151
      %p155 = scmp.eq.s32.totalorder %s17, 0
      %p156 = por %p154, %p155
      %p157 = scmp.ne.s32.totalorder %s149, %s151
      %p158 = scmp.eq.s32.totalorder %s22, 1
      %p159 = por %p157, %p158
      %p160 = scmp.ne.s32.totalorder %s151, %s152
      %p161 = scmp.eq.s32.totalorder %s22, 0
      %p162 = por %p160, %p161
      %p163 = scmp.ne.s32.totalorder %s151, %s152
      %p164 = scmp.eq.s32.totalorder %s23, 1
      %p165 = por %p163, %p164
      %p167 = scmp.ne.s32.totalorder %s152, %s166
      %p168 = scmp.eq.s32.totalorder %s23, 0
      %p169 = por %p167, %p168
      %s171 = sadd.s32 %s170, 1
      %p174 = scmp.eq.s32.totalorder %s17, 1
      %p175 = scmp.ne.s32.totalorder %s170, %s172
      %p176 = scmp.eq.s32.totalorder %s17, 0
      %p177 = por %p175, %p176
      %p178 = scmp.ne.s32.totalorder %s170, %s172
      %p179 = scmp.eq.s32.totalorder %s22, 1
      %p180 = por %p178, %p179
      %p181 = scmp.ne.s32.totalorder %s172, %s173
      %p182 = scmp.eq.s32.totalorder %s22, 0
      %p183 = por %p181, %p182
      %p184 = scmp.ne.s32.totalorder %s172, %s173
      %p185 = scmp.eq.s32.totalorder %s23, 1
      %p186 = por %p184, %p185
      %p188 = scmp.ne.s32.totalorder %s173, %s187
      %p189 = scmp.eq.s32.totalorder %s23, 0
      %p190 = por %p188, %p189
      %s191 = ssub.s32 %s24, %s36
      %s192 = ssub.s32 %s25, %s32
      %s193 = sor.u32 %s191, %s192
      %p194 = scmp.eq.s32.totalorder %s193, 0
      %s196 = sadd.s32 %s195, 1
      %s197 = scalar_select %p194, %s195, %s196
      %p200 = pneg %p194
      %p201 = scmp.eq.s32.totalorder %s17, 1
      %p202 = por %p200, %p201
      %p203 = scmp.ne.s32.totalorder %s195, %s198
      %p204 = scmp.eq.s32.totalorder %s17, 0
      %p205 = por %p203, %p204
      %p206 = scmp.ne.s32.totalorder %s195, %s198
      %p207 = scmp.eq.s32.totalorder %s22, 1
      %p208 = por %p206, %p207
      %p209 = scmp.ne.s32.totalorder %s198, %s199
      %p210 = scmp.eq.s32.totalorder %s22, 0
      %p211 = por %p209, %p210
      %p212 = scmp.ne.s32.totalorder %s198, %s199
      %p213 = scmp.eq.s32.totalorder %s23, 1
      %p214 = por %p212, %p213
      %p216 = scmp.ne.s32.totalorder %s199, %s215
      %p217 = scmp.eq.s32.totalorder %s23, 0
      %p218 = por %p216, %p217
      %s219 = ssub.s32 %s24, %s36
      %s220 = ssub.s32 %s25, %s32
      %s221 = sor.u32 %s219, %s220
      %p222 = scmp.eq.s32.totalorder %s221, 0
      %s224 = sadd.s32 %s223, 1
      %s225 = scalar_select %p222, %s223, %s224
      %p228 = pneg %p222
      %p229 = scmp.eq.s32.totalorder %s17, 1
      %p230 = por %p228, %p229
      %p231 = scmp.ne.s32.totalorder %s223, %s226
      %p232 = scmp.eq.s32.totalorder %s17, 0
      %p233 = por %p231, %p232
      %p234 = scmp.ne.s32.totalorder %s223, %s226
      %p235 = scmp.eq.s32.totalorder %s22, 1
      %p236 = por %p234, %p235
      %p237 = scmp.ne.s32.totalorder %s226, %s227
      %p238 = scmp.eq.s32.totalorder %s22, 0
      %p239 = por %p237, %p238
      %p240 = scmp.ne.s32.totalorder %s226, %s227
      %p241 = scmp.eq.s32.totalorder %s23, 1
      %p242 = por %p240, %p241
      %p244 = scmp.ne.s32.totalorder %s227, %s243
      %p245 = scmp.eq.s32.totalorder %s23, 0
      %p246 = por %p244, %p245
      %p247 = scmp.le.s32.totalorder 1, %s17
      %p248 = scmp.lt.s32.totalorder %s17, 3
      %p249 = pnand %p247, %p248
      %p250 = pneg %p249
      // Predicated region
      $region9: #{decoder_forward.11} parent=5 // pred_check
        _
      $region10: #{decoder_forward.11} parent=5 // pred_check_branch
        %252 = sbr.rel (%p249) target = $region12
      $region11: #{decoder_forward.11} parent=5 // pred_region
        %s253 = ssub.s32 %s17, 1
        // Predicated region
        $region13: #{decoder_forward.11} parent=11 // pred_check
          %p254 = pneg %p78
        $region14: #{decoder_forward.11} parent=11 // pred_check_branch
          %256 = sbr.rel (%p254) target = $region16
        $region15: #{decoder_forward.11} parent=11 // pred_region
          _
        $region16: #{decoder_forward.11} parent=11 // pred_fallthru
          _
        // Predicated region
        $region17: #{decoder_forward.11} parent=11 // pred_check
          %p257 = pneg %p99
        $region18: #{decoder_forward.11} parent=11 // pred_check_branch
          %259 = sbr.rel (%p257) target = $region20
        $region19: #{decoder_forward.11} parent=11 // pred_region
          _
        $region20: #{decoder_forward.11} parent=11 // pred_fallthru
          _
        // Predicated region
        $region21: #{decoder_forward.11} parent=11 // pred_check
          %p260 = pneg %p120
        $region22: #{decoder_forward.11} parent=11 // pred_check_branch
          %262 = sbr.rel (%p260) target = $region24
        $region23: #{decoder_forward.11} parent=11 // pred_region
          _
        $region24: #{decoder_forward.11} parent=11 // pred_fallthru
          _
        // Predicated region
        $region25: #{decoder_forward.11} parent=11 // pred_check
          %p263 = pneg %p141
        $region26: #{decoder_forward.11} parent=11 // pred_check_branch
          %265 = sbr.rel (%p263) target = $region28
        $region27: #{decoder_forward.11} parent=11 // pred_region
          _
        $region28: #{decoder_forward.11} parent=11 // pred_fallthru
          _
        // Predicated region
        $region29: #{decoder_forward.11} parent=11 // pred_check
          %p266 = pneg %p162
        $region30: #{decoder_forward.11} parent=11 // pred_check_branch
          %268 = sbr.rel (%p266) target = $region32
        $region31: #{decoder_forward.11} parent=11 // pred_region
          _
        $region32: #{decoder_forward.11} parent=11 // pred_fallthru
          _
        // Predicated region
        $region33: #{decoder_forward.11} parent=11 // pred_check
          %p269 = pneg %p183
        $region34: #{decoder_forward.11} parent=11 // pred_check_branch
          %271 = sbr.rel (%p269) target = $region36
        $region35: #{decoder_forward.11} parent=11 // pred_region
          _
        $region36: #{decoder_forward.11} parent=11 // pred_fallthru
          _
      $region12: #{decoder_forward.11} parent=5 // pred_fallthru
        _
      %p272 = scmp.lt.s32.totalorder %s17, 2
      // Predicated region
      $region37: #{decoder_forward.11} parent=5 // pred_check
        %p273 = pneg %p272
      $region38: #{decoder_forward.11} parent=5 // pred_check_branch
        %275 = sbr.rel (%p273) target = $region40
      $region39: #{decoder_forward.11} parent=5 // pred_region
        // Predicated region
        $region41: #{decoder_forward.11} parent=39 // pred_check
          %p276 = pneg %p51
        $region42: #{decoder_forward.11} parent=39 // pred_check_branch
          %278 = sbr.rel (%p276) target = $region44
        $region43: #{decoder_forward.11} parent=39 // pred_region
          %p279 = scmp.lt.s32.totalorder %s24, 1
          %s280 = scalar_select %p279, %s24, 1
          %p281 = scmp.lt.s32.totalorder %s25, 0
          %s282 = scalar_select %p281, %s25, 0
          %s283 = sadd.s32 %s282, %s280
          %s284 = smul.addr %s283, 8
          %s285 = scalar_lea.vmem %s0, %s284
        $region44: #{decoder_forward.11} parent=39 // pred_fallthru
          _
        // Predicated region
        $region45: #{decoder_forward.11} parent=39 // pred_check
          %p286 = pneg %p205
        $region46: #{decoder_forward.11} parent=39 // pred_check_branch
          %288 = sbr.rel (%p286) target = $region48
        $region47: #{decoder_forward.11} parent=39 // pred_region
          %p289 = scmp.lt.s32.totalorder %s24, 1
          %s290 = scalar_select %p289, %s24, 1
          %p291 = scmp.lt.s32.totalorder %s25, 0
          %s292 = scalar_select %p291, %s25, 0
          %s293 = sadd.s32 %s292, %s290
          %s294 = smul.addr %s293, 8
          %s295 = scalar_lea.vmem %s7, %s294
        $region48: #{decoder_forward.11} parent=39 // pred_fallthru
          _
      $region40: #{decoder_forward.11} parent=5 // pred_fallthru
        _
      %p296 = scmp.le.s32.totalorder 1, %s17
      %p297 = scmp.lt.s32.totalorder %s17, 3
      %p298 = pnand %p296, %p297
      %p299 = pneg %p298
      // Predicated region
      $region49: #{decoder_forward.11} parent=5 // pred_check
        _
      $region50: #{decoder_forward.11} parent=5 // pred_check_branch
        %301 = sbr.rel (%p298) target = $region52
      $region51: #{decoder_forward.11} parent=5 // pred_region
        %s302 = ssub.s32 %s17, 1
        %p303 = scmp.lt.s32.totalorder %s26, 1
        %s304 = scalar_select %p303, %s26, 1
        %p305 = scmp.lt.s32.totalorder %s27, 0
        %s306 = scalar_select %p305, %s27, 0
        %s307 = sadd.s32 %s306, %s304
        %s308 = smul.addr %s307, 8
        %s309 = scalar_lea.vmem %s0, %s308
        %p310 = pneg %p57
        %p311 = pneg %p54
        %p312 = pneg %p78
        %p313 = pneg %p75
        %p314 = pneg %p99
        %p315 = pneg %p96
        %p316 = pneg %p120
        %p317 = pneg %p117
        %p318 = pneg %p141
        %p319 = pneg %p138
        %p320 = pneg %p162
        %p321 = pneg %p159
        %p322 = pneg %p183
        %p323 = pneg %p180
        %p324 = scmp.lt.s32.totalorder %s26, 1
        %s325 = scalar_select %p324, %s26, 1
        %p326 = scmp.lt.s32.totalorder %s27, 0
        %s327 = scalar_select %p326, %s27, 0
        %s328 = sadd.s32 %s327, %s325
        %s329 = smul.addr %s328, 8
        %s330 = scalar_lea.vmem %s7, %s329
        %p331 = pneg %p211
        %p332 = pneg %p208
        %p333 = pneg %p239
        %p334 = pneg %p236
        %s335 = sand.u32 %s226, 1
        %s336 = scalar_lea.sflag [#allocation3], %s335
        %s337 = sand.u32 %s226, 1
        %s338 = smul.addr %s337, 8
        %s339 = scalar_lea.vmem [#allocation2], %s338
        %p340 = scmp.lt.s32.totalorder %s26, 1
        %s341 = scalar_select %p340, %s26, 1
        %p342 = scmp.lt.s32.totalorder %s27, 0
        %s343 = scalar_select %p342, %s27, 0
        %s344 = sadd.s32 %s343, %s341
        %s345 = smul.addr %s344, 8
        %s346 = scalar_lea.vmem %s0, %s345
        %p347 = scmp.lt.s32.totalorder %s26, 1
        %s348 = scalar_select %p347, %s26, 1
        %p349 = scmp.lt.s32.totalorder %s27, 0
        %s350 = scalar_select %p349, %s27, 0
        %s351 = sadd.s32 %s350, %s348
        %s352 = smul.addr %s351, 8
        %s353 = scalar_lea.vmem %s7, %s352
        %v354 = vld [vmem:[%s346] sm:$0xff]
        %v355 = vld [vmem:[%s1] sm:$0xff]
        %v356 = vld [vmem:[%s1 + $0x8] sm:$0xff]
        %v357 = vld [vmem:[%s1 + $0x10] sm:$0xff]
        %v358 = vld [vmem:[%s1 + $0x18] sm:$0xff]
        %v359 = vld [vmem:[%s2] sm:$0x1]
        %v361 = vlaneseq
        %v362 = vshrl.u32 %v361, 7
        %v363 = vsub.s32 0, %v362
        %v364 = vrot.slane %v359, %v363
        %vm366 = vcmask 261120
        %v368 = vsel %vm366, %v354, 0
        %370 = vmatprep.subr.mxu0 0.0
        %371 = vmatpush1.msra.mxu0 0.0
        %372 = vmatprep.subr.mxu0 0.0
        %373 = vmatpush1.msra.mxu0 0.0
        %374 = vmatprep.subr.mxu0 0.0
        %375 = vmatpush1.msra.mxu0 0.0
        %376 = vmatprep.subr.mxu0 0.0
        %377 = vmatpush1.msra.mxu0 0.0
        %378 = vmatprep.subr.mxu0 0.0
        %379 = vmatpush1.msra.mxu0 0.0
        %380 = vmatprep.subr.mxu0 0.0
        %381 = vmatpush1.msra.mxu0 0.0
        %382 = vmatprep.subr.mxu0 0.0
        %383 = vmatpush1.msra.mxu0 0.0
        %384 = vmatprep.subr.mxu0 0.0
        %385 = vmatpush1.msra.mxu0 0.0
        %386 = vmatprep.subr.mxu0 0.0
        %387 = vmatpush1.msra.mxu0 0.0
        %388 = vmatprep.subr.mxu0 0.0
        %389 = vmatpush1.msra.mxu0 0.0
        %390 = vmatprep.subr.mxu0 0.0
        %391 = vmatpush1.msra.mxu0 0.0
        %392 = vmatprep.subr.mxu0 0.0
        %393 = vmatpush1.msra.mxu0 0.0
        %394 = vmatprep.subr.mxu0 0.0
        %395 = vmatpush1.msra.mxu0 %v358
        %396 = vmatprep.subr.mxu0 0.0
        %397 = vmatpush1.msra.mxu0 %v357
        %398 = vmatprep.subr.mxu0 0.0
        %399 = vmatpush1.msra.mxu0 %v356
        %400 = vmatprep.subr.mxu0 0.0
        %401 = vmatpush1.msra.mxu0 %v355
        %402 = vmatprep.subr.mxu0 0.0
        %403 = vmatpush2.msra.mxu0 0.0
        %404 = vmatprep.subr.mxu0 0.0
        %405 = vmatpush2.msra.mxu0 0.0
        %406 = vmatprep.subr.mxu0 0.0
        %407 = vmatpush2.msra.mxu0 0.0
        %408 = vmatprep.subr.mxu0 0.0
        %409 = vmatpush2.msra.mxu0 0.0
        %410 = vmatprep.subr.mxu0 0.0
        %411 = vmatpush2.msra.mxu0 0.0
        %412 = vmatprep.subr.mxu0 0.0
        %413 = vmatpush2.msra.mxu0 0.0
        %414 = vmatprep.subr.mxu0 0.0
        %415 = vmatpush2.msra.mxu0 0.0
        %416 = vmatprep.subr.mxu0 0.0
        %417 = vmatpush2.msra.mxu0 0.0
        %418 = vmatprep.subr.mxu0 0.0
        %419 = vmatpush2.msra.mxu0 0.0
        %420 = vmatprep.subr.mxu0 0.0
        %421 = vmatpush2.msra.mxu0 0.0
        %422 = vmatprep.subr.mxu0 0.0
        %423 = vmatpush2.msra.mxu0 0.0
        %424 = vmatprep.subr.mxu0 0.0
        %425 = vmatpush2.msra.mxu0 0.0
        %426 = vmatprep.subr.mxu0 0.0
        %427 = vmatpush2.msra.mxu0 0.0
        %428 = vmatprep.subr.mxu0 0.0
        %429 = vmatpush2.msra.mxu0 0.0
        %430 = vmatprep.subr.mxu0 0.0
        %431 = vmatpush2.msra.mxu0 0.0
        %432 = vmatprep.subr.mxu0 0.0
        %433 = vmatpush2.msra.mxu0 0.0
        %434 = vmatprep.mubr.f32.mxu0 0.0
        %435 = vmatmul.mubr.f32.gmra.mxu0 %v368
        %v436 = vpop.f32.mrf.mxu0
        %v437 = vadd.f32 %v364, %v436
        %v438 = vpop.f32.mrf.mxu0
        %439 = vdwg.mxu0
        %v440 = vmax.f32 %v437, 0.0
        %v441 = vld [vmem:[%s3] sm:$0xff]
        %v442 = vld [vmem:[%s3 + $0x8] sm:$0xff]
        %v443 = vld [vmem:[%s3 + $0x10] sm:$0xff]
        %v444 = vld [vmem:[%s3 + $0x18] sm:$0xff]
        %v445 = vld [vmem:[%s3 + $0x20] sm:$0xff]
        %v446 = vld [vmem:[%s3 + $0x28] sm:$0xff]
        %v447 = vld [vmem:[%s3 + $0x30] sm:$0xff]
        %v448 = vld [vmem:[%s3 + $0x38] sm:$0xff]
        %v449 = vld [vmem:[%s4] sm:$0x1]
        %v451 = vlaneseq
        %v452 = vshrl.u32 %v451, 7
        %v453 = vsub.s32 0, %v452
        %v454 = vrot.slane %v449, %v453
        %vm456 = vcmask 523264
        %v458 = vsel %vm456, %v440, 0
        %460 = vmatprep.subr.mxu0 0.0
        %461 = vmatpush1.msra.mxu0 0.0
        %462 = vmatprep.subr.mxu0 0.0
        %463 = vmatpush1.msra.mxu0 0.0
        %464 = vmatprep.subr.mxu0 0.0
        %465 = vmatpush1.msra.mxu0 0.0
        %466 = vmatprep.subr.mxu0 0.0
        %467 = vmatpush1.msra.mxu0 0.0
        %468 = vmatprep.subr.mxu0 0.0
        %469 = vmatpush1.msra.mxu0 0.0
        %470 = vmatprep.subr.mxu0 0.0
        %471 = vmatpush1.msra.mxu0 0.0
        %472 = vmatprep.subr.mxu0 0.0
        %473 = vmatpush1.msra.mxu0 0.0
        %474 = vmatprep.subr.mxu0 0.0
        %475 = vmatpush1.msra.mxu0 0.0
        %476 = vmatprep.subr.mxu0 0.0
        %477 = vmatpush1.msra.mxu0 %v448
        %478 = vmatprep.subr.mxu0 0.0
        %479 = vmatpush1.msra.mxu0 %v447
        %480 = vmatprep.subr.mxu0 0.0
        %481 = vmatpush1.msra.mxu0 %v446
        %482 = vmatprep.subr.mxu0 0.0
        %483 = vmatpush1.msra.mxu0 %v445
        %484 = vmatprep.subr.mxu0 0.0
        %485 = vmatpush1.msra.mxu0 %v444
        %486 = vmatprep.subr.mxu0 0.0
        %487 = vmatpush1.msra.mxu0 %v443
        %488 = vmatprep.subr.mxu0 0.0
        %489 = vmatpush1.msra.mxu0 %v442
        %490 = vmatprep.subr.mxu0 0.0
        %491 = vmatpush1.msra.mxu0 %v441
        %492 = vmatprep.subr.mxu0 0.0
        %493 = vmatpush2.msra.mxu0 0.0
        %494 = vmatprep.subr.mxu0 0.0
        %495 = vmatpush2.msra.mxu0 0.0
        %496 = vmatprep.subr.mxu0 0.0
        %497 = vmatpush2.msra.mxu0 0.0
        %498 = vmatprep.subr.mxu0 0.0
        %499 = vmatpush2.msra.mxu0 0.0
        %500 = vmatprep.subr.mxu0 0.0
        %501 = vmatpush2.msra.mxu0 0.0
        %502 = vmatprep.subr.mxu0 0.0
        %503 = vmatpush2.msra.mxu0 0.0
        %504 = vmatprep.subr.mxu0 0.0
        %505 = vmatpush2.msra.mxu0 0.0
        %506 = vmatprep.subr.mxu0 0.0
        %507 = vmatpush2.msra.mxu0 0.0
        %508 = vmatprep.subr.mxu0 0.0
        %509 = vmatpush2.msra.mxu0 0.0
        %510 = vmatprep.subr.mxu0 0.0
        %511 = vmatpush2.msra.mxu0 0.0
        %512 = vmatprep.subr.mxu0 0.0
        %513 = vmatpush2.msra.mxu0 0.0
        %514 = vmatprep.subr.mxu0 0.0
        %515 = vmatpush2.msra.mxu0 0.0
        %516 = vmatprep.subr.mxu0 0.0
        %517 = vmatpush2.msra.mxu0 0.0
        %518 = vmatprep.subr.mxu0 0.0
        %519 = vmatpush2.msra.mxu0 0.0
        %520 = vmatprep.subr.mxu0 0.0
        %521 = vmatpush2.msra.mxu0 0.0
        %522 = vmatprep.subr.mxu0 0.0
        %523 = vmatpush2.msra.mxu0 0.0
        %524 = vmatprep.mubr.f32.mxu0 0.0
        %525 = vmatmul.mubr.f32.gmra.mxu0 %v458
        %v526 = vpop.f32.mrf.mxu0
        %v527 = vadd.f32 %v454, %v526
        %v528 = vpop.f32.mrf.mxu0
        %529 = vdwg.mxu0
        %v530 = vadd.f32 %v527, %v354
        %v531 = vld [vmem:[%s5] sm:$0x1]
        %v532 = vld [vmem:[%s6] sm:$0x1]
        %v533 = vsel %vm366, %v530, 0.0
        %534 = vadd.xlane.f32.xlu0 %v533
        %v535 = vpop.xlane.xlu0 %534
        %v536 = vrcp.pop 32.0
        %v537 = vmul.f32 %v535, %v536
        %v538 = vsub.f32 %v530, %v537
        %v539 = vmul.f32 %v538, %v538
        %v540 = vsel %vm366, %v539, 0.0
        %541 = vadd.xlane.f32.xlu0 %v540
        %v542 = vpop.xlane.xlu0 %541
        %v543 = vmul.f32 %v542, %v536
        %v544 = vadd.f32 %v543, 1e-05
        %v545 = vrsqrt.pop %v544
        %v546 = vmul.f32 %v538, %v545
        %v548 = vlaneseq
        %v549 = vshrl.u32 %v548, 7
        %v550 = vsub.s32 0, %v549
        %v551 = vrot.slane %v531, %v550
        %v553 = vmul.f32 %v546, %v551
        %v555 = vlaneseq
        %v556 = vshrl.u32 %v555, 7
        %v557 = vsub.s32 0, %v556
        %v558 = vrot.slane %v532, %v557
        %v560 = vadd.f32 %v553, %v558
        %v561 = vld [vmem:[%s353] sm:$0xff]
        %563 = vset.pattern.permute.xlu0 0
        %564 = vperm.xlu0 %563, %v561
        %v565 = vpop.permute.xlu0 %564
        %v567 = vmul.f32 %v560, %v565
        %568 = vst.msk [vmem:[%s339] sm:$0xff] %vm366, %v567
        %s569 = sand.u32 %s226, 1
        %s570 = scalar_lea.sflag [#allocation3], %s569
        %s571 = sand.u32 %s226, 1
        %s572 = smul.addr %s571, 8
        %s573 = scalar_lea.vmem [#allocation2], %s572
        // Predicated region
        $region53: #{decoder_forward.11} parent=51 // pred_check
          %p574 = pneg %p236
        $region54: #{decoder_forward.11} parent=51 // pred_check_branch
          %576 = sbr.rel (%p574) target = $region56
        $region55: #{decoder_forward.11} parent=51 // pred_region
          %s578 = ssub.s32 128, 128
          %579 = vsyncadd %s570, %s578
          %s580 = sadd.s32 %s27, %s26
          %s581 = smul.addr %s580, 128
          %s582 = scalar_lea.hbm %s8, %s581
          %s584 = sshll.u32 %s573, 4
          %s585 = int_to_ptr.vmem [resolvable:$true] %s584
          %587 = dma.vmem_to_hbm [thread:$0]  %s585, 128, %s582, %s570
        $region56: #{decoder_forward.11} parent=51 // pred_fallthru
          _
      $region52: #{decoder_forward.11} parent=5 // pred_fallthru
        _
      %p588 = scmp.le.s32.totalorder 2, %s17
      // Predicated region
      $region57: #{decoder_forward.11} parent=5 // pred_check
        %p589 = pneg %p588
      $region58: #{decoder_forward.11} parent=5 // pred_check_branch
        %591 = sbr.rel (%p589) target = $region60
      $region59: #{decoder_forward.11} parent=5 // pred_region
        %s592 = ssub.s32 %s17, 2
        // Predicated region
        $region61: #{decoder_forward.11} parent=59 // pred_check
          %p593 = pneg %p242
        $region62: #{decoder_forward.11} parent=59 // pred_check_branch
          %595 = sbr.rel (%p593) target = $region64
        $region63: #{decoder_forward.11} parent=59 // pred_region
          %s596 = sand.u32 %s227, 1
          %s597 = scalar_lea.sflag [#allocation3], %s596
          %s598 = sand.u32 %s227, 1
          %s599 = smul.addr %s598, 8
          %s600 = scalar_lea.vmem [#allocation2], %s599
          %601 = dma.done %s597, 128
        $region64: #{decoder_forward.11} parent=59 // pred_fallthru
          _
      $region60: #{decoder_forward.11} parent=5 // pred_fallthru
        _
    $region6: #{decoder_forward.11} parent=1 // loop_footer
      %s21 = sadd.s32 1, %s17
    $region7: #{decoder_forward.11} parent=1 // loop_footer_branch
      %16 = sbr.rel target = $region3
    $region8: #{decoder_forward.11} parent=1 // loop_exit
      _
    %602 = vsyncpa [#allocation3], 1
    %s603 = scalar_lea.sflag [#allocation3], 1
    %604 = vsyncpa %s603, 1

// kernel: decoder_forward.6
$region0: #{decoder_forward.6}
  #allocation0 [shape = 'u32[]', space=smem, size = 0x4, offset = 0x4, fixed_abs, tag = 'smem constant byte address 0x4 - core index']
  #allocation1 [shape = 'u32[144,128]{1,0:T(1,128)}', space=vmem, size = 0x12000, scoped, tag = 'internal scratch']
  %s0 = inlined_call_operand.vmem [shape: f32[2,8,32], index: 0, kind: input, shape index: {}]
  %s1 = inlined_call_operand.vmem [shape: f32[32,96], index: 1, kind: input, shape index: {}]
  %s2 = inlined_call_operand.vmem [shape: f32[1,96], index: 2, kind: input, shape index: {}]
  %s3 = inlined_call_operand.vmem [shape: f32[32,32], index: 3, kind: input, shape index: {}]
  %s4 = inlined_call_operand.vmem [shape: f32[1,32], index: 4, kind: input, shape index: {}]
  %s5 = inlined_call_operand.vmem [shape: f32[1,32], index: 5, kind: input, shape index: {}]
  %s6 = inlined_call_operand.vmem [shape: f32[1,32], index: 6, kind: input, shape index: {}]
  %s7 = inlined_call_operand.vmem [shape: f32[2,1,8], index: 7, kind: input, shape index: {}]
  %s8 = inlined_call_operand.vmem [shape: f32[2,8,1], index: 8, kind: input, shape index: {}]
  %s9 = inlined_call_operand.vmem [shape: f32[2,8,32], index: 9, kind: output, shape index: {}]
  %s10 = sld [smem:[#allocation0]]
  $region69: #{decoder_forward.6} parent=0
    _
  %s12 = ssub.s32 1, %s10
  %s13 = scalar_select 0, %s12, %s10
  loop: start=0, step=1, limit=4
  $region2: #{decoder_forward.6} parent=0 // loop_pre_header
    _
  $region3: #{decoder_forward.6} parent=0 // loop_header
    %s15 = sphi 0, %s19
    %p16 = scmp.ge.s32.totalorder %s15, 4
    %s25 = sphi 0, %s27
    %s28 = sphi 0, %s25
    %s29 = sphi 0, %s28
    %s45 = sphi 0, %s29
    %s49 = sphi 0, %s49
    %s51 = sphi 0, %s49
    %s52 = sphi 0, %s51
    %s66 = sphi 0, %s52
    %s70 = sphi 0, %s70
    %s72 = sphi 0, %s70
    %s73 = sphi 0, %s72
    %s87 = sphi 0, %s73
    %s91 = sphi 0, %s91
    %s93 = sphi 0, %s91
    %s94 = sphi 0, %s93
    %s108 = sphi 0, %s94
    %s112 = sphi 0, %s112
    %s114 = sphi 0, %s112
    %s115 = sphi 0, %s114
    %s129 = sphi 0, %s115
    %s133 = sphi 0, %s133
    %s135 = sphi 0, %s133
    %s136 = sphi 0, %s135
    %s150 = sphi 0, %s136
    %s154 = sphi 0, %s154
    %s156 = sphi 0, %s154
    %s157 = sphi 0, %s156
    %s171 = sphi 0, %s157
    %s177 = sphi 0, %s179
    %s180 = sphi 0, %s177
    %s181 = sphi 0, %s180
    %s197 = sphi 0, %s181
    %s203 = sphi 0, %s205
    %s206 = sphi 0, %s203
    %s207 = sphi 0, %s206
    %s223 = sphi 0, %s207
    %s229 = sphi 0, %s231
    %s232 = sphi 0, %s229
    %s233 = sphi 0, %s232
    %s249 = sphi 0, %s233
  $region4: #{decoder_forward.6} parent=0 // loop_header_branch
    %18 = sbr.rel (%p16) target = $region8
  $region5: #{decoder_forward.6} parent=0 // loop_body
    %s20 = ssub.s32 %s15, 1
    %s21 = ssub.s32 %s15, 2
    %s22 = sadd.s32 %s15, 1
    %s23 = ssub.s32 %s15, %s22
    %p24 = scmp.eq.s32.totalorder %s23, 0
    %s26 = sadd.s32 %s25, 1
    %s27 = scalar_select %p24, %s25, %s26
    %p30 = pneg %p24
    %p31 = scmp.eq.s32.totalorder %s15, 1
    %p32 = por %p30, %p31
    %p33 = scmp.ne.s32.totalorder %s25, %s28
    %p34 = scmp.eq.s32.totalorder %s15, 0
    %p35 = por %p33, %p34
    %p36 = scmp.ne.s32.totalorder %s25, %s28
    %p37 = scmp.eq.s32.totalorder %s20, 1
    %p38 = por %p36, %p37
    %p39 = scmp.ne.s32.totalorder %s28, %s29
    %p40 = scmp.eq.s32.totalorder %s20, 0
    %p41 = por %p39, %p40
    %p42 = scmp.ne.s32.totalorder %s28, %s29
    %p43 = scmp.eq.s32.totalorder %s21, 1
    %p44 = por %p42, %p43
    %p46 = scmp.ne.s32.totalorder %s29, %s45
    %p47 = scmp.eq.s32.totalorder %s21, 0
    %p48 = por %p46, %p47
    %s50 = sadd.s32 %s49, 1
    %p53 = scmp.eq.s32.totalorder %s15, 1
    %p54 = scmp.ne.s32.totalorder %s49, %s51
    %p55 = scmp.eq.s32.totalorder %s15, 0
    %p56 = por %p54, %p55
    %p57 = scmp.ne.s32.totalorder %s49, %s51
    %p58 = scmp.eq.s32.totalorder %s20, 1
    %p59 = por %p57, %p58
    %p60 = scmp.ne.s32.totalorder %s51, %s52
    %p61 = scmp.eq.s32.totalorder %s20, 0
    %p62 = por %p60, %p61
    %p63 = scmp.ne.s32.totalorder %s51, %s52
    %p64 = scmp.eq.s32.totalorder %s21, 1
    %p65 = por %p63, %p64
    %p67 = scmp.ne.s32.totalorder %s52, %s66
    %p68 = scmp.eq.s32.totalorder %s21, 0
    %p69 = por %p67, %p68
    %s71 = sadd.s32 %s70, 1
    %p74 = scmp.eq.s32.totalorder %s15, 1
    %p75 = scmp.ne.s32.totalorder %s70, %s72
    %p76 = scmp.eq.s32.totalorder %s15, 0
    %p77 = por %p75, %p76
    %p78 = scmp.ne.s32.totalorder %s70, %s72
    %p79 = scmp.eq.s32.totalorder %s20, 1
    %p80 = por %p78, %p79
    %p81 = scmp.ne.s32.totalorder %s72, %s73
    %p82 = scmp.eq.s32.totalorder %s20, 0
    %p83 = por %p81, %p82
    %p84 = scmp.ne.s32.totalorder %s72, %s73
    %p85 = scmp.eq.s32.totalorder %s21, 1
    %p86 = por %p84, %p85
    %p88 = scmp.ne.s32.totalorder %s73, %s87
    %p89 = scmp.eq.s32.totalorder %s21, 0
    %p90 = por %p88, %p89
    %s92 = sadd.s32 %s91, 1
    %p95 = scmp.eq.s32.totalorder %s15, 1
    %p96 = scmp.ne.s32.totalorder %s91, %s93
    %p97 = scmp.eq.s32.totalorder %s15, 0
    %p98 = por %p96, %p97
    %p99 = scmp.ne.s32.totalorder %s91, %s93
    %p100 = scmp.eq.s32.totalorder %s20, 1
    %p101 = por %p99, %p100
    %p102 = scmp.ne.s32.totalorder %s93, %s94
    %p103 = scmp.eq.s32.totalorder %s20, 0
    %p104 = por %p102, %p103
    %p105 = scmp.ne.s32.totalorder %s93, %s94
    %p106 = scmp.eq.s32.totalorder %s21, 1
    %p107 = por %p105, %p106
    %p109 = scmp.ne.s32.totalorder %s94, %s108
    %p110 = scmp.eq.s32.totalorder %s21, 0
    %p111 = por %p109, %p110
    %s113 = sadd.s32 %s112, 1
    %p116 = scmp.eq.s32.totalorder %s15, 1
    %p117 = scmp.ne.s32.totalorder %s112, %s114
    %p118 = scmp.eq.s32.totalorder %s15, 0
    %p119 = por %p117, %p118
    %p120 = scmp.ne.s32.totalorder %s112, %s114
    %p121 = scmp.eq.s32.totalorder %s20, 1
    %p122 = por %p120, %p121
    %p123 = scmp.ne.s32.totalorder %s114, %s115
    %p124 = scmp.eq.s32.totalorder %s20, 0
    %p125 = por %p123, %p124
    %p126 = scmp.ne.s32.totalorder %s114, %s115
    %p127 = scmp.eq.s32.totalorder %s21, 1
    %p128 = por %p126, %p127
    %p130 = scmp.ne.s32.totalorder %s115, %s129
    %p131 = scmp.eq.s32.totalorder %s21, 0
    %p132 = por %p130, %p131
    %s134 = sadd.s32 %s133, 1
    %p137 = scmp.eq.s32.totalorder %s15, 1
    %p138 = scmp.ne.s32.totalorder %s133, %s135
    %p139 = scmp.eq.s32.totalorder %s15, 0
    %p140 = por %p138, %p139
    %p141 = scmp.ne.s32.totalorder %s133, %s135
    %p142 = scmp.eq.s32.totalorder %s20, 1
    %p143 = por %p141, %p142
    %p144 = scmp.ne.s32.totalorder %s135, %s136
    %p145 = scmp.eq.s32.totalorder %s20, 0
    %p146 = por %p144, %p145
    %p147 = scmp.ne.s32.totalorder %s135, %s136
    %p148 = scmp.eq.s32.totalorder %s21, 1
    %p149 = por %p147, %p148
    %p151 = scmp.ne.s32.totalorder %s136, %s150
    %p152 = scmp.eq.s32.totalorder %s21, 0
    %p153 = por %p151, %p152
    %s155 = sadd.s32 %s154, 1
    %p158 = scmp.eq.s32.totalorder %s15, 1
    %p159 = scmp.ne.s32.totalorder %s154, %s156
    %p160 = scmp.eq.s32.totalorder %s15, 0
    %p161 = por %p159, %p160
    %p162 = scmp.ne.s32.totalorder %s154, %s156
    %p163 = scmp.eq.s32.totalorder %s20, 1
    %p164 = por %p162, %p163
    %p165 = scmp.ne.s32.totalorder %s156, %s157
    %p166 = scmp.eq.s32.totalorder %s20, 0
    %p167 = por %p165, %p166
    %p168 = scmp.ne.s32.totalorder %s156, %s157
    %p169 = scmp.eq.s32.totalorder %s21, 1
    %p170 = por %p168, %p169
    %p172 = scmp.ne.s32.totalorder %s157, %s171
    %p173 = scmp.eq.s32.totalorder %s21, 0
    %p174 = por %p172, %p173
    %s175 = ssub.s32 %s15, %s22
    %p176 = scmp.eq.s32.totalorder %s175, 0
    %s178 = sadd.s32 %s177, 1
    %s179 = scalar_select %p176, %s177, %s178
    %p182 = pneg %p176
    %p183 = scmp.eq.s32.totalorder %s15, 1
    %p184 = por %p182, %p183
    %p185 = scmp.ne.s32.totalorder %s177, %s180
    %p186 = scmp.eq.s32.totalorder %s15, 0
    %p187 = por %p185, %p186
    %p188 = scmp.ne.s32.totalorder %s177, %s180
    %p189 = scmp.eq.s32.totalorder %s20, 1
    %p190 = por %p188, %p189
    %p191 = scmp.ne.s32.totalorder %s180, %s181
    %p192 = scmp.eq.s32.totalorder %s20, 0
    %p193 = por %p191, %p192
    %p194 = scmp.ne.s32.totalorder %s180, %s181
    %p195 = scmp.eq.s32.totalorder %s21, 1
    %p196 = por %p194, %p195
    %p198 = scmp.ne.s32.totalorder %s181, %s197
    %p199 = scmp.eq.s32.totalorder %s21, 0
    %p200 = por %p198, %p199
    %s201 = ssub.s32 %s15, %s22
    %p202 = scmp.eq.s32.totalorder %s201, 0
    %s204 = sadd.s32 %s203, 1
    %s205 = scalar_select %p202, %s203, %s204
    %p208 = pneg %p202
    %p209 = scmp.eq.s32.totalorder %s15, 1
    %p210 = por %p208, %p209
    %p211 = scmp.ne.s32.totalorder %s203, %s206
    %p212 = scmp.eq.s32.totalorder %s15, 0
    %p213 = por %p211, %p212
    %p214 = scmp.ne.s32.totalorder %s203, %s206
    %p215 = scmp.eq.s32.totalorder %s20, 1
    %p216 = por %p214, %p215
    %p217 = scmp.ne.s32.totalorder %s206, %s207
    %p218 = scmp.eq.s32.totalorder %s20, 0
    %p219 = por %p217, %p218
    %p220 = scmp.ne.s32.totalorder %s206, %s207
    %p221 = scmp.eq.s32.totalorder %s21, 1
    %p222 = por %p220, %p221
    %p224 = scmp.ne.s32.totalorder %s207, %s223
    %p225 = scmp.eq.s32.totalorder %s21, 0
    %p226 = por %p224, %p225
    %s227 = ssub.s32 %s15, %s22
    %p228 = scmp.eq.s32.totalorder %s227, 0
    %s230 = sadd.s32 %s229, 1
    %s231 = scalar_select %p228, %s229, %s230
    %p234 = pneg %p228
    %p235 = scmp.eq.s32.totalorder %s15, 1
    %p236 = por %p234, %p235
    %p237 = scmp.ne.s32.totalorder %s229, %s232
    %p238 = scmp.eq.s32.totalorder %s15, 0
    %p239 = por %p237, %p238
    %p240 = scmp.ne.s32.totalorder %s229, %s232
    %p241 = scmp.eq.s32.totalorder %s20, 1
    %p242 = por %p240, %p241
    %p243 = scmp.ne.s32.totalorder %s232, %s233
    %p244 = scmp.eq.s32.totalorder %s20, 0
    %p245 = por %p243, %p244
    %p246 = scmp.ne.s32.totalorder %s232, %s233
    %p247 = scmp.eq.s32.totalorder %s21, 1
    %p248 = por %p246, %p247
    %p250 = scmp.ne.s32.totalorder %s233, %s249
    %p251 = scmp.eq.s32.totalorder %s21, 0
    %p252 = por %p250, %p251
    %p253 = scmp.le.s32.totalorder 1, %s15
    %p254 = scmp.lt.s32.totalorder %s15, 3
    %p255 = pnand %p253, %p254
    %p256 = pneg %p255
    // Predicated region
    $region9: #{decoder_forward.6} parent=5 // pred_check
      _
    $region10: #{decoder_forward.6} parent=5 // pred_check_branch
      %258 = sbr.rel (%p255) target = $region12
    $region11: #{decoder_forward.6} parent=5 // pred_region
      %s259 = ssub.s32 %s15, 1
      // Predicated region
      $region13: #{decoder_forward.6} parent=11 // pred_check
        %p260 = pneg %p62
      $region14: #{decoder_forward.6} parent=11 // pred_check_branch
        %262 = sbr.rel (%p260) target = $region16
      $region15: #{decoder_forward.6} parent=11 // pred_region
        _
      $region16: #{decoder_forward.6} parent=11 // pred_fallthru
        _
      // Predicated region
      $region17: #{decoder_forward.6} parent=11 // pred_check
        %p263 = pneg %p83
      $region18: #{decoder_forward.6} parent=11 // pred_check_branch
        %265 = sbr.rel (%p263) target = $region20
      $region19: #{decoder_forward.6} parent=11 // pred_region
        _
      $region20: #{decoder_forward.6} parent=11 // pred_fallthru
        _
      // Predicated region
      $region21: #{decoder_forward.6} parent=11 // pred_check
        %p266 = pneg %p104
      $region22: #{decoder_forward.6} parent=11 // pred_check_branch
        %268 = sbr.rel (%p266) target = $region24
      $region23: #{decoder_forward.6} parent=11 // pred_region
        _
      $region24: #{decoder_forward.6} parent=11 // pred_fallthru
        _
      // Predicated region
      $region25: #{decoder_forward.6} parent=11 // pred_check
        %p269 = pneg %p125
      $region26: #{decoder_forward.6} parent=11 // pred_check_branch
        %271 = sbr.rel (%p269) target = $region28
      $region27: #{decoder_forward.6} parent=11 // pred_region
        _
      $region28: #{decoder_forward.6} parent=11 // pred_fallthru
        _
      // Predicated region
      $region29: #{decoder_forward.6} parent=11 // pred_check
        %p272 = pneg %p146
      $region30: #{decoder_forward.6} parent=11 // pred_check_branch
        %274 = sbr.rel (%p272) target = $region32
      $region31: #{decoder_forward.6} parent=11 // pred_region
        _
      $region32: #{decoder_forward.6} parent=11 // pred_fallthru
        _
      // Predicated region
      $region33: #{decoder_forward.6} parent=11 // pred_check
        %p275 = pneg %p167
      $region34: #{decoder_forward.6} parent=11 // pred_check_branch
        %277 = sbr.rel (%p275) target = $region36
      $region35: #{decoder_forward.6} parent=11 // pred_region
        _
      $region36: #{decoder_forward.6} parent=11 // pred_fallthru
        _
    $region12: #{decoder_forward.6} parent=5 // pred_fallthru
      _
    %p278 = scmp.lt.s32.totalorder %s15, 2
    // Predicated region
    $region37: #{decoder_forward.6} parent=5 // pred_check
      %p279 = pneg %p278
    $region38: #{decoder_forward.6} parent=5 // pred_check_branch
      %281 = sbr.rel (%p279) target = $region40
    $region39: #{decoder_forward.6} parent=5 // pred_region
      // Predicated region
      $region41: #{decoder_forward.6} parent=39 // pred_check
        %p282 = pneg %p35
      $region42: #{decoder_forward.6} parent=39 // pred_check_branch
        %284 = sbr.rel (%p282) target = $region44
      $region43: #{decoder_forward.6} parent=39 // pred_region
        %p285 = scmp.lt.s32.totalorder %s15, 1
        %s286 = scalar_select %p285, %s15, 1
        %s287 = smul.addr %s286, 8
        %s288 = scalar_lea.vmem %s0, %s287
      $region44: #{decoder_forward.6} parent=39 // pred_fallthru
        _
      // Predicated region
      $region45: #{decoder_forward.6} parent=39 // pred_check
        %p289 = pneg %p187
      $region46: #{decoder_forward.6} parent=39 // pred_check_branch
        %291 = sbr.rel (%p289) target = $region48
      $region47: #{decoder_forward.6} parent=39 // pred_region
        %p292 = scmp.lt.s32.totalorder %s15, 1
        %s293 = scalar_select %p292, %s15, 1
        %s294 = scalar_lea.vmem %s7, %s293
      $region48: #{decoder_forward.6} parent=39 // pred_fallthru
        _
      // Predicated region
      $region49: #{decoder_forward.6} parent=39 // pred_check
        %p295 = pneg %p213
      $region50: #{decoder_forward.6} parent=39 // pred_check_branch
        %297 = sbr.rel (%p295) target = $region52
      $region51: #{decoder_forward.6} parent=39 // pred_region
        %p298 = scmp.lt.s32.totalorder %s15, 1
        %s299 = scalar_select %p298, %s15, 1
        %s300 = smul.addr %s299, 8
        %s301 = scalar_lea.vmem %s8, %s300
      $region52: #{decoder_forward.6} parent=39 // pred_fallthru
        _
    $region40: #{decoder_forward.6} parent=5 // pred_fallthru
      _
    %p302 = scmp.le.s32.totalorder 1, %s15
    %p303 = scmp.lt.s32.totalorder %s15, 3
    %p304 = pnand %p302, %p303
    %p305 = pneg %p304
    // Predicated region
    $region53: #{decoder_forward.6} parent=5 // pred_check
      _
    $region54: #{decoder_forward.6} parent=5 // pred_check_branch
      %307 = sbr.rel (%p304) target = $region56
    $region55: #{decoder_forward.6} parent=5 // pred_region
      %s308 = ssub.s32 %s15, 1
      %p309 = scmp.lt.s32.totalorder %s20, 1
      %s310 = scalar_select %p309, %s20, 1
      %s311 = smul.addr %s310, 8
      %s312 = scalar_lea.vmem %s0, %s311
      %p313 = pneg %p41
      %p314 = pneg %p38
      %p315 = pneg %p62
      %p316 = pneg %p59
      %p317 = pneg %p83
      %p318 = pneg %p80
      %p319 = pneg %p104
      %p320 = pneg %p101
      %p321 = pneg %p125
      %p322 = pneg %p122
      %p323 = pneg %p146
      %p324 = pneg %p143
      %p325 = pneg %p167
      %p326 = pneg %p164
      %p327 = scmp.lt.s32.totalorder %s20, 1
      %s328 = scalar_select %p327, %s20, 1
      %s329 = scalar_lea.vmem %s7, %s328
      %p330 = pneg %p193
      %p331 = pneg %p190
      %p332 = scmp.lt.s32.totalorder %s20, 1
      %s333 = scalar_select %p332, %s20, 1
      %s334 = smul.addr %s333, 8
      %s335 = scalar_lea.vmem %s8, %s334
      %p336 = pneg %p219
      %p337 = pneg %p216
      %p338 = pneg %p245
      %p339 = pneg %p242
      %p340 = scmp.lt.s32.totalorder %s20, 1
      %s341 = scalar_select %p340, %s20, 1
      %s342 = smul.addr %s341, 8
      %s343 = scalar_lea.vmem %s9, %s342
      %p344 = scmp.lt.s32.totalorder %s20, 1
      %s345 = scalar_select %p344, %s20, 1
      %s346 = smul.addr %s345, 8
      %s347 = scalar_lea.vmem %s0, %s346
      %p348 = scmp.lt.s32.totalorder %s20, 1
      %s349 = scalar_select %p348, %s20, 1
      %s350 = scalar_lea.vmem %s7, %s349
      %p351 = scmp.lt.s32.totalorder %s20, 1
      %s352 = scalar_select %p351, %s20, 1
      %s353 = smul.addr %s352, 8
      %s354 = scalar_lea.vmem %s8, %s353
      %p355 = scmp.lt.s32.totalorder %s20, 1
      %s356 = scalar_select %p355, %s20, 1
      %s357 = smul.addr %s356, 8
      %s358 = scalar_lea.vmem %s9, %s357
      %v359 = vld [vmem:[%s347] sm:$0xff]
      %v360 = vld [vmem:[%s1] sm:$0xff]
      %v361 = vld [vmem:[%s1 + $0x8] sm:$0xff]
      %v362 = vld [vmem:[%s1 + $0x10] sm:$0xff]
      %v363 = vld [vmem:[%s1 + $0x18] sm:$0xff]
      %v364 = vld [vmem:[%s2] sm:$0x1]
      %v366 = vlaneseq
      %v367 = vshrl.u32 %v366, 7
      %v368 = vsub.s32 0, %v367
      %v369 = vrot.slane %v364, %v368
      %vm371 = vcmask 261120
      %v373 = vsel %vm371, %v359, 0
      %375 = vmatprep.subr.mxu0 0.0
      %376 = vmatpush1.msra.mxu0 0.0
      %377 = vmatprep.subr.mxu0 0.0
      %378 = vmatpush1.msra.mxu0 0.0
      %379 = vmatprep.subr.mxu0 0.0
      %380 = vmatpush1.msra.mxu0 0.0
      %381 = vmatprep.subr.mxu0 0.0
      %382 = vmatpush1.msra.mxu0 0.0
      %383 = vmatprep.subr.mxu0 0.0
      %384 = vmatpush1.msra.mxu0 0.0
      %385 = vmatprep.subr.mxu0 0.0
      %386 = vmatpush1.msra.mxu0 0.0
      %387 = vmatprep.subr.mxu0 0.0
      %388 = vmatpush1.msra.mxu0 0.0
      %389 = vmatprep.subr.mxu0 0.0
      %390 = vmatpush1.msra.mxu0 0.0
      %391 = vmatprep.subr.mxu0 0.0
      %392 = vmatpush1.msra.mxu0 0.0
      %393 = vmatprep.subr.mxu0 0.0
      %394 = vmatpush1.msra.mxu0 0.0
      %395 = vmatprep.subr.mxu0 0.0
      %396 = vmatpush1.msra.mxu0 0.0
      %397 = vmatprep.subr.mxu0 0.0
      %398 = vmatpush1.msra.mxu0 0.0
      %399 = vmatprep.subr.mxu0 0.0
      %400 = vmatpush1.msra.mxu0 %v363
      %401 = vmatprep.subr.mxu0 0.0
      %402 = vmatpush1.msra.mxu0 %v362
      %403 = vmatprep.subr.mxu0 0.0
      %404 = vmatpush1.msra.mxu0 %v361
      %405 = vmatprep.subr.mxu0 0.0
      %406 = vmatpush1.msra.mxu0 %v360
      %407 = vmatprep.subr.mxu0 0.0
      %408 = vmatpush2.msra.mxu0 0.0
      %409 = vmatprep.subr.mxu0 0.0
      %410 = vmatpush2.msra.mxu0 0.0
      %411 = vmatprep.subr.mxu0 0.0
      %412 = vmatpush2.msra.mxu0 0.0
      %413 = vmatprep.subr.mxu0 0.0
      %414 = vmatpush2.msra.mxu0 0.0
      %415 = vmatprep.subr.mxu0 0.0
      %416 = vmatpush2.msra.mxu0 0.0
      %417 = vmatprep.subr.mxu0 0.0
      %418 = vmatpush2.msra.mxu0 0.0
      %419 = vmatprep.subr.mxu0 0.0
      %420 = vmatpush2.msra.mxu0 0.0
      %421 = vmatprep.subr.mxu0 0.0
      %422 = vmatpush2.msra.mxu0 0.0
      %423 = vmatprep.subr.mxu0 0.0
      %424 = vmatpush2.msra.mxu0 0.0
      %425 = vmatprep.subr.mxu0 0.0
      %426 = vmatpush2.msra.mxu0 0.0
      %427 = vmatprep.subr.mxu0 0.0
      %428 = vmatpush2.msra.mxu0 0.0
      %429 = vmatprep.subr.mxu0 0.0
      %430 = vmatpush2.msra.mxu0 0.0
      %431 = vmatprep.subr.mxu0 0.0
      %432 = vmatpush2.msra.mxu0 0.0
      %433 = vmatprep.subr.mxu0 0.0
      %434 = vmatpush2.msra.mxu0 0.0
      %435 = vmatprep.subr.mxu0 0.0
      %436 = vmatpush2.msra.mxu0 0.0
      %437 = vmatprep.subr.mxu0 0.0
      %438 = vmatpush2.msra.mxu0 0.0
      %439 = vmatprep.mubr.f32.mxu0 0.0
      %440 = vmatmul.mubr.f32.gmra.mxu0 %v373
      %v441 = vpop.f32.mrf.mxu0
      %v442 = vadd.f32 %v369, %v441
      %v443 = vpop.f32.mrf.mxu0
      %444 = vdwg.mxu0
      %v445 = vlaneseq
      %v446 = vshrl.u32 %v445, 7
      %v447 = vlaneseq
      %v448 = vand.u32 %v447, 127
      %vm449 = vcmp.gt.s32.totalorder %v448, %v446
      %v450 = vld [vmem:[%s350] sm:$0x1]
      %vm451 = vcmp.gt.f32.partialorder %v450, 0.5
      %v452 = vsel %vm451, 1, 0
      %v453 = vlaneseq
      %v454 = vshrl.u32 %v453, 7
      %v455 = vsub.s32 0, %v454
      %v456 = vrot.slane %v452, %v455
      %vm457 = vcmp.eq.s32.totalorder %v456, 1
      %vm458 = vmor %vm449, %vm457
      %v459 = vsel %vm458, -1e+09, 0.0
      %461 = vrot.lane.b32.xlu0 %v442, 96
      %v462 = vpop.permute.xlu0 %461
      %vm463 = vcmask 64512
      %v464 = vsel %vm463, %v442, 0
      %v466 = vsel %vm463, %v462, 0
      %468 = vmatprep.subr.mxu0 0.0
      %469 = vmatpush1.xpose.msra.mxu0 0.0
      %470 = vmatprep.subr.mxu0 0.0
      %471 = vmatpush1.xpose.msra.mxu0 0.0
      %472 = vmatprep.subr.mxu0 0.0
      %473 = vmatpush1.xpose.msra.mxu0 0.0
      %474 = vmatprep.subr.mxu0 0.0
      %475 = vmatpush1.xpose.msra.mxu0 0.0
      %476 = vmatprep.subr.mxu0 0.0
      %477 = vmatpush1.xpose.msra.mxu0 0.0
      %478 = vmatprep.subr.mxu0 0.0
      %479 = vmatpush1.xpose.msra.mxu0 0.0
      %480 = vmatprep.subr.mxu0 0.0
      %481 = vmatpush1.xpose.msra.mxu0 0.0
      %482 = vmatprep.subr.mxu0 0.0
      %483 = vmatpush1.xpose.msra.mxu0 0.0
      %484 = vmatprep.subr.mxu0 0.0
      %485 = vmatpush1.xpose.msra.mxu0 0.0
      %486 = vmatprep.subr.mxu0 0.0
      %487 = vmatpush1.xpose.msra.mxu0 0.0
      %488 = vmatprep.subr.mxu0 0.0
      %489 = vmatpush1.xpose.msra.mxu0 0.0
      %490 = vmatprep.subr.mxu0 0.0
      %491 = vmatpush1.xpose.msra.mxu0 0.0
      %492 = vmatprep.subr.mxu0 0.0
      %493 = vmatpush1.xpose.msra.mxu0 0.0
      %494 = vmatprep.subr.mxu0 0.0
      %495 = vmatpush1.xpose.msra.mxu0 0.0
      %496 = vmatprep.subr.mxu0 0.0
      %497 = vmatpush1.xpose.msra.mxu0 0.0
      %498 = vmatprep.subr.mxu0 0.0
      %499 = vmatpush1.xpose.msra.mxu0 %v466
      %500 = vmatprep.subr.mxu0 0.0
      %501 = vmatpush2.xpose.msra.mxu0 0.0
      %502 = vmatprep.subr.mxu0 0.0
      %503 = vmatpush2.xpose.msra.mxu0 0.0
      %504 = vmatprep.subr.mxu0 0.0
      %505 = vmatpush2.xpose.msra.mxu0 0.0
      %506 = vmatprep.subr.mxu0 0.0
      %507 = vmatpush2.xpose.msra.mxu0 0.0
      %508 = vmatprep.subr.mxu0 0.0
      %509 = vmatpush2.xpose.msra.mxu0 0.0
      %510 = vmatprep.subr.mxu0 0.0
      %511 = vmatpush2.xpose.msra.mxu0 0.0
      %512 = vmatprep.subr.mxu0 0.0
      %513 = vmatpush2.xpose.msra.mxu0 0.0
      %514 = vmatprep.subr.mxu0 0.0
      %515 = vmatpush2.xpose.msra.mxu0 0.0
      %516 = vmatprep.subr.mxu0 0.0
      %517 = vmatpush2.xpose.msra.mxu0 0.0
      %518 = vmatprep.subr.mxu0 0.0
      %519 = vmatpush2.xpose.msra.mxu0 0.0
      %520 = vmatprep.subr.mxu0 0.0
      %521 = vmatpush2.xpose.msra.mxu0 0.0
      %522 = vmatprep.subr.mxu0 0.0
      %523 = vmatpush2.xpose.msra.mxu0 0.0
      %524 = vmatprep.subr.mxu0 0.0
      %525 = vmatpush2.xpose.msra.mxu0 0.0
      %526 = vmatprep.subr.mxu0 0.0
      %527 = vmatpush2.xpose.msra.mxu0 0.0
      %528 = vmatprep.subr.mxu0 0.0
      %529 = vmatpush2.xpose.msra.mxu0 0.0
      %530 = vmatprep.subr.mxu0 0.0
      %531 = vmatpush2.xpose.msra.mxu0 0.0
      %532 = vmatprep.mubr.f32.mxu0 0.0
      %533 = vmatmul.mubr.f32.gmra.mxu0 %v464
      %v534 = vpop.f32.mrf.mxu0
      %v535 = vadd.f32 0.0, %v534
      %v536 = vpop.f32.mrf.mxu0
      %537 = vdwg.mxu0
      %v538 = vmul.f32 %v535, 0.35355338
      %v539 = vadd.f32 %v538, %v459
      %v540 = vsel %vm463, %v539, -inf
      %541 = vmax.xlane.f32.xlu0 %v540
      %v542 = vpop.xlane.xlu0 %541
      %v543 = vsub.f32 %v539, %v542
      %v544 = vmul.f32 %v543, 1.442695
      %v545 = vpow.pop %v544
      %v546 = vsel %vm463, %v545, 0.0
      %547 = vadd.xlane.f32.xlu0 %v546
      %v548 = vpop.xlane.xlu0 %547
      %v549 = vrcp.pop %v548
      %v550 = vmul.f32 %v545, %v549
      %551 = vrot.lane.b32.xlu0 %v442, 64
      %v552 = vpop.permute.xlu0 %551
      %v555 = vsel %vm463, %v550, 0
      %557 = vmatprep.subr.mxu0 0.0
      %558 = vmatpush1.msra.mxu0 0.0
      %559 = vmatprep.subr.mxu0 0.0
      %560 = vmatpush1.msra.mxu0 0.0
      %561 = vmatprep.subr.mxu0 0.0
      %562 = vmatpush1.msra.mxu0 0.0
      %563 = vmatprep.subr.mxu0 0.0
      %564 = vmatpush1.msra.mxu0 0.0
      %565 = vmatprep.subr.mxu0 0.0
      %566 = vmatpush1.msra.mxu0 0.0
      %567 = vmatprep.subr.mxu0 0.0
      %568 = vmatpush1.msra.mxu0 0.0
      %569 = vmatprep.subr.mxu0 0.0
      %570 = vmatpush1.msra.mxu0 0.0
      %571 = vmatprep.subr.mxu0 0.0
      %572 = vmatpush1.msra.mxu0 0.0
      %573 = vmatprep.subr.mxu0 0.0
      %574 = vmatpush1.msra.mxu0 0.0
      %575 = vmatprep.subr.mxu0 0.0
      %576 = vmatpush1.msra.mxu0 0.0
      %577 = vmatprep.subr.mxu0 0.0
      %578 = vmatpush1.msra.mxu0 0.0
      %579 = vmatprep.subr.mxu0 0.0
      %580 = vmatpush1.msra.mxu0 0.0
      %581 = vmatprep.subr.mxu0 0.0
      %582 = vmatpush1.msra.mxu0 0.0
      %583 = vmatprep.subr.mxu0 0.0
      %584 = vmatpush1.msra.mxu0 0.0
      %585 = vmatprep.subr.mxu0 0.0
      %586 = vmatpush1.msra.mxu0 0.0
      %587 = vmatprep.subr.mxu0 0.0
      %588 = vmatpush1.msra.mxu0 %v552
      %589 = vmatprep.subr.mxu0 0.0
      %590 = vmatpush2.msra.mxu0 0.0
      %591 = vmatprep.subr.mxu0 0.0
      %592 = vmatpush2.msra.mxu0 0.0
      %593 = vmatprep.subr.mxu0 0.0
      %594 = vmatpush2.msra.mxu0 0.0
      %595 = vmatprep.subr.mxu0 0.0
      %596 = vmatpush2.msra.mxu0 0.0
      %597 = vmatprep.subr.mxu0 0.0
      %598 = vmatpush2.msra.mxu0 0.0
      %599 = vmatprep.subr.mxu0 0.0
      %600 = vmatpush2.msra.mxu0 0.0
      %601 = vmatprep.subr.mxu0 0.0
      %602 = vmatpush2.msra.mxu0 0.0
      %603 = vmatprep.subr.mxu0 0.0
      %604 = vmatpush2.msra.mxu0 0.0
      %605 = vmatprep.subr.mxu0 0.0
      %606 = vmatpush2.msra.mxu0 0.0
      %607 = vmatprep.subr.mxu0 0.0
      %608 = vmatpush2.msra.mxu0 0.0
      %609 = vmatprep.subr.mxu0 0.0
      %610 = vmatpush2.msra.mxu0 0.0
      %611 = vmatprep.subr.mxu0 0.0
      %612 = vmatpush2.msra.mxu0 0.0
      %613 = vmatprep.subr.mxu0 0.0
      %614 = vmatpush2.msra.mxu0 0.0
      %615 = vmatprep.subr.mxu0 0.0
      %616 = vmatpush2.msra.mxu0 0.0
      %617 = vmatprep.subr.mxu0 0.0
      %618 = vmatpush2.msra.mxu0 0.0
      %619 = vmatprep.subr.mxu0 0.0
      %620 = vmatpush2.msra.mxu0 0.0
      %621 = vmatprep.mubr.f32.mxu0 0.0
      %622 = vmatmul.mubr.f32.gmra.mxu0 %v555
      %v623 = vpop.f32.mrf.mxu0
      %v624 = vadd.f32 0.0, %v623
      %v625 = vpop.f32.mrf.mxu0
      %626 = vdwg.mxu0
      %627 = vrot.lane.b32.xlu0 %v442, 120
      %v628 = vpop.permute.xlu0 %627
      %629 = vrot.lane.b32.xlu0 %v442, 88
      %v630 = vpop.permute.xlu0 %629
      %v631 = vsel %vm463, %v628, 0
      %v633 = vsel %vm463, %v630, 0
      %635 = vmatprep.subr.mxu0 0.0
      %636 = vmatpush1.xpose.msra.mxu0 0.0
      %637 = vmatprep.subr.mxu0 0.0
      %638 = vmatpush1.xpose.msra.mxu0 0.0
      %639 = vmatprep.subr.mxu0 0.0
      %640 = vmatpush1.xpose.msra.mxu0 0.0
      %641 = vmatprep.subr.mxu0 0.0
      %642 = vmatpush1.xpose.msra.mxu0 0.0
      %643 = vmatprep.subr.mxu0 0.0
      %644 = vmatpush1.xpose.msra.mxu0 0.0
      %645 = vmatprep.subr.mxu0 0.0
      %646 = vmatpush1.xpose.msra.mxu0 0.0
      %647 = vmatprep.subr.mxu0 0.0
      %648 = vmatpush1.xpose.msra.mxu0 0.0
      %649 = vmatprep.subr.mxu0 0.0
      %650 = vmatpush1.xpose.msra.mxu0 0.0
      %651 = vmatprep.subr.mxu0 0.0
      %652 = vmatpush1.xpose.msra.mxu0 0.0
      %653 = vmatprep.subr.mxu0 0.0
      %654 = vmatpush1.xpose.msra.mxu0 0.0
      %655 = vmatprep.subr.mxu0 0.0
      %656 = vmatpush1.xpose.msra.mxu0 0.0
      %657 = vmatprep.subr.mxu0 0.0
      %658 = vmatpush1.xpose.msra.mxu0 0.0
      %659 = vmatprep.subr.mxu0 0.0
      %660 = vmatpush1.xpose.msra.mxu0 0.0
      %661 = vmatprep.subr.mxu0 0.0
      %662 = vmatpush1.xpose.msra.mxu0 0.0
      %663 = vmatprep.subr.mxu0 0.0
      %664 = vmatpush1.xpose.msra.mxu0 0.0
      %665 = vmatprep.subr.mxu0 0.0
      %666 = vmatpush1.xpose.msra.mxu0 %v633
      %667 = vmatprep.subr.mxu0 0.0
      %668 = vmatpush2.xpose.msra.mxu0 0.0
      %669 = vmatprep.subr.mxu0 0.0
      %670 = vmatpush2.xpose.msra.mxu0 0.0
      %671 = vmatprep.subr.mxu0 0.0
      %672 = vmatpush2.xpose.msra.mxu0 0.0
      %673 = vmatprep.subr.mxu0 0.0
      %674 = vmatpush2.xpose.msra.mxu0 0.0
      %675 = vmatprep.subr.mxu0 0.0
      %676 = vmatpush2.xpose.msra.mxu0 0.0
      %677 = vmatprep.subr.mxu0 0.0
      %678 = vmatpush2.xpose.msra.mxu0 0.0
      %679 = vmatprep.subr.mxu0 0.0
      %680 = vmatpush2.xpose.msra.mxu0 0.0
      %681 = vmatprep.subr.mxu0 0.0
      %682 = vmatpush2.xpose.msra.mxu0 0.0
      %683 = vmatprep.subr.mxu0 0.0
      %684 = vmatpush2.xpose.msra.mxu0 0.0
      %685 = vmatprep.subr.mxu0 0.0
      %686 = vmatpush2.xpose.msra.mxu0 0.0
      %687 = vmatprep.subr.mxu0 0.0
      %688 = vmatpush2.xpose.msra.mxu0 0.0
      %689 = vmatprep.subr.mxu0 0.0
      %690 = vmatpush2.xpose.msra.mxu0 0.0
      %691 = vmatprep.subr.mxu0 0.0
      %692 = vmatpush2.xpose.msra.mxu0 0.0
      %693 = vmatprep.subr.mxu0 0.0
      %694 = vmatpush2.xpose.msra.mxu0 0.0
      %695 = vmatprep.subr.mxu0 0.0
      %696 = vmatpush2.xpose.msra.mxu0 0.0
      %697 = vmatprep.subr.mxu0 0.0
      %698 = vmatpush2.xpose.msra.mxu0 0.0
      %699 = vmatprep.mubr.f32.mxu0 0.0
      %700 = vmatmul.mubr.f32.gmra.mxu0 %v631
      %v701 = vpop.f32.mrf.mxu0
      %v702 = vadd.f32 0.0, %v701
      %v703 = vpop.f32.mrf.mxu0
      %704 = vdwg.mxu0
      %v705 = vmul.f32 %v702, 0.35355338
      %v706 = vadd.f32 %v705, %v459
      %v707 = vsel %vm463, %v706, -inf
      %708 = vmax.xlane.f32.xlu0 %v707
      %v709 = vpop.xlane.xlu0 %708
      %v710 = vsub.f32 %v706, %v709
      %v711 = vmul.f32 %v710, 1.442695
      %v712 = vpow.pop %v711
      %v713 = vsel %vm463, %v712, 0.0
      %714 = vadd.xlane.f32.xlu0 %v713
      %v715 = vpop.xlane.xlu0 %714
      %v716 = vrcp.pop %v715
      %v717 = vmul.f32 %v712, %v716
      %718 = vrot.lane.b32.xlu0 %v442, 56
      %v719 = vpop.permute.xlu0 %718
      %v722 = vsel %vm463, %v717, 0
      %724 = vmatprep.subr.mxu0 0.0
      %725 = vmatpush1.msra.mxu0 0.0
      %726 = vmatprep.subr.mxu0 0.0
      %727 = vmatpush1.msra.mxu0 0.0
      %728 = vmatprep.subr.mxu0 0.0
      %729 = vmatpush1.msra.mxu0 0.0
      %730 = vmatprep.subr.mxu0 0.0
      %731 = vmatpush1.msra.mxu0 0.0
      %732 = vmatprep.subr.mxu0 0.0
      %733 = vmatpush1.msra.mxu0 0.0
      %734 = vmatprep.subr.mxu0 0.0
      %735 = vmatpush1.msra.mxu0 0.0
      %736 = vmatprep.subr.mxu0 0.0
      %737 = vmatpush1.msra.mxu0 0.0
      %738 = vmatprep.subr.mxu0 0.0
      %739 = vmatpush1.msra.mxu0 0.0
      %740 = vmatprep.subr.mxu0 0.0
      %741 = vmatpush1.msra.mxu0 0.0
      %742 = vmatprep.subr.mxu0 0.0
      %743 = vmatpush1.msra.mxu0 0.0
      %744 = vmatprep.subr.mxu0 0.0
      %745 = vmatpush1.msra.mxu0 0.0
      %746 = vmatprep.subr.mxu0 0.0
      %747 = vmatpush1.msra.mxu0 0.0
      %748 = vmatprep.subr.mxu0 0.0
      %749 = vmatpush1.msra.mxu0 0.0
      %750 = vmatprep.subr.mxu0 0.0
      %751 = vmatpush1.msra.mxu0 0.0
      %752 = vmatprep.subr.mxu0 0.0
      %753 = vmatpush1.msra.mxu0 0.0
      %754 = vmatprep.subr.mxu0 0.0
      %755 = vmatpush1.msra.mxu0 %v719
      %756 = vmatprep.subr.mxu0 0.0
      %757 = vmatpush2.msra.mxu0 0.0
      %758 = vmatprep.subr.mxu0 0.0
      %759 = vmatpush2.msra.mxu0 0.0
      %760 = vmatprep.subr.mxu0 0.0
      %761 = vmatpush2.msra.mxu0 0.0
      %762 = vmatprep.subr.mxu0 0.0
      %763 = vmatpush2.msra.mxu0 0.0
      %764 = vmatprep.subr.mxu0 0.0
      %765 = vmatpush2.msra.mxu0 0.0
      %766 = vmatprep.subr.mxu0 0.0
      %767 = vmatpush2.msra.mxu0 0.0
      %768 = vmatprep.subr.mxu0 0.0
      %769 = vmatpush2.msra.mxu0 0.0
      %770 = vmatprep.subr.mxu0 0.0
      %771 = vmatpush2.msra.mxu0 0.0
      %772 = vmatprep.subr.mxu0 0.0
      %773 = vmatpush2.msra.mxu0 0.0
      %774 = vmatprep.subr.mxu0 0.0
      %775 = vmatpush2.msra.mxu0 0.0
      %776 = vmatprep.subr.mxu0 0.0
      %777 = vmatpush2.msra.mxu0 0.0
      %778 = vmatprep.subr.mxu0 0.0
      %779 = vmatpush2.msra.mxu0 0.0
      %780 = vmatprep.subr.mxu0 0.0
      %781 = vmatpush2.msra.mxu0 0.0
      %782 = vmatprep.subr.mxu0 0.0
      %783 = vmatpush2.msra.mxu0 0.0
      %784 = vmatprep.subr.mxu0 0.0
      %785 = vmatpush2.msra.mxu0 0.0
      %786 = vmatprep.subr.mxu0 0.0
      %787 = vmatpush2.msra.mxu0 0.0
      %788 = vmatprep.mubr.f32.mxu0 0.0
      %789 = vmatmul.mubr.f32.gmra.mxu0 %v722
      %v790 = vpop.f32.mrf.mxu0
      %v791 = vadd.f32 0.0, %v790
      %v792 = vpop.f32.mrf.mxu0
      %793 = vdwg.mxu0
      %794 = vrot.lane.b32.xlu0 %v442, 112
      %v795 = vpop.permute.xlu0 %794
      %796 = vrot.lane.b32.xlu0 %v442, 80
      %v797 = vpop.permute.xlu0 %796
      %v798 = vsel %vm463, %v795, 0
      %v800 = vsel %vm463, %v797, 0
      %802 = vmatprep.subr.mxu0 0.0
      %803 = vmatpush1.xpose.msra.mxu0 0.0
      %804 = vmatprep.subr.mxu0 0.0
      %805 = vmatpush1.xpose.msra.mxu0 0.0
      %806 = vmatprep.subr.mxu0 0.0
      %807 = vmatpush1.xpose.msra.mxu0 0.0
      %808 = vmatprep.subr.mxu0 0.0
      %809 = vmatpush1.xpose.msra.mxu0 0.0
      %810 = vmatprep.subr.mxu0 0.0
      %811 = vmatpush1.xpose.msra.mxu0 0.0
      %812 = vmatprep.subr.mxu0 0.0
      %813 = vmatpush1.xpose.msra.mxu0 0.0
      %814 = vmatprep.subr.mxu0 0.0
      %815 = vmatpush1.xpose.msra.mxu0 0.0
      %816 = vmatprep.subr.mxu0 0.0
      %817 = vmatpush1.xpose.msra.mxu0 0.0
      %818 = vmatprep.subr.mxu0 0.0
      %819 = vmatpush1.xpose.msra.mxu0 0.0
      %820 = vmatprep.subr.mxu0 0.0
      %821 = vmatpush1.xpose.msra.mxu0 0.0
      %822 = vmatprep.subr.mxu0 0.0
      %823 = vmatpush1.xpose.msra.mxu0 0.0
      %824 = vmatprep.subr.mxu0 0.0
      %825 = vmatpush1.xpose.msra.mxu0 0.0
      %826 = vmatprep.subr.mxu0 0.0
      %827 = vmatpush1.xpose.msra.mxu0 0.0
      %828 = vmatprep.subr.mxu0 0.0
      %829 = vmatpush1.xpose.msra.mxu0 0.0
      %830 = vmatprep.subr.mxu0 0.0
      %831 = vmatpush1.xpose.msra.mxu0 0.0
      %832 = vmatprep.subr.mxu0 0.0
      %833 = vmatpush1.xpose.msra.mxu0 %v800
      %834 = vmatprep.subr.mxu0 0.0
      %835 = vmatpush2.xpose.msra.mxu0 0.0
      %836 = vmatprep.subr.mxu0 0.0
      %837 = vmatpush2.xpose.msra.mxu0 0.0
      %838 = vmatprep.subr.mxu0 0.0
      %839 = vmatpush2.xpose.msra.mxu0 0.0
      %840 = vmatprep.subr.mxu0 0.0
      %841 = vmatpush2.xpose.msra.mxu0 0.0
      %842 = vmatprep.subr.mxu0 0.0
      %843 = vmatpush2.xpose.msra.mxu0 0.0
      %844 = vmatprep.subr.mxu0 0.0
      %845 = vmatpush2.xpose.msra.mxu0 0.0
      %846 = vmatprep.subr.mxu0 0.0
      %847 = vmatpush2.xpose.msra.mxu0 0.0
      %848 = vmatprep.subr.mxu0 0.0
      %849 = vmatpush2.xpose.msra.mxu0 0.0
      %850 = vmatprep.subr.mxu0 0.0
      %851 = vmatpush2.xpose.msra.mxu0 0.0
      %852 = vmatprep.subr.mxu0 0.0
      %853 = vmatpush2.xpose.msra.mxu0 0.0
      %854 = vmatprep.subr.mxu0 0.0
      %855 = vmatpush2.xpose.msra.mxu0 0.0
      %856 = vmatprep.subr.mxu0 0.0
      %857 = vmatpush2.xpose.msra.mxu0 0.0
      %858 = vmatprep.subr.mxu0 0.0
      %859 = vmatpush2.xpose.msra.mxu0 0.0
      %860 = vmatprep.subr.mxu0 0.0
      %861 = vmatpush2.xpose.msra.mxu0 0.0
      %862 = vmatprep.subr.mxu0 0.0
      %863 = vmatpush2.xpose.msra.mxu0 0.0
      %864 = vmatprep.subr.mxu0 0.0
      %865 = vmatpush2.xpose.msra.mxu0 0.0
      %866 = vmatprep.mubr.f32.mxu0 0.0
      %867 = vmatmul.mubr.f32.gmra.mxu0 %v798
      %v868 = vpop.f32.mrf.mxu0
      %v869 = vadd.f32 0.0, %v868
      %v870 = vpop.f32.mrf.mxu0
      %871 = vdwg.mxu0
      %v872 = vmul.f32 %v869, 0.35355338
      %v873 = vadd.f32 %v872, %v459
      %v874 = vsel %vm463, %v873, -inf
      %875 = vmax.xlane.f32.xlu0 %v874
      %v876 = vpop.xlane.xlu0 %875
      %v877 = vsub.f32 %v873, %v876
      %v878 = vmul.f32 %v877, 1.442695
      %v879 = vpow.pop %v878
      %v880 = vsel %vm463, %v879, 0.0
      %881 = vadd.xlane.f32.xlu0 %v880
      %v882 = vpop.xlane.xlu0 %881
      %v883 = vrcp.pop %v882
      %v884 = vmul.f32 %v879, %v883
      %885 = vrot.lane.b32.xlu0 %v442, 48
      %v886 = vpop.permute.xlu0 %885
      %v889 = vsel %vm463, %v884, 0
      %891 = vmatprep.subr.mxu0 0.0
      %892 = vmatpush1.msra.mxu0 0.0
      %893 = vmatprep.subr.mxu0 0.0
      %894 = vmatpush1.msra.mxu0 0.0
      %895 = vmatprep.subr.mxu0 0.0
      %896 = vmatpush1.msra.mxu0 0.0
      %897 = vmatprep.subr.mxu0 0.0
      %898 = vmatpush1.msra.mxu0 0.0
      %899 = vmatprep.subr.mxu0 0.0
      %900 = vmatpush1.msra.mxu0 0.0
      %901 = vmatprep.subr.mxu0 0.0
      %902 = vmatpush1.msra.mxu0 0.0
      %903 = vmatprep.subr.mxu0 0.0
      %904 = vmatpush1.msra.mxu0 0.0
      %905 = vmatprep.subr.mxu0 0.0
      %906 = vmatpush1.msra.mxu0 0.0
      %907 = vmatprep.subr.mxu0 0.0
      %908 = vmatpush1.msra.mxu0 0.0
      %909 = vmatprep.subr.mxu0 0.0
      %910 = vmatpush1.msra.mxu0 0.0
      %911 = vmatprep.subr.mxu0 0.0
      %912 = vmatpush1.msra.mxu0 0.0
      %913 = vmatprep.subr.mxu0 0.0
      %914 = vmatpush1.msra.mxu0 0.0
      %915 = vmatprep.subr.mxu0 0.0
      %916 = vmatpush1.msra.mxu0 0.0
      %917 = vmatprep.subr.mxu0 0.0
      %918 = vmatpush1.msra.mxu0 0.0
      %919 = vmatprep.subr.mxu0 0.0
      %920 = vmatpush1.msra.mxu0 0.0
      %921 = vmatprep.subr.mxu0 0.0
      %922 = vmatpush1.msra.mxu0 %v886
      %923 = vmatprep.subr.mxu0 0.0
      %924 = vmatpush2.msra.mxu0 0.0
      %925 = vmatprep.subr.mxu0 0.0
      %926 = vmatpush2.msra.mxu0 0.0
      %927 = vmatprep.subr.mxu0 0.0
      %928 = vmatpush2.msra.mxu0 0.0
      %929 = vmatprep.subr.mxu0 0.0
      %930 = vmatpush2.msra.mxu0 0.0
      %931 = vmatprep.subr.mxu0 0.0
      %932 = vmatpush2.msra.mxu0 0.0
      %933 = vmatprep.subr.mxu0 0.0
      %934 = vmatpush2.msra.mxu0 0.0
      %935 = vmatprep.subr.mxu0 0.0
      %936 = vmatpush2.msra.mxu0 0.0
      %937 = vmatprep.subr.mxu0 0.0
      %938 = vmatpush2.msra.mxu0 0.0
      %939 = vmatprep.subr.mxu0 0.0
      %940 = vmatpush2.msra.mxu0 0.0
      %941 = vmatprep.subr.mxu0 0.0
      %942 = vmatpush2.msra.mxu0 0.0
      %943 = vmatprep.subr.mxu0 0.0
      %944 = vmatpush2.msra.mxu0 0.0
      %945 = vmatprep.subr.mxu0 0.0
      %946 = vmatpush2.msra.mxu0 0.0
      %947 = vmatprep.subr.mxu0 0.0
      %948 = vmatpush2.msra.mxu0 0.0
      %949 = vmatprep.subr.mxu0 0.0
      %950 = vmatpush2.msra.mxu0 0.0
      %951 = vmatprep.subr.mxu0 0.0
      %952 = vmatpush2.msra.mxu0 0.0
      %953 = vmatprep.subr.mxu0 0.0
      %954 = vmatpush2.msra.mxu0 0.0
      %955 = vmatprep.mubr.f32.mxu0 0.0
      %956 = vmatmul.mubr.f32.gmra.mxu0 %v889
      %v957 = vpop.f32.mrf.mxu0
      %v958 = vadd.f32 0.0, %v957
      %v959 = vpop.f32.mrf.mxu0
      %960 = vdwg.mxu0
      %961 = vrot.lane.b32.xlu0 %v442, 104
      %v962 = vpop.permute.xlu0 %961
      %963 = vrot.lane.b32.xlu0 %v442, 72
      %v964 = vpop.permute.xlu0 %963
      %v965 = vsel %vm463, %v962, 0
      %v967 = vsel %vm463, %v964, 0
      %969 = vmatprep.subr.mxu0 0.0
      %970 = vmatpush1.xpose.msra.mxu0 0.0
      %971 = vmatprep.subr.mxu0 0.0
      %972 = vmatpush1.xpose.msra.mxu0 0.0
      %973 = vmatprep.subr.mxu0 0.0
      %974 = vmatpush1.xpose.msra.mxu0 0.0
      %975 = vmatprep.subr.mxu0 0.0
      %976 = vmatpush1.xpose.msra.mxu0 0.0
      %977 = vmatprep.subr.mxu0 0.0
      %978 = vmatpush1.xpose.msra.mxu0 0.0
      %979 = vmatprep.subr.mxu0 0.0
      %980 = vmatpush1.xpose.msra.mxu0 0.0
      %981 = vmatprep.subr.mxu0 0.0
      %982 = vmatpush1.xpose.msra.mxu0 0.0
      %983 = vmatprep.subr.mxu0 0.0
      %984 = vmatpush1.xpose.msra.mxu0 0.0
      %985 = vmatprep.subr.mxu0 0.0
      %986 = vmatpush1.xpose.msra.mxu0 0.0
      %987 = vmatprep.subr.mxu0 0.0
      %988 = vmatpush1.xpose.msra.mxu0 0.0
      %989 = vmatprep.subr.mxu0 0.0
      %990 = vmatpush1.xpose.msra.mxu0 0.0
      %991 = vmatprep.subr.mxu0 0.0
      %992 = vmatpush1.xpose.msra.mxu0 0.0
      %993 = vmatprep.subr.mxu0 0.0
      %994 = vmatpush1.xpose.msra.mxu0 0.0
      %995 = vmatprep.subr.mxu0 0.0
      %996 = vmatpush1.xpose.msra.mxu0 0.0
      %997 = vmatprep.subr.mxu0 0.0
      %998 = vmatpush1.xpose.msra.mxu0 0.0
      %999 = vmatprep.subr.mxu0 0.0
      %1000 = vmatpush1.xpose.msra.mxu0 %v967
      %1001 = vmatprep.subr.mxu0 0.0
      %1002 = vmatpush2.xpose.msra.mxu0 0.0
      %1003 = vmatprep.subr.mxu0 0.0
      %1004 = vmatpush2.xpose.msra.mxu0 0.0
      %1005 = vmatprep.subr.mxu0 0.0
      %1006 = vmatpush2.xpose.msra.mxu0 0.0
      %1007 = vmatprep.subr.mxu0 0.0
      %1008 = vmatpush2.xpose.msra.mxu0 0.0
      %1009 = vmatprep.subr.mxu0 0.0
      %1010 = vmatpush2.xpose.msra.mxu0 0.0
      %1011 = vmatprep.subr.mxu0 0.0
      %1012 = vmatpush2.xpose.msra.mxu0 0.0
      %1013 = vmatprep.subr.mxu0 0.0
      %1014 = vmatpush2.xpose.msra.mxu0 0.0
      %1015 = vmatprep.subr.mxu0 0.0
      %1016 = vmatpush2.xpose.msra.mxu0 0.0
      %1017 = vmatprep.subr.mxu0 0.0
      %1018 = vmatpush2.xpose.msra.mxu0 0.0
      %1019 = vmatprep.subr.mxu0 0.0
      %1020 = vmatpush2.xpose.msra.mxu0 0.0
      %1021 = vmatprep.subr.mxu0 0.0
      %1022 = vmatpush2.xpose.msra.mxu0 0.0
      %1023 = vmatprep.subr.mxu0 0.0
      %1024 = vmatpush2.xpose.msra.mxu0 0.0
      %1025 = vmatprep.subr.mxu0 0.0
      %1026 = vmatpush2.xpose.msra.mxu0 0.0
      %1027 = vmatprep.subr.mxu0 0.0
      %1028 = vmatpush2.xpose.msra.mxu0 0.0
      %1029 = vmatprep.subr.mxu0 0.0
      %1030 = vmatpush2.xpose.msra.mxu0 0.0
      %1031 = vmatprep.subr.mxu0 0.0
      %1032 = vmatpush2.xpose.msra.mxu0 0.0
      %1033 = vmatprep.mubr.f32.mxu0 0.0
      %1034 = vmatmul.mubr.f32.gmra.mxu0 %v965
      %v1035 = vpop.f32.mrf.mxu0
      %v1036 = vadd.f32 0.0, %v1035
      %v1037 = vpop.f32.mrf.mxu0
      %1038 = vdwg.mxu0
      %v1039 = vmul.f32 %v1036, 0.35355338
      %v1040 = vadd.f32 %v1039, %v459
      %v1041 = vsel %vm463, %v1040, -inf
      %1042 = vmax.xlane.f32.xlu0 %v1041
      %v1043 = vpop.xlane.xlu0 %1042
      %v1044 = vsub.f32 %v1040, %v1043
      %v1045 = vmul.f32 %v1044, 1.442695
      %v1046 = vpow.pop %v1045
      %v1047 = vsel %vm463, %v1046, 0.0
      %1048 = vadd.xlane.f32.xlu0 %v1047
      %v1049 = vpop.xlane.xlu0 %1048
      %v1050 = vrcp.pop %v1049
      %v1051 = vmul.f32 %v1046, %v1050
      %1052 = vrot.lane.b32.xlu0 %v442, 40
      %v1053 = vpop.permute.xlu0 %1052
      %v1056 = vsel %vm463, %v1051, 0
      %1058 = vmatprep.subr.mxu0 0.0
      %1059 = vmatpush1.msra.mxu0 0.0
      %1060 = vmatprep.subr.mxu0 0.0
      %1061 = vmatpush1.msra.mxu0 0.0
      %1062 = vmatprep.subr.mxu0 0.0
      %1063 = vmatpush1.msra.mxu0 0.0
      %1064 = vmatprep.subr.mxu0 0.0
      %1065 = vmatpush1.msra.mxu0 0.0
      %1066 = vmatprep.subr.mxu0 0.0
      %1067 = vmatpush1.msra.mxu0 0.0
      %1068 = vmatprep.subr.mxu0 0.0
      %1069 = vmatpush1.msra.mxu0 0.0
      %1070 = vmatprep.subr.mxu0 0.0
      %1071 = vmatpush1.msra.mxu0 0.0
      %1072 = vmatprep.subr.mxu0 0.0
      %1073 = vmatpush1.msra.mxu0 0.0
      %1074 = vmatprep.subr.mxu0 0.0
      %1075 = vmatpush1.msra.mxu0 0.0
      %1076 = vmatprep.subr.mxu0 0.0
      %1077 = vmatpush1.msra.mxu0 0.0
      %1078 = vmatprep.subr.mxu0 0.0
      %1079 = vmatpush1.msra.mxu0 0.0
      %1080 = vmatprep.subr.mxu0 0.0
      %1081 = vmatpush1.msra.mxu0 0.0
      %1082 = vmatprep.subr.mxu0 0.0
      %1083 = vmatpush1.msra.mxu0 0.0
      %1084 = vmatprep.subr.mxu0 0.0
      %1085 = vmatpush1.msra.mxu0 0.0
      %1086 = vmatprep.subr.mxu0 0.0
      %1087 = vmatpush1.msra.mxu0 0.0
      %1088 = vmatprep.subr.mxu0 0.0
      %1089 = vmatpush1.msra.mxu0 %v1053
      %1090 = vmatprep.subr.mxu0 0.0
      %1091 = vmatpush2.msra.mxu0 0.0
      %1092 = vmatprep.subr.mxu0 0.0
      %1093 = vmatpush2.msra.mxu0 0.0
      %1094 = vmatprep.subr.mxu0 0.0
      %1095 = vmatpush2.msra.mxu0 0.0
      %1096 = vmatprep.subr.mxu0 0.0
      %1097 = vmatpush2.msra.mxu0 0.0
      %1098 = vmatprep.subr.mxu0 0.0
      %1099 = vmatpush2.msra.mxu0 0.0
      %1100 = vmatprep.subr.mxu0 0.0
      %1101 = vmatpush2.msra.mxu0 0.0
      %1102 = vmatprep.subr.mxu0 0.0
      %1103 = vmatpush2.msra.mxu0 0.0
      %1104 = vmatprep.subr.mxu0 0.0
      %1105 = vmatpush2.msra.mxu0 0.0
      %1106 = vmatprep.subr.mxu0 0.0
      %1107 = vmatpush2.msra.mxu0 0.0
      %1108 = vmatprep.subr.mxu0 0.0
      %1109 = vmatpush2.msra.mxu0 0.0
      %1110 = vmatprep.subr.mxu0 0.0
      %1111 = vmatpush2.msra.mxu0 0.0
      %1112 = vmatprep.subr.mxu0 0.0
      %1113 = vmatpush2.msra.mxu0 0.0
      %1114 = vmatprep.subr.mxu0 0.0
      %1115 = vmatpush2.msra.mxu0 0.0
      %1116 = vmatprep.subr.mxu0 0.0
      %1117 = vmatpush2.msra.mxu0 0.0
      %1118 = vmatprep.subr.mxu0 0.0
      %1119 = vmatpush2.msra.mxu0 0.0
      %1120 = vmatprep.subr.mxu0 0.0
      %1121 = vmatpush2.msra.mxu0 0.0
      %1122 = vmatprep.mubr.f32.mxu0 0.0
      %1123 = vmatmul.mubr.f32.gmra.mxu0 %v1056
      %v1124 = vpop.f32.mrf.mxu0
      %v1125 = vadd.f32 0.0, %v1124
      %v1126 = vpop.f32.mrf.mxu0
      %1127 = vdwg.mxu0
      %1129 = vrot.lane.b32.xlu0 %v791, 8
      %v1130 = vpop.permute.xlu0 %1129
      %1133 = vrot.lane.b32.xlu0 %v958, 16
      %v1134 = vpop.permute.xlu0 %1133
      %1137 = vrot.lane.b32.xlu0 %v1125, 24
      %v1138 = vpop.permute.xlu0 %1137
      %v1140 = vsel %vm463, %v624, %v1130
      %vm1141 = vcmask 130048
      %v1142 = vsel %vm1141, %v1140, %v1134
      %vm1143 = vcmask 195584
      %v1144 = vsel %vm1143, %v1142, %v1138
      %v1145 = vld [vmem:[%s3] sm:$0xff]
      %v1146 = vld [vmem:[%s3 + $0x8] sm:$0xff]
      %v1147 = vld [vmem:[%s3 + $0x10] sm:$0xff]
      %v1148 = vld [vmem:[%s3 + $0x18] sm:$0xff]
      %v1149 = vld [vmem:[%s4] sm:$0x1]
      %v1151 = vlaneseq
      %v1152 = vshrl.u32 %v1151, 7
      %v1153 = vsub.s32 0, %v1152
      %v1154 = vrot.slane %v1149, %v1153
      %v1157 = vsel %vm371, %v1144, 0
      %1159 = vmatprep.subr.mxu0 0.0
      %1160 = vmatpush1.msra.mxu0 0.0
      %1161 = vmatprep.subr.mxu0 0.0
      %1162 = vmatpush1.msra.mxu0 0.0
      %1163 = vmatprep.subr.mxu0 0.0
      %1164 = vmatpush1.msra.mxu0 0.0
      %1165 = vmatprep.subr.mxu0 0.0
      %1166 = vmatpush1.msra.mxu0 0.0
      %1167 = vmatprep.subr.mxu0 0.0
      %1168 = vmatpush1.msra.mxu0 0.0
      %1169 = vmatprep.subr.mxu0 0.0
      %1170 = vmatpush1.msra.mxu0 0.0
      %1171 = vmatprep.subr.mxu0 0.0
      %1172 = vmatpush1.msra.mxu0 0.0
      %1173 = vmatprep.subr.mxu0 0.0
      %1174 = vmatpush1.msra.mxu0 0.0
      %1175 = vmatprep.subr.mxu0 0.0
      %1176 = vmatpush1.msra.mxu0 0.0
      %1177 = vmatprep.subr.mxu0 0.0
      %1178 = vmatpush1.msra.mxu0 0.0
      %1179 = vmatprep.subr.mxu0 0.0
      %1180 = vmatpush1.msra.mxu0 0.0
      %1181 = vmatprep.subr.mxu0 0.0
      %1182 = vmatpush1.msra.mxu0 0.0
      %1183 = vmatprep.subr.mxu0 0.0
      %1184 = vmatpush1.msra.mxu0 %v1148
      %1185 = vmatprep.subr.mxu0 0.0
      %1186 = vmatpush1.msra.mxu0 %v1147
      %1187 = vmatprep.subr.mxu0 0.0
      %1188 = vmatpush1.msra.mxu0 %v1146
      %1189 = vmatprep.subr.mxu0 0.0
      %1190 = vmatpush1.msra.mxu0 %v1145
      %1191 = vmatprep.subr.mxu0 0.0
      %1192 = vmatpush2.msra.mxu0 0.0
      %1193 = vmatprep.subr.mxu0 0.0
      %1194 = vmatpush2.msra.mxu0 0.0
      %1195 = vmatprep.subr.mxu0 0.0
      %1196 = vmatpush2.msra.mxu0 0.0
      %1197 = vmatprep.subr.mxu0 0.0
      %1198 = vmatpush2.msra.mxu0 0.0
      %1199 = vmatprep.subr.mxu0 0.0
      %1200 = vmatpush2.msra.mxu0 0.0
      %1201 = vmatprep.subr.mxu0 0.0
      %1202 = vmatpush2.msra.mxu0 0.0
      %1203 = vmatprep.subr.mxu0 0.0
      %1204 = vmatpush2.msra.mxu0 0.0
      %1205 = vmatprep.subr.mxu0 0.0
      %1206 = vmatpush2.msra.mxu0 0.0
      %1207 = vmatprep.subr.mxu0 0.0
      %1208 = vmatpush2.msra.mxu0 0.0
      %1209 = vmatprep.subr.mxu0 0.0
      %1210 = vmatpush2.msra.mxu0 0.0
      %1211 = vmatprep.subr.mxu0 0.0
      %1212 = vmatpush2.msra.mxu0 0.0
      %1213 = vmatprep.subr.mxu0 0.0
      %1214 = vmatpush2.msra.mxu0 0.0
      %1215 = vmatprep.subr.mxu0 0.0
      %1216 = vmatpush2.msra.mxu0 0.0
      %1217 = vmatprep.subr.mxu0 0.0
      %1218 = vmatpush2.msra.mxu0 0.0
      %1219 = vmatprep.subr.mxu0 0.0
      %1220 = vmatpush2.msra.mxu0 0.0
      %1221 = vmatprep.subr.mxu0 0.0
      %1222 = vmatpush2.msra.mxu0 0.0
      %1223 = vmatprep.mubr.f32.mxu0 0.0
      %1224 = vmatmul.mubr.f32.gmra.mxu0 %v1157
      %v1225 = vpop.f32.mrf.mxu0
      %v1226 = vadd.f32 %v1154, %v1225
      %v1227 = vpop.f32.mrf.mxu0
      %1228 = vdwg.mxu0
      %v1229 = vadd.f32 %v1226, %v359
      %v1230 = vld [vmem:[%s5] sm:$0x1]
      %v1231 = vld [vmem:[%s6] sm:$0x1]
      %v1232 = vsel %vm371, %v1229, 0.0
      %1233 = vadd.xlane.f32.xlu0 %v1232
      %v1234 = vpop.xlane.xlu0 %1233
      %v1235 = vrcp.pop 32.0
      %v1236 = vmul.f32 %v1234, %v1235
      %v1237 = vsub.f32 %v1229, %v1236
      %v1238 = vmul.f32 %v1237, %v1237
      %v1239 = vsel %vm371, %v1238, 0.0
      %1240 = vadd.xlane.f32.xlu0 %v1239
      %v1241 = vpop.xlane.xlu0 %1240
      %v1242 = vmul.f32 %v1241, %v1235
      %v1243 = vadd.f32 %v1242, 1e-05
      %v1244 = vrsqrt.pop %v1243
      %v1245 = vmul.f32 %v1237, %v1244
      %v1247 = vlaneseq
      %v1248 = vshrl.u32 %v1247, 7
      %v1249 = vsub.s32 0, %v1248
      %v1250 = vrot.slane %v1230, %v1249
      %v1252 = vmul.f32 %v1245, %v1250
      %v1254 = vlaneseq
      %v1255 = vshrl.u32 %v1254, 7
      %v1256 = vsub.s32 0, %v1255
      %v1257 = vrot.slane %v1231, %v1256
      %v1259 = vadd.f32 %v1252, %v1257
      %v1260 = vld [vmem:[%s354] sm:$0xff]
      %1262 = vset.pattern.permute.xlu0 0
      %1263 = vperm.xlu0 %1262, %v1260
      %v1264 = vpop.permute.xlu0 %1263
      %v1266 = vmul.f32 %v1259, %v1264
      %1267 = vst.msk [vmem:[%s358] sm:$0xff] %vm371, %v1266
      %p1268 = scmp.lt.s32.totalorder %s20, 1
      %s1269 = scalar_select %p1268, %s20, 1
      %s1270 = smul.addr %s1269, 8
      %s1271 = scalar_lea.vmem %s9, %s1270
      // Predicated region
      $region57: #{decoder_forward.6} parent=55 // pred_check
        %p1272 = pneg %p242
      $region58: #{decoder_forward.6} parent=55 // pred_check_branch
        %1274 = sbr.rel (%p1272) target = $region60
      $region59: #{decoder_forward.6} parent=55 // pred_region
        _
      $region60: #{decoder_forward.6} parent=55 // pred_fallthru
        _
    $region56: #{decoder_forward.6} parent=5 // pred_fallthru
      _
    %p1275 = scmp.le.s32.totalorder 2, %s15
    // Predicated region
    $region61: #{decoder_forward.6} parent=5 // pred_check
      %p1276 = pneg %p1275
    $region62: #{decoder_forward.6} parent=5 // pred_check_branch
      %1278 = sbr.rel (%p1276) target = $region64
    $region63: #{decoder_forward.6} parent=5 // pred_region
      %s1279 = ssub.s32 %s15, 2
      // Predicated region
      $region65: #{decoder_forward.6} parent=63 // pred_check
        %p1280 = pneg %p248
      $region66: #{decoder_forward.6} parent=63 // pred_check_branch
        %1282 = sbr.rel (%p1280) target = $region68
      $region67: #{decoder_forward.6} parent=63 // pred_region
        %p1283 = scmp.lt.s32.totalorder %s21, 1
        %s1284 = scalar_select %p1283, %s21, 1
        %s1285 = smul.addr %s1284, 8
        %s1286 = scalar_lea.vmem %s9, %s1285
      $region68: #{decoder_forward.6} parent=63 // pred_fallthru
        _
    $region64: #{decoder_forward.6} parent=5 // pred_fallthru
      _
  $region6: #{decoder_forward.6} parent=0 // loop_footer
    %s19 = sadd.s32 1, %s15
  $region7: #{decoder_forward.6} parent=0 // loop_footer_branch
    %14 = sbr.rel target = $region3
  $region8: #{decoder_forward.6} parent=0 // loop_exit
    _

// kernel: decoder_forward.7
$region0: #{decoder_forward.7}
  #allocation0 [shape = 'u32[]', space=smem, size = 0x4, offset = 0x4, fixed_abs, tag = 'smem constant byte address 0x4 - core index']
  #allocation1 [shape = 'u32[144,128]{1,0:T(1,128)}', space=vmem, size = 0x12000, scoped, tag = 'internal scratch']
  %s0 = inlined_call_operand.vmem [shape: f32[2,8,32], index: 0, kind: input, shape index: {}]
  %s1 = inlined_call_operand.vmem [shape: f32[2,6,32], index: 1, kind: input, shape index: {}]
  %s2 = inlined_call_operand.vmem [shape: f32[32,32], index: 2, kind: input, shape index: {}]
  %s3 = inlined_call_operand.vmem [shape: f32[1,32], index: 3, kind: input, shape index: {}]
  %s4 = inlined_call_operand.vmem [shape: f32[32,64], index: 4, kind: input, shape index: {}]
  %s5 = inlined_call_operand.vmem [shape: f32[1,64], index: 5, kind: input, shape index: {}]
  %s6 = inlined_call_operand.vmem [shape: f32[32,32], index: 6, kind: input, shape index: {}]
  %s7 = inlined_call_operand.vmem [shape: f32[1,32], index: 7, kind: input, shape index: {}]
  %s8 = inlined_call_operand.vmem [shape: f32[1,32], index: 8, kind: input, shape index: {}]
  %s9 = inlined_call_operand.vmem [shape: f32[1,32], index: 9, kind: input, shape index: {}]
  %s10 = inlined_call_operand.vmem [shape: f32[2,1,6], index: 10, kind: input, shape index: {}]
  %s11 = inlined_call_operand.vmem [shape: f32[2,8,1], index: 11, kind: input, shape index: {}]
  %s12 = inlined_call_operand.vmem [shape: f32[2,8,32], index: 12, kind: output, shape index: {}]
  %s13 = sld [smem:[#allocation0]]
  $region81: #{decoder_forward.7} parent=0
    _
  %s15 = ssub.s32 1, %s13
  %s16 = scalar_select 0, %s15, %s13
  loop: start=0, step=1, limit=4
  $region2: #{decoder_forward.7} parent=0 // loop_pre_header
    _
  $region3: #{decoder_forward.7} parent=0 // loop_header
    %s18 = sphi 0, %s22
    %p19 = scmp.ge.s32.totalorder %s18, 4
    %s28 = sphi 0, %s30
    %s31 = sphi 0, %s28
    %s32 = sphi 0, %s31
    %s48 = sphi 0, %s32
    %s54 = sphi 0, %s56
    %s57 = sphi 0, %s54
    %s58 = sphi 0, %s57
    %s74 = sphi 0, %s58
    %s78 = sphi 0, %s78
    %s80 = sphi 0, %s78
    %s81 = sphi 0, %s80
    %s95 = sphi 0, %s81
    %s99 = sphi 0, %s99
    %s101 = sphi 0, %s99
    %s102 = sphi 0, %s101
    %s116 = sphi 0, %s102
    %s120 = sphi 0, %s120
    %s122 = sphi 0, %s120
    %s123 = sphi 0, %s122
    %s137 = sphi 0, %s123
    %s141 = sphi 0, %s141
    %s143 = sphi 0, %s141
    %s144 = sphi 0, %s143
    %s158 = sphi 0, %s144
    %s162 = sphi 0, %s162
    %s164 = sphi 0, %s162
    %s165 = sphi 0, %s164
    %s179 = sphi 0, %s165
    %s183 = sphi 0, %s183
    %s185 = sphi 0, %s183
    %s186 = sphi 0, %s185
    %s200 = sphi 0, %s186
    %s204 = sphi 0, %s204
    %s206 = sphi 0, %s204
    %s207 = sphi 0, %s206
    %s221 = sphi 0, %s207
    %s225 = sphi 0, %s225
    %s227 = sphi 0, %s225
    %s228 = sphi 0, %s227
    %s242 = sphi 0, %s228
    %s248 = sphi 0, %s250
    %s251 = sphi 0, %s248
    %s252 = sphi 0, %s251
    %s268 = sphi 0, %s252
    %s274 = sphi 0, %s276
    %s277 = sphi 0, %s274
    %s278 = sphi 0, %s277
    %s294 = sphi 0, %s278
    %s300 = sphi 0, %s302
    %s303 = sphi 0, %s300
    %s304 = sphi 0, %s303
    %s320 = sphi 0, %s304
  $region4: #{decoder_forward.7} parent=0 // loop_header_branch
    %21 = sbr.rel (%p19) target = $region8
  $region5: #{decoder_forward.7} parent=0 // loop_body
    %s23 = ssub.s32 %s18, 1
    %s24 = ssub.s32 %s18, 2
    %s25 = sadd.s32 %s18, 1
    %s26 = ssub.s32 %s18, %s25
    %p27 = scmp.eq.s32.totalorder %s26, 0
    %s29 = sadd.s32 %s28, 1
    %s30 = scalar_select %p27, %s28, %s29
    %p33 = pneg %p27
    %p34 = scmp.eq.s32.totalorder %s18, 1
    %p35 = por %p33, %p34
    %p36 = scmp.ne.s32.totalorder %s28, %s31
    %p37 = scmp.eq.s32.totalorder %s18, 0
    %p38 = por %p36, %p37
    %p39 = scmp.ne.s32.totalorder %s28, %s31
    %p40 = scmp.eq.s32.totalorder %s23, 1
    %p41 = por %p39, %p40
    %p42 = scmp.ne.s32.totalorder %s31, %s32
    %p43 = scmp.eq.s32.totalorder %s23, 0
    %p44 = por %p42, %p43
    %p45 = scmp.ne.s32.totalorder %s31, %s32
    %p46 = scmp.eq.s32.totalorder %s24, 1
    %p47 = por %p45, %p46
    %p49 = scmp.ne.s32.totalorder %s32, %s48
    %p50 = scmp.eq.s32.totalorder %s24, 0
    %p51 = por %p49, %p50
    %s52 = ssub.s32 %s18, %s25
    %p53 = scmp.eq.s32.totalorder %s52, 0
    %s55 = sadd.s32 %s54, 1
    %s56 = scalar_select %p53, %s54, %s55
    %p59 = pneg %p53
    %p60 = scmp.eq.s32.totalorder %s18, 1
    %p61 = por %p59, %p60
    %p62 = scmp.ne.s32.totalorder %s54, %s57
    %p63 = scmp.eq.s32.totalorder %s18, 0
    %p64 = por %p62, %p63
    %p65 = scmp.ne.s32.totalorder %s54, %s57
    %p66 = scmp.eq.s32.totalorder %s23, 1
    %p67 = por %p65, %p66
    %p68 = scmp.ne.s32.totalorder %s57, %s58
    %p69 = scmp.eq.s32.totalorder %s23, 0
    %p70 = por %p68, %p69
    %p71 = scmp.ne.s32.totalorder %s57, %s58
    %p72 = scmp.eq.s32.totalorder %s24, 1
    %p73 = por %p71, %p72
    %p75 = scmp.ne.s32.totalorder %s58, %s74
    %p76 = scmp.eq.s32.totalorder %s24, 0
    %p77 = por %p75, %p76
    %s79 = sadd.s32 %s78, 1
    %p82 = scmp.eq.s32.totalorder %s18, 1
    %p83 = scmp.ne.s32.totalorder %s78, %s80
    %p84 = scmp.eq.s32.totalorder %s18, 0
    %p85 = por %p83, %p84
    %p86 = scmp.ne.s32.totalorder %s78, %s80
    %p87 = scmp.eq.s32.totalorder %s23, 1
    %p88 = por %p86, %p87
    %p89 = scmp.ne.s32.totalorder %s80, %s81
    %p90 = scmp.eq.s32.totalorder %s23, 0
    %p91 = por %p89, %p90
    %p92 = scmp.ne.s32.totalorder %s80, %s81
    %p93 = scmp.eq.s32.totalorder %s24, 1
    %p94 = por %p92, %p93
    %p96 = scmp.ne.s32.totalorder %s81, %s95
    %p97 = scmp.eq.s32.totalorder %s24, 0
    %p98 = por %p96, %p97
    %s100 = sadd.s32 %s99, 1
    %p103 = scmp.eq.s32.totalorder %s18, 1
    %p104 = scmp.ne.s32.totalorder %s99, %s101
    %p105 = scmp.eq.s32.totalorder %s18, 0
    %p106 = por %p104, %p105
    %p107 = scmp.ne.s32.totalorder %s99, %s101
    %p108 = scmp.eq.s32.totalorder %s23, 1
    %p109 = por %p107, %p108
    %p110 = scmp.ne.s32.totalorder %s101, %s102
    %p111 = scmp.eq.s32.totalorder %s23, 0
    %p112 = por %p110, %p111
    %p113 = scmp.ne.s32.totalorder %s101, %s102
    %p114 = scmp.eq.s32.totalorder %s24, 1
    %p115 = por %p113, %p114
    %p117 = scmp.ne.s32.totalorder %s102, %s116
    %p118 = scmp.eq.s32.totalorder %s24, 0
    %p119 = por %p117, %p118
    %s121 = sadd.s32 %s120, 1
    %p124 = scmp.eq.s32.totalorder %s18, 1
    %p125 = scmp.ne.s32.totalorder %s120, %s122
    %p126 = scmp.eq.s32.totalorder %s18, 0
    %p127 = por %p125, %p126
    %p128 = scmp.ne.s32.totalorder %s120, %s122
    %p129 = scmp.eq.s32.totalorder %s23, 1
    %p130 = por %p128, %p129
    %p131 = scmp.ne.s32.totalorder %s122, %s123
    %p132 = scmp.eq.s32.totalorder %s23, 0
    %p133 = por %p131, %p132
    %p134 = scmp.ne.s32.totalorder %s122, %s123
    %p135 = scmp.eq.s32.totalorder %s24, 1
    %p136 = por %p134, %p135
    %p138 = scmp.ne.s32.totalorder %s123, %s137
    %p139 = scmp.eq.s32.totalorder %s24, 0
    %p140 = por %p138, %p139
    %s142 = sadd.s32 %s141, 1
    %p145 = scmp.eq.s32.totalorder %s18, 1
    %p146 = scmp.ne.s32.totalorder %s141, %s143
    %p147 = scmp.eq.s32.totalorder %s18, 0
    %p148 = por %p146, %p147
    %p149 = scmp.ne.s32.totalorder %s141, %s143
    %p150 = scmp.eq.s32.totalorder %s23, 1
    %p151 = por %p149, %p150
    %p152 = scmp.ne.s32.totalorder %s143, %s144
    %p153 = scmp.eq.s32.totalorder %s23, 0
    %p154 = por %p152, %p153
    %p155 = scmp.ne.s32.totalorder %s143, %s144
    %p156 = scmp.eq.s32.totalorder %s24, 1
    %p157 = por %p155, %p156
    %p159 = scmp.ne.s32.totalorder %s144, %s158
    %p160 = scmp.eq.s32.totalorder %s24, 0
    %p161 = por %p159, %p160
    %s163 = sadd.s32 %s162, 1
    %p166 = scmp.eq.s32.totalorder %s18, 1
    %p167 = scmp.ne.s32.totalorder %s162, %s164
    %p168 = scmp.eq.s32.totalorder %s18, 0
    %p169 = por %p167, %p168
    %p170 = scmp.ne.s32.totalorder %s162, %s164
    %p171 = scmp.eq.s32.totalorder %s23, 1
    %p172 = por %p170, %p171
    %p173 = scmp.ne.s32.totalorder %s164, %s165
    %p174 = scmp.eq.s32.totalorder %s23, 0
    %p175 = por %p173, %p174
    %p176 = scmp.ne.s32.totalorder %s164, %s165
    %p177 = scmp.eq.s32.totalorder %s24, 1
    %p178 = por %p176, %p177
    %p180 = scmp.ne.s32.totalorder %s165, %s179
    %p181 = scmp.eq.s32.totalorder %s24, 0
    %p182 = por %p180, %p181
    %s184 = sadd.s32 %s183, 1
    %p187 = scmp.eq.s32.totalorder %s18, 1
    %p188 = scmp.ne.s32.totalorder %s183, %s185
    %p189 = scmp.eq.s32.totalorder %s18, 0
    %p190 = por %p188, %p189
    %p191 = scmp.ne.s32.totalorder %s183, %s185
    %p192 = scmp.eq.s32.totalorder %s23, 1
    %p193 = por %p191, %p192
    %p194 = scmp.ne.s32.totalorder %s185, %s186
    %p195 = scmp.eq.s32.totalorder %s23, 0
    %p196 = por %p194, %p195
    %p197 = scmp.ne.s32.totalorder %s185, %s186
    %p198 = scmp.eq.s32.totalorder %s24, 1
    %p199 = por %p197, %p198
    %p201 = scmp.ne.s32.totalorder %s186, %s200
    %p202 = scmp.eq.s32.totalorder %s24, 0
    %p203 = por %p201, %p202
    %s205 = sadd.s32 %s204, 1
    %p208 = scmp.eq.s32.totalorder %s18, 1
    %p209 = scmp.ne.s32.totalorder %s204, %s206
    %p210 = scmp.eq.s32.totalorder %s18, 0
    %p211 = por %p209, %p210
    %p212 = scmp.ne.s32.totalorder %s204, %s206
    %p213 = scmp.eq.s32.totalorder %s23, 1
    %p214 = por %p212, %p213
    %p215 = scmp.ne.s32.totalorder %s206, %s207
    %p216 = scmp.eq.s32.totalorder %s23, 0
    %p217 = por %p215, %p216
    %p218 = scmp.ne.s32.totalorder %s206, %s207
    %p219 = scmp.eq.s32.totalorder %s24, 1
    %p220 = por %p218, %p219
    %p222 = scmp.ne.s32.totalorder %s207, %s221
    %p223 = scmp.eq.s32.totalorder %s24, 0
    %p224 = por %p222, %p223
    %s226 = sadd.s32 %s225, 1
    %p229 = scmp.eq.s32.totalorder %s18, 1
    %p230 = scmp.ne.s32.totalorder %s225, %s227
    %p231 = scmp.eq.s32.totalorder %s18, 0
    %p232 = por %p230, %p231
    %p233 = scmp.ne.s32.totalorder %s225, %s227
    %p234 = scmp.eq.s32.totalorder %s23, 1
    %p235 = por %p233, %p234
    %p236 = scmp.ne.s32.totalorder %s227, %s228
    %p237 = scmp.eq.s32.totalorder %s23, 0
    %p238 = por %p236, %p237
    %p239 = scmp.ne.s32.totalorder %s227, %s228
    %p240 = scmp.eq.s32.totalorder %s24, 1
    %p241 = por %p239, %p240
    %p243 = scmp.ne.s32.totalorder %s228, %s242
    %p244 = scmp.eq.s32.totalorder %s24, 0
    %p245 = por %p243, %p244
    %s246 = ssub.s32 %s18, %s25
    %p247 = scmp.eq.s32.totalorder %s246, 0
    %s249 = sadd.s32 %s248, 1
    %s250 = scalar_select %p247, %s248, %s249
    %p253 = pneg %p247
    %p254 = scmp.eq.s32.totalorder %s18, 1
    %p255 = por %p253, %p254
    %p256 = scmp.ne.s32.totalorder %s248, %s251
    %p257 = scmp.eq.s32.totalorder %s18, 0
    %p258 = por %p256, %p257
    %p259 = scmp.ne.s32.totalorder %s248, %s251
    %p260 = scmp.eq.s32.totalorder %s23, 1
    %p261 = por %p259, %p260
    %p262 = scmp.ne.s32.totalorder %s251, %s252
    %p263 = scmp.eq.s32.totalorder %s23, 0
    %p264 = por %p262, %p263
    %p265 = scmp.ne.s32.totalorder %s251, %s252
    %p266 = scmp.eq.s32.totalorder %s24, 1
    %p267 = por %p265, %p266
    %p269 = scmp.ne.s32.totalorder %s252, %s268
    %p270 = scmp.eq.s32.totalorder %s24, 0
    %p271 = por %p269, %p270
    %s272 = ssub.s32 %s18, %s25
    %p273 = scmp.eq.s32.totalorder %s272, 0
    %s275 = sadd.s32 %s274, 1
    %s276 = scalar_select %p273, %s274, %s275
    %p279 = pneg %p273
    %p280 = scmp.eq.s32.totalorder %s18, 1
    %p281 = por %p279, %p280
    %p282 = scmp.ne.s32.totalorder %s274, %s277
    %p283 = scmp.eq.s32.totalorder %s18, 0
    %p284 = por %p282, %p283
    %p285 = scmp.ne.s32.totalorder %s274, %s277
    %p286 = scmp.eq.s32.totalorder %s23, 1
    %p287 = por %p285, %p286
    %p288 = scmp.ne.s32.totalorder %s277, %s278
    %p289 = scmp.eq.s32.totalorder %s23, 0
    %p290 = por %p288, %p289
    %p291 = scmp.ne.s32.totalorder %s277, %s278
    %p292 = scmp.eq.s32.totalorder %s24, 1
    %p293 = por %p291, %p292
    %p295 = scmp.ne.s32.totalorder %s278, %s294
    %p296 = scmp.eq.s32.totalorder %s24, 0
    %p297 = por %p295, %p296
    %s298 = ssub.s32 %s18, %s25
    %p299 = scmp.eq.s32.totalorder %s298, 0
    %s301 = sadd.s32 %s300, 1
    %s302 = scalar_select %p299, %s300, %s301
    %p305 = pneg %p299
    %p306 = scmp.eq.s32.totalorder %s18, 1
    %p307 = por %p305, %p306
    %p308 = scmp.ne.s32.totalorder %s300, %s303
    %p309 = scmp.eq.s32.totalorder %s18, 0
    %p310 = por %p308, %p309
    %p311 = scmp.ne.s32.totalorder %s300, %s303
    %p312 = scmp.eq.s32.totalorder %s23, 1
    %p313 = por %p311, %p312
    %p314 = scmp.ne.s32.totalorder %s303, %s304
    %p315 = scmp.eq.s32.totalorder %s23, 0
    %p316 = por %p314, %p315
    %p317 = scmp.ne.s32.totalorder %s303, %s304
    %p318 = scmp.eq.s32.totalorder %s24, 1
    %p319 = por %p317, %p318
    %p321 = scmp.ne.s32.totalorder %s304, %s320
    %p322 = scmp.eq.s32.totalorder %s24, 0
    %p323 = por %p321, %p322
    %p324 = scmp.le.s32.totalorder 1, %s18
    %p325 = scmp.lt.s32.totalorder %s18, 3
    %p326 = pnand %p324, %p325
    %p327 = pneg %p326
    // Predicated region
    $region9: #{decoder_forward.7} parent=5 // pred_check
      _
    $region10: #{decoder_forward.7} parent=5 // pred_check_branch
      %329 = sbr.rel (%p326) target = $region12
    $region11: #{decoder_forward.7} parent=5 // pred_region
      %s330 = ssub.s32 %s18, 1
      // Predicated region
      $region13: #{decoder_forward.7} parent=11 // pred_check
        %p331 = pneg %p91
      $region14: #{decoder_forward.7} parent=11 // pred_check_branch
        %333 = sbr.rel (%p331) target = $region16
      $region15: #{decoder_forward.7} parent=11 // pred_region
        _
      $region16: #{decoder_forward.7} parent=11 // pred_fallthru
        _
      // Predicated region
      $region17: #{decoder_forward.7} parent=11 // pred_check
        %p334 = pneg %p112
      $region18: #{decoder_forward.7} parent=11 // pred_check_branch
        %336 = sbr.rel (%p334) target = $region20
      $region19: #{decoder_forward.7} parent=11 // pred_region
        _
      $region20: #{decoder_forward.7} parent=11 // pred_fallthru
        _
      // Predicated region
      $region21: #{decoder_forward.7} parent=11 // pred_check
        %p337 = pneg %p133
      $region22: #{decoder_forward.7} parent=11 // pred_check_branch
        %339 = sbr.rel (%p337) target = $region24
      $region23: #{decoder_forward.7} parent=11 // pred_region
        _
      $region24: #{decoder_forward.7} parent=11 // pred_fallthru
        _
      // Predicated region
      $region25: #{decoder_forward.7} parent=11 // pred_check
        %p340 = pneg %p154
      $region26: #{decoder_forward.7} parent=11 // pred_check_branch
        %342 = sbr.rel (%p340) target = $region28
      $region27: #{decoder_forward.7} parent=11 // pred_region
        _
      $region28: #{decoder_forward.7} parent=11 // pred_fallthru
        _
      // Predicated region
      $region29: #{decoder_forward.7} parent=11 // pred_check
        %p343 = pneg %p175
      $region30: #{decoder_forward.7} parent=11 // pred_check_branch
        %345 = sbr.rel (%p343) target = $region32
      $region31: #{decoder_forward.7} parent=11 // pred_region
        _
      $region32: #{decoder_forward.7} parent=11 // pred_fallthru
        _
      // Predicated region
      $region33: #{decoder_forward.7} parent=11 // pred_check
        %p346 = pneg %p196
      $region34: #{decoder_forward.7} parent=11 // pred_check_branch
        %348 = sbr.rel (%p346) target = $region36
      $region35: #{decoder_forward.7} parent=11 // pred_region
        _
      $region36: #{decoder_forward.7} parent=11 // pred_fallthru
        _
      // Predicated region
      $region37: #{decoder_forward.7} parent=11 // pred_check
        %p349 = pneg %p217
      $region38: #{decoder_forward.7} parent=11 // pred_check_branch
        %351 = sbr.rel (%p349) target = $region40
      $region39: #{decoder_forward.7} parent=11 // pred_region
        _
      $region40: #{decoder_forward.7} parent=11 // pred_fallthru
        _
      // Predicated region
      $region41: #{decoder_forward.7} parent=11 // pred_check
        %p352 = pneg %p238
      $region42: #{decoder_forward.7} parent=11 // pred_check_branch
        %354 = sbr.rel (%p352) target = $region44
      $region43: #{decoder_forward.7} parent=11 // pred_region
        _
      $region44: #{decoder_forward.7} parent=11 // pred_fallthru
        _
    $region12: #{decoder_forward.7} parent=5 // pred_fallthru
      _
    %p355 = scmp.lt.s32.totalorder %s18, 2
    // Predicated region
    $region45: #{decoder_forward.7} parent=5 // pred_check
      %p356 = pneg %p355
    $region46: #{decoder_forward.7} parent=5 // pred_check_branch
      %358 = sbr.rel (%p356) target = $region48
    $region47: #{decoder_forward.7} parent=5 // pred_region
      // Predicated region
      $region49: #{decoder_forward.7} parent=47 // pred_check
        %p359 = pneg %p38
      $region50: #{decoder_forward.7} parent=47 // pred_check_branch
        %361 = sbr.rel (%p359) target = $region52
      $region51: #{decoder_forward.7} parent=47 // pred_region
        %p362 = scmp.lt.s32.totalorder %s18, 1
        %s363 = scalar_select %p362, %s18, 1
        %s364 = smul.addr %s363, 8
        %s365 = scalar_lea.vmem %s0, %s364
      $region52: #{decoder_forward.7} parent=47 // pred_fallthru
        _
      // Predicated region
      $region53: #{decoder_forward.7} parent=47 // pred_check
        %p366 = pneg %p64
      $region54: #{decoder_forward.7} parent=47 // pred_check_branch
        %368 = sbr.rel (%p366) target = $region56
      $region55: #{decoder_forward.7} parent=47 // pred_region
        %p369 = scmp.lt.s32.totalorder %s18, 1
        %s370 = scalar_select %p369, %s18, 1
        %s371 = smul.addr %s370, 8
        %s372 = scalar_lea.vmem %s1, %s371
      $region56: #{decoder_forward.7} parent=47 // pred_fallthru
        _
      // Predicated region
      $region57: #{decoder_forward.7} parent=47 // pred_check
        %p373 = pneg %p258
      $region58: #{decoder_forward.7} parent=47 // pred_check_branch
        %375 = sbr.rel (%p373) target = $region60
      $region59: #{decoder_forward.7} parent=47 // pred_region
        %p376 = scmp.lt.s32.totalorder %s18, 1
        %s377 = scalar_select %p376, %s18, 1
        %s378 = scalar_lea.vmem %s10, %s377
      $region60: #{decoder_forward.7} parent=47 // pred_fallthru
        _
      // Predicated region
      $region61: #{decoder_forward.7} parent=47 // pred_check
        %p379 = pneg %p284
      $region62: #{decoder_forward.7} parent=47 // pred_check_branch
        %381 = sbr.rel (%p379) target = $region64
      $region63: #{decoder_forward.7} parent=47 // pred_region
        %p382 = scmp.lt.s32.totalorder %s18, 1
        %s383 = scalar_select %p382, %s18, 1
        %s384 = smul.addr %s383, 8
        %s385 = scalar_lea.vmem %s11, %s384
      $region64: #{decoder_forward.7} parent=47 // pred_fallthru
        _
    $region48: #{decoder_forward.7} parent=5 // pred_fallthru
      _
    %p386 = scmp.le.s32.totalorder 1, %s18
    %p387 = scmp.lt.s32.totalorder %s18, 3
    %p388 = pnand %p386, %p387
    %p389 = pneg %p388
    // Predicated region
    $region65: #{decoder_forward.7} parent=5 // pred_check
      _
    $region66: #{decoder_forward.7} parent=5 // pred_check_branch
      %391 = sbr.rel (%p388) target = $region68
    $region67: #{decoder_forward.7} parent=5 // pred_region
      %s392 = ssub.s32 %s18, 1
      %p393 = scmp.lt.s32.totalorder %s23, 1
      %s394 = scalar_select %p393, %s23, 1
      %s395 = smul.addr %s394, 8
      %s396 = scalar_lea.vmem %s0, %s395
      %p397 = pneg %p44
      %p398 = pneg %p41
      %p399 = scmp.lt.s32.totalorder %s23, 1
      %s400 = scalar_select %p399, %s23, 1
      %s401 = smul.addr %s400, 8
      %s402 = scalar_lea.vmem %s1, %s401
      %p403 = pneg %p70
      %p404 = pneg %p67
      %p405 = pneg %p91
      %p406 = pneg %p88
      %p407 = pneg %p112
      %p408 = pneg %p109
      %p409 = pneg %p133
      %p410 = pneg %p130
      %p411 = pneg %p154
      %p412 = pneg %p151
      %p413 = pneg %p175
      %p414 = pneg %p172
      %p415 = pneg %p196
      %p416 = pneg %p193
      %p417 = pneg %p217
      %p418 = pneg %p214
      %p419 = pneg %p238
      %p420 = pneg %p235
      %p421 = scmp.lt.s32.totalorder %s23, 1
      %s422 = scalar_select %p421, %s23, 1
      %s423 = scalar_lea.vmem %s10, %s422
      %p424 = pneg %p264
      %p425 = pneg %p261
      %p426 = scmp.lt.s32.totalorder %s23, 1
      %s427 = scalar_select %p426, %s23, 1
      %s428 = smul.addr %s427, 8
      %s429 = scalar_lea.vmem %s11, %s428
      %p430 = pneg %p290
      %p431 = pneg %p287
      %p432 = pneg %p316
      %p433 = pneg %p313
      %p434 = scmp.lt.s32.totalorder %s23, 1
      %s435 = scalar_select %p434, %s23, 1
      %s436 = smul.addr %s435, 8
      %s437 = scalar_lea.vmem %s12, %s436
      %p438 = scmp.lt.s32.totalorder %s23, 1
      %s439 = scalar_select %p438, %s23, 1
      %s440 = smul.addr %s439, 8
      %s441 = scalar_lea.vmem %s0, %s440
      %p442 = scmp.lt.s32.totalorder %s23, 1
      %s443 = scalar_select %p442, %s23, 1
      %s444 = smul.addr %s443, 8
      %s445 = scalar_lea.vmem %s1, %s444
      %p446 = scmp.lt.s32.totalorder %s23, 1
      %s447 = scalar_select %p446, %s23, 1
      %s448 = scalar_lea.vmem %s10, %s447
      %p449 = scmp.lt.s32.totalorder %s23, 1
      %s450 = scalar_select %p449, %s23, 1
      %s451 = smul.addr %s450, 8
      %s452 = scalar_lea.vmem %s11, %s451
      %p453 = scmp.lt.s32.totalorder %s23, 1
      %s454 = scalar_select %p453, %s23, 1
      %s455 = smul.addr %s454, 8
      %s456 = scalar_lea.vmem %s12, %s455
      %v457 = vld [vmem:[%s441] sm:$0xff]
      %v458 = vld [vmem:[%s2] sm:$0xff]
      %v459 = vld [vmem:[%s2 + $0x8] sm:$0xff]
      %v460 = vld [vmem:[%s2 + $0x10] sm:$0xff]
      %v461 = vld [vmem:[%s2 + $0x18] sm:$0xff]
      %v462 = vld [vmem:[%s3] sm:$0x1]
      %v464 = vlaneseq
      %v465 = vshrl.u32 %v464, 7
      %v466 = vsub.s32 0, %v465
      %v467 = vrot.slane %v462, %v466
      %vm469 = vcmask 261120
      %v471 = vsel %vm469, %v457, 0
      %473 = vmatprep.subr.mxu0 0.0
      %474 = vmatpush1.msra.mxu0 0.0
      %475 = vmatprep.subr.mxu0 0.0
      %476 = vmatpush1.msra.mxu0 0.0
      %477 = vmatprep.subr.mxu0 0.0
      %478 = vmatpush1.msra.mxu0 0.0
      %479 = vmatprep.subr.mxu0 0.0
      %480 = vmatpush1.msra.mxu0 0.0
      %481 = vmatprep.subr.mxu0 0.0
      %482 = vmatpush1.msra.mxu0 0.0
      %483 = vmatprep.subr.mxu0 0.0
      %484 = vmatpush1.msra.mxu0 0.0
      %485 = vmatprep.subr.mxu0 0.0
      %486 = vmatpush1.msra.mxu0 0.0
      %487 = vmatprep.subr.mxu0 0.0
      %488 = vmatpush1.msra.mxu0 0.0
      %489 = vmatprep.subr.mxu0 0.0
      %490 = vmatpush1.msra.mxu0 0.0
      %491 = vmatprep.subr.mxu0 0.0
      %492 = vmatpush1.msra.mxu0 0.0
      %493 = vmatprep.subr.mxu0 0.0
      %494 = vmatpush1.msra.mxu0 0.0
      %495 = vmatprep.subr.mxu0 0.0
      %496 = vmatpush1.msra.mxu0 0.0
      %497 = vmatprep.subr.mxu0 0.0
      %498 = vmatpush1.msra.mxu0 %v461
      %499 = vmatprep.subr.mxu0 0.0
      %500 = vmatpush1.msra.mxu0 %v460
      %501 = vmatprep.subr.mxu0 0.0
      %502 = vmatpush1.msra.mxu0 %v459
      %503 = vmatprep.subr.mxu0 0.0
      %504 = vmatpush1.msra.mxu0 %v458
      %505 = vmatprep.subr.mxu0 0.0
      %506 = vmatpush2.msra.mxu0 0.0
      %507 = vmatprep.subr.mxu0 0.0
      %508 = vmatpush2.msra.mxu0 0.0
      %509 = vmatprep.subr.mxu0 0.0
      %510 = vmatpush2.msra.mxu0 0.0
      %511 = vmatprep.subr.mxu0 0.0
      %512 = vmatpush2.msra.mxu0 0.0
      %513 = vmatprep.subr.mxu0 0.0
      %514 = vmatpush2.msra.mxu0 0.0
      %515 = vmatprep.subr.mxu0 0.0
      %516 = vmatpush2.msra.mxu0 0.0
      %517 = vmatprep.subr.mxu0 0.0
      %518 = vmatpush2.msra.mxu0 0.0
      %519 = vmatprep.subr.mxu0 0.0
      %520 = vmatpush2.msra.mxu0 0.0
      %521 = vmatprep.subr.mxu0 0.0
      %522 = vmatpush2.msra.mxu0 0.0
      %523 = vmatprep.subr.mxu0 0.0
      %524 = vmatpush2.msra.mxu0 0.0
      %525 = vmatprep.subr.mxu0 0.0
      %526 = vmatpush2.msra.mxu0 0.0
      %527 = vmatprep.subr.mxu0 0.0
      %528 = vmatpush2.msra.mxu0 0.0
      %529 = vmatprep.subr.mxu0 0.0
      %530 = vmatpush2.msra.mxu0 0.0
      %531 = vmatprep.subr.mxu0 0.0
      %532 = vmatpush2.msra.mxu0 0.0
      %533 = vmatprep.subr.mxu0 0.0
      %534 = vmatpush2.msra.mxu0 0.0
      %535 = vmatprep.subr.mxu0 0.0
      %536 = vmatpush2.msra.mxu0 0.0
      %537 = vmatprep.mubr.f32.mxu0 0.0
      %538 = vmatmul.mubr.f32.gmra.mxu0 %v471
      %v539 = vpop.f32.mrf.mxu0
      %v540 = vadd.f32 %v467, %v539
      %v541 = vpop.f32.mrf.mxu0
      %542 = vdwg.mxu0
      %v543 = vld [vmem:[%s445] sm:$0x3f]
      %v544 = vld [vmem:[%s4] sm:$0xff]
      %v545 = vld [vmem:[%s4 + $0x8] sm:$0xff]
      %v546 = vld [vmem:[%s4 + $0x10] sm:$0xff]
      %v547 = vld [vmem:[%s4 + $0x18] sm:$0xff]
      %v548 = vld [vmem:[%s5] sm:$0x1]
      %v550 = vlaneseq
      %v551 = vshrl.u32 %v550, 7
      %v552 = vsub.s32 0, %v551
      %v553 = vrot.slane %v548, %v552
      %v556 = vsel %vm469, %v543, 0
      %558 = vmatprep.subr.mxu0 0.0
      %559 = vmatpush1.msra.mxu0 0.0
      %560 = vmatprep.subr.mxu0 0.0
      %561 = vmatpush1.msra.mxu0 0.0
      %562 = vmatprep.subr.mxu0 0.0
      %563 = vmatpush1.msra.mxu0 0.0
      %564 = vmatprep.subr.mxu0 0.0
      %565 = vmatpush1.msra.mxu0 0.0
      %566 = vmatprep.subr.mxu0 0.0
      %567 = vmatpush1.msra.mxu0 0.0
      %568 = vmatprep.subr.mxu0 0.0
      %569 = vmatpush1.msra.mxu0 0.0
      %570 = vmatprep.subr.mxu0 0.0
      %571 = vmatpush1.msra.mxu0 0.0
      %572 = vmatprep.subr.mxu0 0.0
      %573 = vmatpush1.msra.mxu0 0.0
      %574 = vmatprep.subr.mxu0 0.0
      %575 = vmatpush1.msra.mxu0 0.0
      %576 = vmatprep.subr.mxu0 0.0
      %577 = vmatpush1.msra.mxu0 0.0
      %578 = vmatprep.subr.mxu0 0.0
      %579 = vmatpush1.msra.mxu0 0.0
      %580 = vmatprep.subr.mxu0 0.0
      %581 = vmatpush1.msra.mxu0 0.0
      %582 = vmatprep.subr.mxu0 0.0
      %583 = vmatpush1.msra.mxu0 %v547
      %584 = vmatprep.subr.mxu0 0.0
      %585 = vmatpush1.msra.mxu0 %v546
      %586 = vmatprep.subr.mxu0 0.0
      %587 = vmatpush1.msra.mxu0 %v545
      %588 = vmatprep.subr.mxu0 0.0
      %589 = vmatpush1.msra.mxu0 %v544
      %590 = vmatprep.subr.mxu0 0.0
      %591 = vmatpush2.msra.mxu0 0.0
      %592 = vmatprep.subr.mxu0 0.0
      %593 = vmatpush2.msra.mxu0 0.0
      %594 = vmatprep.subr.mxu0 0.0
      %595 = vmatpush2.msra.mxu0 0.0
      %596 = vmatprep.subr.mxu0 0.0
      %597 = vmatpush2.msra.mxu0 0.0
      %598 = vmatprep.subr.mxu0 0.0
      %599 = vmatpush2.msra.mxu0 0.0
      %600 = vmatprep.subr.mxu0 0.0
      %601 = vmatpush2.msra.mxu0 0.0
      %602 = vmatprep.subr.mxu0 0.0
      %603 = vmatpush2.msra.mxu0 0.0
      %604 = vmatprep.subr.mxu0 0.0
      %605 = vmatpush2.msra.mxu0 0.0
      %606 = vmatprep.subr.mxu0 0.0
      %607 = vmatpush2.msra.mxu0 0.0
      %608 = vmatprep.subr.mxu0 0.0
      %609 = vmatpush2.msra.mxu0 0.0
      %610 = vmatprep.subr.mxu0 0.0
      %611 = vmatpush2.msra.mxu0 0.0
      %612 = vmatprep.subr.mxu0 0.0
      %613 = vmatpush2.msra.mxu0 0.0
      %614 = vmatprep.subr.mxu0 0.0
      %615 = vmatpush2.msra.mxu0 0.0
      %616 = vmatprep.subr.mxu0 0.0
      %617 = vmatpush2.msra.mxu0 0.0
      %618 = vmatprep.subr.mxu0 0.0
      %619 = vmatpush2.msra.mxu0 0.0
      %620 = vmatprep.subr.mxu0 0.0
      %621 = vmatpush2.msra.mxu0 0.0
      %622 = vmatprep.mubr.f32.mxu0 0.0
      %623 = vmatmul.mubr.f32.gmra.mxu0 %v556
      %v624 = vpop.f32.mrf.mxu0
      %v625 = vadd.f32 %v553, %v624
      %v626 = vpop.f32.mrf.mxu0
      %627 = vdwg.mxu0
      %v628 = vld [vmem:[%s448] sm:$0x1]
      %vm629 = vcmp.gt.f32.partialorder %v628, 0.5
      %v630 = vsel %vm629, -1e+09, 0.0
      %vm631 = vcmask 64512
      %v633 = vsel %vm631, %v540, 0
      %v636 = vsel %vm631, %v625, 0
      %638 = vmatprep.subr.mxu0 0.0
      %639 = vmatpush1.xpose.msra.mxu0 0.0
      %640 = vmatprep.subr.mxu0 0.0
      %641 = vmatpush1.xpose.msra.mxu0 0.0
      %642 = vmatprep.subr.mxu0 0.0
      %643 = vmatpush1.xpose.msra.mxu0 0.0
      %644 = vmatprep.subr.mxu0 0.0
      %645 = vmatpush1.xpose.msra.mxu0 0.0
      %646 = vmatprep.subr.mxu0 0.0
      %647 = vmatpush1.xpose.msra.mxu0 0.0
      %648 = vmatprep.subr.mxu0 0.0
      %649 = vmatpush1.xpose.msra.mxu0 0.0
      %650 = vmatprep.subr.mxu0 0.0
      %651 = vmatpush1.xpose.msra.mxu0 0.0
      %652 = vmatprep.subr.mxu0 0.0
      %653 = vmatpush1.xpose.msra.mxu0 0.0
      %654 = vmatprep.subr.mxu0 0.0
      %655 = vmatpush1.xpose.msra.mxu0 0.0
      %656 = vmatprep.subr.mxu0 0.0
      %657 = vmatpush1.xpose.msra.mxu0 0.0
      %658 = vmatprep.subr.mxu0 0.0
      %659 = vmatpush1.xpose.msra.mxu0 0.0
      %660 = vmatprep.subr.mxu0 0.0
      %661 = vmatpush1.xpose.msra.mxu0 0.0
      %662 = vmatprep.subr.mxu0 0.0
      %663 = vmatpush1.xpose.msra.mxu0 0.0
      %664 = vmatprep.subr.mxu0 0.0
      %665 = vmatpush1.xpose.msra.mxu0 0.0
      %666 = vmatprep.subr.mxu0 0.0
      %667 = vmatpush1.xpose.msra.mxu0 0.0
      %668 = vmatprep.subr.mxu0 0.0
      %669 = vmatpush1.xpose.msra.mxu0 %v636
      %670 = vmatprep.subr.mxu0 0.0
      %671 = vmatpush2.xpose.msra.mxu0 0.0
      %672 = vmatprep.subr.mxu0 0.0
      %673 = vmatpush2.xpose.msra.mxu0 0.0
      %674 = vmatprep.subr.mxu0 0.0
      %675 = vmatpush2.xpose.msra.mxu0 0.0
      %676 = vmatprep.subr.mxu0 0.0
      %677 = vmatpush2.xpose.msra.mxu0 0.0
      %678 = vmatprep.subr.mxu0 0.0
      %679 = vmatpush2.xpose.msra.mxu0 0.0
      %680 = vmatprep.subr.mxu0 0.0
      %681 = vmatpush2.xpose.msra.mxu0 0.0
      %682 = vmatprep.subr.mxu0 0.0
      %683 = vmatpush2.xpose.msra.mxu0 0.0
      %684 = vmatprep.subr.mxu0 0.0
      %685 = vmatpush2.xpose.msra.mxu0 0.0
      %686 = vmatprep.subr.mxu0 0.0
      %687 = vmatpush2.xpose.msra.mxu0 0.0
      %688 = vmatprep.subr.mxu0 0.0
      %689 = vmatpush2.xpose.msra.mxu0 0.0
      %690 = vmatprep.subr.mxu0 0.0
      %691 = vmatpush2.xpose.msra.mxu0 0.0
      %692 = vmatprep.subr.mxu0 0.0
      %693 = vmatpush2.xpose.msra.mxu0 0.0
      %694 = vmatprep.subr.mxu0 0.0
      %695 = vmatpush2.xpose.msra.mxu0 0.0
      %696 = vmatprep.subr.mxu0 0.0
      %697 = vmatpush2.xpose.msra.mxu0 0.0
      %698 = vmatprep.subr.mxu0 0.0
      %699 = vmatpush2.xpose.msra.mxu0 0.0
      %700 = vmatprep.subr.mxu0 0.0
      %701 = vmatpush2.xpose.msra.mxu0 0.0
      %702 = vmatprep.mubr.f32.mxu0 0.0
      %703 = vmatmul.mubr.f32.gmra.mxu0 %v633
      %v704 = vpop.f32.mrf.mxu0
      %v705 = vadd.f32 0.0, %v704
      %v706 = vpop.f32.mrf.mxu0
      %707 = vdwg.mxu0
      %v708 = vmul.f32 %v705, 0.35355338
      %v710 = vlaneseq
      %v711 = vshrl.u32 %v710, 7
      %v712 = vsub.s32 0, %v711
      %v713 = vrot.slane %v630, %v712
      %v715 = vadd.f32 %v708, %v713
      %vm716 = vcmask 48128
      %v717 = vsel %vm716, %v715, -inf
      %718 = vmax.xlane.f32.xlu0 %v717
      %v719 = vpop.xlane.xlu0 %718
      %v720 = vsub.f32 %v715, %v719
      %v721 = vmul.f32 %v720, 1.442695
      %v722 = vpow.pop %v721
      %v723 = vsel %vm716, %v722, 0.0
      %724 = vadd.xlane.f32.xlu0 %v723
      %v725 = vpop.xlane.xlu0 %724
      %v726 = vrcp.pop %v725
      %v727 = vmul.f32 %v722, %v726
      %728 = vrot.lane.b32.xlu0 %v625, 96
      %v729 = vpop.permute.xlu0 %728
      %v731 = vsel %vm716, %v727, 0
      %vm733 = vcmask 1045504
      %v734 = vsel %vm733, %v729, 0
      %736 = vmatprep.subr.mxu0 0.0
      %737 = vmatpush1.msra.mxu0 0.0
      %738 = vmatprep.subr.mxu0 0.0
      %739 = vmatpush1.msra.mxu0 0.0
      %740 = vmatprep.subr.mxu0 0.0
      %741 = vmatpush1.msra.mxu0 0.0
      %742 = vmatprep.subr.mxu0 0.0
      %743 = vmatpush1.msra.mxu0 0.0
      %744 = vmatprep.subr.mxu0 0.0
      %745 = vmatpush1.msra.mxu0 0.0
      %746 = vmatprep.subr.mxu0 0.0
      %747 = vmatpush1.msra.mxu0 0.0
      %748 = vmatprep.subr.mxu0 0.0
      %749 = vmatpush1.msra.mxu0 0.0
      %750 = vmatprep.subr.mxu0 0.0
      %751 = vmatpush1.msra.mxu0 0.0
      %752 = vmatprep.subr.mxu0 0.0
      %753 = vmatpush1.msra.mxu0 0.0
      %754 = vmatprep.subr.mxu0 0.0
      %755 = vmatpush1.msra.mxu0 0.0
      %756 = vmatprep.subr.mxu0 0.0
      %757 = vmatpush1.msra.mxu0 0.0
      %758 = vmatprep.subr.mxu0 0.0
      %759 = vmatpush1.msra.mxu0 0.0
      %760 = vmatprep.subr.mxu0 0.0
      %761 = vmatpush1.msra.mxu0 0.0
      %762 = vmatprep.subr.mxu0 0.0
      %763 = vmatpush1.msra.mxu0 0.0
      %764 = vmatprep.subr.mxu0 0.0
      %765 = vmatpush1.msra.mxu0 0.0
      %766 = vmatprep.subr.mxu0 0.0
      %767 = vmatpush1.msra.mxu0 %v734
      %768 = vmatprep.subr.mxu0 0.0
      %769 = vmatpush2.msra.mxu0 0.0
      %770 = vmatprep.subr.mxu0 0.0
      %771 = vmatpush2.msra.mxu0 0.0
      %772 = vmatprep.subr.mxu0 0.0
      %773 = vmatpush2.msra.mxu0 0.0
      %774 = vmatprep.subr.mxu0 0.0
      %775 = vmatpush2.msra.mxu0 0.0
      %776 = vmatprep.subr.mxu0 0.0
      %777 = vmatpush2.msra.mxu0 0.0
      %778 = vmatprep.subr.mxu0 0.0
      %779 = vmatpush2.msra.mxu0 0.0
      %780 = vmatprep.subr.mxu0 0.0
      %781 = vmatpush2.msra.mxu0 0.0
      %782 = vmatprep.subr.mxu0 0.0
      %783 = vmatpush2.msra.mxu0 0.0
      %784 = vmatprep.subr.mxu0 0.0
      %785 = vmatpush2.msra.mxu0 0.0
      %786 = vmatprep.subr.mxu0 0.0
      %787 = vmatpush2.msra.mxu0 0.0
      %788 = vmatprep.subr.mxu0 0.0
      %789 = vmatpush2.msra.mxu0 0.0
      %790 = vmatprep.subr.mxu0 0.0
      %791 = vmatpush2.msra.mxu0 0.0
      %792 = vmatprep.subr.mxu0 0.0
      %793 = vmatpush2.msra.mxu0 0.0
      %794 = vmatprep.subr.mxu0 0.0
      %795 = vmatpush2.msra.mxu0 0.0
      %796 = vmatprep.subr.mxu0 0.0
      %797 = vmatpush2.msra.mxu0 0.0
      %798 = vmatprep.subr.mxu0 0.0
      %799 = vmatpush2.msra.mxu0 0.0
      %800 = vmatprep.mubr.f32.mxu0 0.0
      %801 = vmatmul.mubr.f32.gmra.mxu0 %v731
      %v802 = vpop.f32.mrf.mxu0
      %v803 = vadd.f32 0.0, %v802
      %v804 = vpop.f32.mrf.mxu0
      %805 = vdwg.mxu0
      %806 = vrot.lane.b32.xlu0 %v540, 120
      %v807 = vpop.permute.xlu0 %806
      %808 = vrot.lane.b32.xlu0 %v625, 120
      %v809 = vpop.permute.xlu0 %808
      %v810 = vsel %vm631, %v807, 0
      %v812 = vsel %vm631, %v809, 0
      %814 = vmatprep.subr.mxu0 0.0
      %815 = vmatpush1.xpose.msra.mxu0 0.0
      %816 = vmatprep.subr.mxu0 0.0
      %817 = vmatpush1.xpose.msra.mxu0 0.0
      %818 = vmatprep.subr.mxu0 0.0
      %819 = vmatpush1.xpose.msra.mxu0 0.0
      %820 = vmatprep.subr.mxu0 0.0
      %821 = vmatpush1.xpose.msra.mxu0 0.0
      %822 = vmatprep.subr.mxu0 0.0
      %823 = vmatpush1.xpose.msra.mxu0 0.0
      %824 = vmatprep.subr.mxu0 0.0
      %825 = vmatpush1.xpose.msra.mxu0 0.0
      %826 = vmatprep.subr.mxu0 0.0
      %827 = vmatpush1.xpose.msra.mxu0 0.0
      %828 = vmatprep.subr.mxu0 0.0
      %829 = vmatpush1.xpose.msra.mxu0 0.0
      %830 = vmatprep.subr.mxu0 0.0
      %831 = vmatpush1.xpose.msra.mxu0 0.0
      %832 = vmatprep.subr.mxu0 0.0
      %833 = vmatpush1.xpose.msra.mxu0 0.0
      %834 = vmatprep.subr.mxu0 0.0
      %835 = vmatpush1.xpose.msra.mxu0 0.0
      %836 = vmatprep.subr.mxu0 0.0
      %837 = vmatpush1.xpose.msra.mxu0 0.0
      %838 = vmatprep.subr.mxu0 0.0
      %839 = vmatpush1.xpose.msra.mxu0 0.0
      %840 = vmatprep.subr.mxu0 0.0
      %841 = vmatpush1.xpose.msra.mxu0 0.0
      %842 = vmatprep.subr.mxu0 0.0
      %843 = vmatpush1.xpose.msra.mxu0 0.0
      %844 = vmatprep.subr.mxu0 0.0
      %845 = vmatpush1.xpose.msra.mxu0 %v812
      %846 = vmatprep.subr.mxu0 0.0
      %847 = vmatpush2.xpose.msra.mxu0 0.0
      %848 = vmatprep.subr.mxu0 0.0
      %849 = vmatpush2.xpose.msra.mxu0 0.0
      %850 = vmatprep.subr.mxu0 0.0
      %851 = vmatpush2.xpose.msra.mxu0 0.0
      %852 = vmatprep.subr.mxu0 0.0
      %853 = vmatpush2.xpose.msra.mxu0 0.0
      %854 = vmatprep.subr.mxu0 0.0
      %855 = vmatpush2.xpose.msra.mxu0 0.0
      %856 = vmatprep.subr.mxu0 0.0
      %857 = vmatpush2.xpose.msra.mxu0 0.0
      %858 = vmatprep.subr.mxu0 0.0
      %859 = vmatpush2.xpose.msra.mxu0 0.0
      %860 = vmatprep.subr.mxu0 0.0
      %861 = vmatpush2.xpose.msra.mxu0 0.0
      %862 = vmatprep.subr.mxu0 0.0
      %863 = vmatpush2.xpose.msra.mxu0 0.0
      %864 = vmatprep.subr.mxu0 0.0
      %865 = vmatpush2.xpose.msra.mxu0 0.0
      %866 = vmatprep.subr.mxu0 0.0
      %867 = vmatpush2.xpose.msra.mxu0 0.0
      %868 = vmatprep.subr.mxu0 0.0
      %869 = vmatpush2.xpose.msra.mxu0 0.0
      %870 = vmatprep.subr.mxu0 0.0
      %871 = vmatpush2.xpose.msra.mxu0 0.0
      %872 = vmatprep.subr.mxu0 0.0
      %873 = vmatpush2.xpose.msra.mxu0 0.0
      %874 = vmatprep.subr.mxu0 0.0
      %875 = vmatpush2.xpose.msra.mxu0 0.0
      %876 = vmatprep.subr.mxu0 0.0
      %877 = vmatpush2.xpose.msra.mxu0 0.0
      %878 = vmatprep.mubr.f32.mxu0 0.0
      %879 = vmatmul.mubr.f32.gmra.mxu0 %v810
      %v880 = vpop.f32.mrf.mxu0
      %v881 = vadd.f32 0.0, %v880
      %v882 = vpop.f32.mrf.mxu0
      %883 = vdwg.mxu0
      %v884 = vmul.f32 %v881, 0.35355338
      %v885 = vadd.f32 %v884, %v713
      %v886 = vsel %vm716, %v885, -inf
      %887 = vmax.xlane.f32.xlu0 %v886
      %v888 = vpop.xlane.xlu0 %887
      %v889 = vsub.f32 %v885, %v888
      %v890 = vmul.f32 %v889, 1.442695
      %v891 = vpow.pop %v890
      %v892 = vsel %vm716, %v891, 0.0
      %893 = vadd.xlane.f32.xlu0 %v892
      %v894 = vpop.xlane.xlu0 %893
      %v895 = vrcp.pop %v894
      %v896 = vmul.f32 %v891, %v895
      %897 = vrot.lane.b32.xlu0 %v625, 88
      %v898 = vpop.permute.xlu0 %897
      %v900 = vsel %vm716, %v896, 0
      %v902 = vsel %vm733, %v898, 0
      %904 = vmatprep.subr.mxu0 0.0
      %905 = vmatpush1.msra.mxu0 0.0
      %906 = vmatprep.subr.mxu0 0.0
      %907 = vmatpush1.msra.mxu0 0.0
      %908 = vmatprep.subr.mxu0 0.0
      %909 = vmatpush1.msra.mxu0 0.0
      %910 = vmatprep.subr.mxu0 0.0
      %911 = vmatpush1.msra.mxu0 0.0
      %912 = vmatprep.subr.mxu0 0.0
      %913 = vmatpush1.msra.mxu0 0.0
      %914 = vmatprep.subr.mxu0 0.0
      %915 = vmatpush1.msra.mxu0 0.0
      %916 = vmatprep.subr.mxu0 0.0
      %917 = vmatpush1.msra.mxu0 0.0
      %918 = vmatprep.subr.mxu0 0.0
      %919 = vmatpush1.msra.mxu0 0.0
      %920 = vmatprep.subr.mxu0 0.0
      %921 = vmatpush1.msra.mxu0 0.0
      %922 = vmatprep.subr.mxu0 0.0
      %923 = vmatpush1.msra.mxu0 0.0
      %924 = vmatprep.subr.mxu0 0.0
      %925 = vmatpush1.msra.mxu0 0.0
      %926 = vmatprep.subr.mxu0 0.0
      %927 = vmatpush1.msra.mxu0 0.0
      %928 = vmatprep.subr.mxu0 0.0
      %929 = vmatpush1.msra.mxu0 0.0
      %930 = vmatprep.subr.mxu0 0.0
      %931 = vmatpush1.msra.mxu0 0.0
      %932 = vmatprep.subr.mxu0 0.0
      %933 = vmatpush1.msra.mxu0 0.0
      %934 = vmatprep.subr.mxu0 0.0
      %935 = vmatpush1.msra.mxu0 %v902
      %936 = vmatprep.subr.mxu0 0.0
      %937 = vmatpush2.msra.mxu0 0.0
      %938 = vmatprep.subr.mxu0 0.0
      %939 = vmatpush2.msra.mxu0 0.0
      %940 = vmatprep.subr.mxu0 0.0
      %941 = vmatpush2.msra.mxu0 0.0
      %942 = vmatprep.subr.mxu0 0.0
      %943 = vmatpush2.msra.mxu0 0.0
      %944 = vmatprep.subr.mxu0 0.0
      %945 = vmatpush2.msra.mxu0 0.0
      %946 = vmatprep.subr.mxu0 0.0
      %947 = vmatpush2.msra.mxu0 0.0
      %948 = vmatprep.subr.mxu0 0.0
      %949 = vmatpush2.msra.mxu0 0.0
      %950 = vmatprep.subr.mxu0 0.0
      %951 = vmatpush2.msra.mxu0 0.0
      %952 = vmatprep.subr.mxu0 0.0
      %953 = vmatpush2.msra.mxu0 0.0
      %954 = vmatprep.subr.mxu0 0.0
      %955 = vmatpush2.msra.mxu0 0.0
      %956 = vmatprep.subr.mxu0 0.0
      %957 = vmatpush2.msra.mxu0 0.0
      %958 = vmatprep.subr.mxu0 0.0
      %959 = vmatpush2.msra.mxu0 0.0
      %960 = vmatprep.subr.mxu0 0.0
      %961 = vmatpush2.msra.mxu0 0.0
      %962 = vmatprep.subr.mxu0 0.0
      %963 = vmatpush2.msra.mxu0 0.0
      %964 = vmatprep.subr.mxu0 0.0
      %965 = vmatpush2.msra.mxu0 0.0
      %966 = vmatprep.subr.mxu0 0.0
      %967 = vmatpush2.msra.mxu0 0.0
      %968 = vmatprep.mubr.f32.mxu0 0.0
      %969 = vmatmul.mubr.f32.gmra.mxu0 %v900
      %v970 = vpop.f32.mrf.mxu0
      %v971 = vadd.f32 0.0, %v970
      %v972 = vpop.f32.mrf.mxu0
      %973 = vdwg.mxu0
      %974 = vrot.lane.b32.xlu0 %v540, 112
      %v975 = vpop.permute.xlu0 %974
      %976 = vrot.lane.b32.xlu0 %v625, 112
      %v977 = vpop.permute.xlu0 %976
      %v978 = vsel %vm631, %v975, 0
      %v980 = vsel %vm631, %v977, 0
      %982 = vmatprep.subr.mxu0 0.0
      %983 = vmatpush1.xpose.msra.mxu0 0.0
      %984 = vmatprep.subr.mxu0 0.0
      %985 = vmatpush1.xpose.msra.mxu0 0.0
      %986 = vmatprep.subr.mxu0 0.0
      %987 = vmatpush1.xpose.msra.mxu0 0.0
      %988 = vmatprep.subr.mxu0 0.0
      %989 = vmatpush1.xpose.msra.mxu0 0.0
      %990 = vmatprep.subr.mxu0 0.0
      %991 = vmatpush1.xpose.msra.mxu0 0.0
      %992 = vmatprep.subr.mxu0 0.0
      %993 = vmatpush1.xpose.msra.mxu0 0.0
      %994 = vmatprep.subr.mxu0 0.0
      %995 = vmatpush1.xpose.msra.mxu0 0.0
      %996 = vmatprep.subr.mxu0 0.0
      %997 = vmatpush1.xpose.msra.mxu0 0.0
      %998 = vmatprep.subr.mxu0 0.0
      %999 = vmatpush1.xpose.msra.mxu0 0.0
      %1000 = vmatprep.subr.mxu0 0.0
      %1001 = vmatpush1.xpose.msra.mxu0 0.0
      %1002 = vmatprep.subr.mxu0 0.0
      %1003 = vmatpush1.xpose.msra.mxu0 0.0
      %1004 = vmatprep.subr.mxu0 0.0
      %1005 = vmatpush1.xpose.msra.mxu0 0.0
      %1006 = vmatprep.subr.mxu0 0.0
      %1007 = vmatpush1.xpose.msra.mxu0 0.0
      %1008 = vmatprep.subr.mxu0 0.0
      %1009 = vmatpush1.xpose.msra.mxu0 0.0
      %1010 = vmatprep.subr.mxu0 0.0
      %1011 = vmatpush1.xpose.msra.mxu0 0.0
      %1012 = vmatprep.subr.mxu0 0.0
      %1013 = vmatpush1.xpose.msra.mxu0 %v980
      %1014 = vmatprep.subr.mxu0 0.0
      %1015 = vmatpush2.xpose.msra.mxu0 0.0
      %1016 = vmatprep.subr.mxu0 0.0
      %1017 = vmatpush2.xpose.msra.mxu0 0.0
      %1018 = vmatprep.subr.mxu0 0.0
      %1019 = vmatpush2.xpose.msra.mxu0 0.0
      %1020 = vmatprep.subr.mxu0 0.0
      %1021 = vmatpush2.xpose.msra.mxu0 0.0
      %1022 = vmatprep.subr.mxu0 0.0
      %1023 = vmatpush2.xpose.msra.mxu0 0.0
      %1024 = vmatprep.subr.mxu0 0.0
      %1025 = vmatpush2.xpose.msra.mxu0 0.0
      %1026 = vmatprep.subr.mxu0 0.0
      %1027 = vmatpush2.xpose.msra.mxu0 0.0
      %1028 = vmatprep.subr.mxu0 0.0
      %1029 = vmatpush2.xpose.msra.mxu0 0.0
      %1030 = vmatprep.subr.mxu0 0.0
      %1031 = vmatpush2.xpose.msra.mxu0 0.0
      %1032 = vmatprep.subr.mxu0 0.0
      %1033 = vmatpush2.xpose.msra.mxu0 0.0
      %1034 = vmatprep.subr.mxu0 0.0
      %1035 = vmatpush2.xpose.msra.mxu0 0.0
      %1036 = vmatprep.subr.mxu0 0.0
      %1037 = vmatpush2.xpose.msra.mxu0 0.0
      %1038 = vmatprep.subr.mxu0 0.0
      %1039 = vmatpush2.xpose.msra.mxu0 0.0
      %1040 = vmatprep.subr.mxu0 0.0
      %1041 = vmatpush2.xpose.msra.mxu0 0.0
      %1042 = vmatprep.subr.mxu0 0.0
      %1043 = vmatpush2.xpose.msra.mxu0 0.0
      %1044 = vmatprep.subr.mxu0 0.0
      %1045 = vmatpush2.xpose.msra.mxu0 0.0
      %1046 = vmatprep.mubr.f32.mxu0 0.0
      %1047 = vmatmul.mubr.f32.gmra.mxu0 %v978
      %v1048 = vpop.f32.mrf.mxu0
      %v1049 = vadd.f32 0.0, %v1048
      %v1050 = vpop.f32.mrf.mxu0
      %1051 = vdwg.mxu0
      %v1052 = vmul.f32 %v1049, 0.35355338
      %v1053 = vadd.f32 %v1052, %v713
      %v1054 = vsel %vm716, %v1053, -inf
      %1055 = vmax.xlane.f32.xlu0 %v1054
      %v1056 = vpop.xlane.xlu0 %1055
      %v1057 = vsub.f32 %v1053, %v1056
      %v1058 = vmul.f32 %v1057, 1.442695
      %v1059 = vpow.pop %v1058
      %v1060 = vsel %vm716, %v1059, 0.0
      %1061 = vadd.xlane.f32.xlu0 %v1060
      %v1062 = vpop.xlane.xlu0 %1061
      %v1063 = vrcp.pop %v1062
      %v1064 = vmul.f32 %v1059, %v1063
      %1065 = vrot.lane.b32.xlu0 %v625, 80
      %v1066 = vpop.permute.xlu0 %1065
      %v1068 = vsel %vm716, %v1064, 0
      %v1070 = vsel %vm733, %v1066, 0
      %1072 = vmatprep.subr.mxu0 0.0
      %1073 = vmatpush1.msra.mxu0 0.0
      %1074 = vmatprep.subr.mxu0 0.0
      %1075 = vmatpush1.msra.mxu0 0.0
      %1076 = vmatprep.subr.mxu0 0.0
      %1077 = vmatpush1.msra.mxu0 0.0
      %1078 = vmatprep.subr.mxu0 0.0
      %1079 = vmatpush1.msra.mxu0 0.0
      %1080 = vmatprep.subr.mxu0 0.0
      %1081 = vmatpush1.msra.mxu0 0.0
      %1082 = vmatprep.subr.mxu0 0.0
      %1083 = vmatpush1.msra.mxu0 0.0
      %1084 = vmatprep.subr.mxu0 0.0
      %1085 = vmatpush1.msra.mxu0 0.0
      %1086 = vmatprep.subr.mxu0 0.0
      %1087 = vmatpush1.msra.mxu0 0.0
      %1088 = vmatprep.subr.mxu0 0.0
      %1089 = vmatpush1.msra.mxu0 0.0
      %1090 = vmatprep.subr.mxu0 0.0
      %1091 = vmatpush1.msra.mxu0 0.0
      %1092 = vmatprep.subr.mxu0 0.0
      %1093 = vmatpush1.msra.mxu0 0.0
      %1094 = vmatprep.subr.mxu0 0.0
      %1095 = vmatpush1.msra.mxu0 0.0
      %1096 = vmatprep.subr.mxu0 0.0
      %1097 = vmatpush1.msra.mxu0 0.0
      %1098 = vmatprep.subr.mxu0 0.0
      %1099 = vmatpush1.msra.mxu0 0.0
      %1100 = vmatprep.subr.mxu0 0.0
      %1101 = vmatpush1.msra.mxu0 0.0
      %1102 = vmatprep.subr.mxu0 0.0
      %1103 = vmatpush1.msra.mxu0 %v1070
      %1104 = vmatprep.subr.mxu0 0.0
      %1105 = vmatpush2.msra.mxu0 0.0
      %1106 = vmatprep.subr.mxu0 0.0
      %1107 = vmatpush2.msra.mxu0 0.0
      %1108 = vmatprep.subr.mxu0 0.0
      %1109 = vmatpush2.msra.mxu0 0.0
      %1110 = vmatprep.subr.mxu0 0.0
      %1111 = vmatpush2.msra.mxu0 0.0
      %1112 = vmatprep.subr.mxu0 0.0
      %1113 = vmatpush2.msra.mxu0 0.0
      %1114 = vmatprep.subr.mxu0 0.0
      %1115 = vmatpush2.msra.mxu0 0.0
      %1116 = vmatprep.subr.mxu0 0.0
      %1117 = vmatpush2.msra.mxu0 0.0
      %1118 = vmatprep.subr.mxu0 0.0
      %1119 = vmatpush2.msra.mxu0 0.0
      %1120 = vmatprep.subr.mxu0 0.0
      %1121 = vmatpush2.msra.mxu0 0.0
      %1122 = vmatprep.subr.mxu0 0.0
      %1123 = vmatpush2.msra.mxu0 0.0
      %1124 = vmatprep.subr.mxu0 0.0
      %1125 = vmatpush2.msra.mxu0 0.0
      %1126 = vmatprep.subr.mxu0 0.0
      %1127 = vmatpush2.msra.mxu0 0.0
      %1128 = vmatprep.subr.mxu0 0.0
      %1129 = vmatpush2.msra.mxu0 0.0
      %1130 = vmatprep.subr.mxu0 0.0
      %1131 = vmatpush2.msra.mxu0 0.0
      %1132 = vmatprep.subr.mxu0 0.0
      %1133 = vmatpush2.msra.mxu0 0.0
      %1134 = vmatprep.subr.mxu0 0.0
      %1135 = vmatpush2.msra.mxu0 0.0
      %1136 = vmatprep.mubr.f32.mxu0 0.0
      %1137 = vmatmul.mubr.f32.gmra.mxu0 %v1068
      %v1138 = vpop.f32.mrf.mxu0
      %v1139 = vadd.f32 0.0, %v1138
      %v1140 = vpop.f32.mrf.mxu0
      %1141 = vdwg.mxu0
      %1142 = vrot.lane.b32.xlu0 %v540, 104
      %v1143 = vpop.permute.xlu0 %1142
      %1144 = vrot.lane.b32.xlu0 %v625, 104
      %v1145 = vpop.permute.xlu0 %1144
      %v1146 = vsel %vm631, %v1143, 0
      %v1148 = vsel %vm631, %v1145, 0
      %1150 = vmatprep.subr.mxu0 0.0
      %1151 = vmatpush1.xpose.msra.mxu0 0.0
      %1152 = vmatprep.subr.mxu0 0.0
      %1153 = vmatpush1.xpose.msra.mxu0 0.0
      %1154 = vmatprep.subr.mxu0 0.0
      %1155 = vmatpush1.xpose.msra.mxu0 0.0
      %1156 = vmatprep.subr.mxu0 0.0
      %1157 = vmatpush1.xpose.msra.mxu0 0.0
      %1158 = vmatprep.subr.mxu0 0.0
      %1159 = vmatpush1.xpose.msra.mxu0 0.0
      %1160 = vmatprep.subr.mxu0 0.0
      %1161 = vmatpush1.xpose.msra.mxu0 0.0
      %1162 = vmatprep.subr.mxu0 0.0
      %1163 = vmatpush1.xpose.msra.mxu0 0.0
      %1164 = vmatprep.subr.mxu0 0.0
      %1165 = vmatpush1.xpose.msra.mxu0 0.0
      %1166 = vmatprep.subr.mxu0 0.0
      %1167 = vmatpush1.xpose.msra.mxu0 0.0
      %1168 = vmatprep.subr.mxu0 0.0
      %1169 = vmatpush1.xpose.msra.mxu0 0.0
      %1170 = vmatprep.subr.mxu0 0.0
      %1171 = vmatpush1.xpose.msra.mxu0 0.0
      %1172 = vmatprep.subr.mxu0 0.0
      %1173 = vmatpush1.xpose.msra.mxu0 0.0
      %1174 = vmatprep.subr.mxu0 0.0
      %1175 = vmatpush1.xpose.msra.mxu0 0.0
      %1176 = vmatprep.subr.mxu0 0.0
      %1177 = vmatpush1.xpose.msra.mxu0 0.0
      %1178 = vmatprep.subr.mxu0 0.0
      %1179 = vmatpush1.xpose.msra.mxu0 0.0
      %1180 = vmatprep.subr.mxu0 0.0
      %1181 = vmatpush1.xpose.msra.mxu0 %v1148
      %1182 = vmatprep.subr.mxu0 0.0
      %1183 = vmatpush2.xpose.msra.mxu0 0.0
      %1184 = vmatprep.subr.mxu0 0.0
      %1185 = vmatpush2.xpose.msra.mxu0 0.0
      %1186 = vmatprep.subr.mxu0 0.0
      %1187 = vmatpush2.xpose.msra.mxu0 0.0
      %1188 = vmatprep.subr.mxu0 0.0
      %1189 = vmatpush2.xpose.msra.mxu0 0.0
      %1190 = vmatprep.subr.mxu0 0.0
      %1191 = vmatpush2.xpose.msra.mxu0 0.0
      %1192 = vmatprep.subr.mxu0 0.0
      %1193 = vmatpush2.xpose.msra.mxu0 0.0
      %1194 = vmatprep.subr.mxu0 0.0
      %1195 = vmatpush2.xpose.msra.mxu0 0.0
      %1196 = vmatprep.subr.mxu0 0.0
      %1197 = vmatpush2.xpose.msra.mxu0 0.0
      %1198 = vmatprep.subr.mxu0 0.0
      %1199 = vmatpush2.xpose.msra.mxu0 0.0
      %1200 = vmatprep.subr.mxu0 0.0
      %1201 = vmatpush2.xpose.msra.mxu0 0.0
      %1202 = vmatprep.subr.mxu0 0.0
      %1203 = vmatpush2.xpose.msra.mxu0 0.0
      %1204 = vmatprep.subr.mxu0 0.0
      %1205 = vmatpush2.xpose.msra.mxu0 0.0
      %1206 = vmatprep.subr.mxu0 0.0
      %1207 = vmatpush2.xpose.msra.mxu0 0.0
      %1208 = vmatprep.subr.mxu0 0.0
      %1209 = vmatpush2.xpose.msra.mxu0 0.0
      %1210 = vmatprep.subr.mxu0 0.0
      %1211 = vmatpush2.xpose.msra.mxu0 0.0
      %1212 = vmatprep.subr.mxu0 0.0
      %1213 = vmatpush2.xpose.msra.mxu0 0.0
      %1214 = vmatprep.mubr.f32.mxu0 0.0
      %1215 = vmatmul.mubr.f32.gmra.mxu0 %v1146
      %v1216 = vpop.f32.mrf.mxu0
      %v1217 = vadd.f32 0.0, %v1216
      %v1218 = vpop.f32.mrf.mxu0
      %1219 = vdwg.mxu0
      %v1220 = vmul.f32 %v1217, 0.35355338
      %v1221 = vadd.f32 %v1220, %v713
      %v1222 = vsel %vm716, %v1221, -inf
      %1223 = vmax.xlane.f32.xlu0 %v1222
      %v1224 = vpop.xlane.xlu0 %1223
      %v1225 = vsub.f32 %v1221, %v1224
      %v1226 = vmul.f32 %v1225, 1.442695
      %v1227 = vpow.pop %v1226
      %v1228 = vsel %vm716, %v1227, 0.0
      %1229 = vadd.xlane.f32.xlu0 %v1228
      %v1230 = vpop.xlane.xlu0 %1229
      %v1231 = vrcp.pop %v1230
      %v1232 = vmul.f32 %v1227, %v1231
      %1233 = vrot.lane.b32.xlu0 %v625, 72
      %v1234 = vpop.permute.xlu0 %1233
      %v1236 = vsel %vm716, %v1232, 0
      %v1238 = vsel %vm733, %v1234, 0
      %1240 = vmatprep.subr.mxu0 0.0
      %1241 = vmatpush1.msra.mxu0 0.0
      %1242 = vmatprep.subr.mxu0 0.0
      %1243 = vmatpush1.msra.mxu0 0.0
      %1244 = vmatprep.subr.mxu0 0.0
      %1245 = vmatpush1.msra.mxu0 0.0
      %1246 = vmatprep.subr.mxu0 0.0
      %1247 = vmatpush1.msra.mxu0 0.0
      %1248 = vmatprep.subr.mxu0 0.0
      %1249 = vmatpush1.msra.mxu0 0.0
      %1250 = vmatprep.subr.mxu0 0.0
      %1251 = vmatpush1.msra.mxu0 0.0
      %1252 = vmatprep.subr.mxu0 0.0
      %1253 = vmatpush1.msra.mxu0 0.0
      %1254 = vmatprep.subr.mxu0 0.0
      %1255 = vmatpush1.msra.mxu0 0.0
      %1256 = vmatprep.subr.mxu0 0.0
      %1257 = vmatpush1.msra.mxu0 0.0
      %1258 = vmatprep.subr.mxu0 0.0
      %1259 = vmatpush1.msra.mxu0 0.0
      %1260 = vmatprep.subr.mxu0 0.0
      %1261 = vmatpush1.msra.mxu0 0.0
      %1262 = vmatprep.subr.mxu0 0.0
      %1263 = vmatpush1.msra.mxu0 0.0
      %1264 = vmatprep.subr.mxu0 0.0
      %1265 = vmatpush1.msra.mxu0 0.0
      %1266 = vmatprep.subr.mxu0 0.0
      %1267 = vmatpush1.msra.mxu0 0.0
      %1268 = vmatprep.subr.mxu0 0.0
      %1269 = vmatpush1.msra.mxu0 0.0
      %1270 = vmatprep.subr.mxu0 0.0
      %1271 = vmatpush1.msra.mxu0 %v1238
      %1272 = vmatprep.subr.mxu0 0.0
      %1273 = vmatpush2.msra.mxu0 0.0
      %1274 = vmatprep.subr.mxu0 0.0
      %1275 = vmatpush2.msra.mxu0 0.0
      %1276 = vmatprep.subr.mxu0 0.0
      %1277 = vmatpush2.msra.mxu0 0.0
      %1278 = vmatprep.subr.mxu0 0.0
      %1279 = vmatpush2.msra.mxu0 0.0
      %1280 = vmatprep.subr.mxu0 0.0
      %1281 = vmatpush2.msra.mxu0 0.0
      %1282 = vmatprep.subr.mxu0 0.0
      %1283 = vmatpush2.msra.mxu0 0.0
      %1284 = vmatprep.subr.mxu0 0.0
      %1285 = vmatpush2.msra.mxu0 0.0
      %1286 = vmatprep.subr.mxu0 0.0
      %1287 = vmatpush2.msra.mxu0 0.0
      %1288 = vmatprep.subr.mxu0 0.0
      %1289 = vmatpush2.msra.mxu0 0.0
      %1290 = vmatprep.subr.mxu0 0.0
      %1291 = vmatpush2.msra.mxu0 0.0
      %1292 = vmatprep.subr.mxu0 0.0
      %1293 = vmatpush2.msra.mxu0 0.0
      %1294 = vmatprep.subr.mxu0 0.0
      %1295 = vmatpush2.msra.mxu0 0.0
      %1296 = vmatprep.subr.mxu0 0.0
      %1297 = vmatpush2.msra.mxu0 0.0
      %1298 = vmatprep.subr.mxu0 0.0
      %1299 = vmatpush2.msra.mxu0 0.0
      %1300 = vmatprep.subr.mxu0 0.0
      %1301 = vmatpush2.msra.mxu0 0.0
      %1302 = vmatprep.subr.mxu0 0.0
      %1303 = vmatpush2.msra.mxu0 0.0
      %1304 = vmatprep.mubr.f32.mxu0 0.0
      %1305 = vmatmul.mubr.f32.gmra.mxu0 %v1236
      %v1306 = vpop.f32.mrf.mxu0
      %v1307 = vadd.f32 0.0, %v1306
      %v1308 = vpop.f32.mrf.mxu0
      %1309 = vdwg.mxu0
      %1311 = vrot.lane.b32.xlu0 %v971, 8
      %v1312 = vpop.permute.xlu0 %1311
      %1315 = vrot.lane.b32.xlu0 %v1139, 16
      %v1316 = vpop.permute.xlu0 %1315
      %1319 = vrot.lane.b32.xlu0 %v1307, 24
      %v1320 = vpop.permute.xlu0 %1319
      %v1322 = vsel %vm631, %v803, %v1312
      %vm1323 = vcmask 130048
      %v1324 = vsel %vm1323, %v1322, %v1316
      %vm1325 = vcmask 195584
      %v1326 = vsel %vm1325, %v1324, %v1320
      %v1327 = vld [vmem:[%s6] sm:$0xff]
      %v1328 = vld [vmem:[%s6 + $0x8] sm:$0xff]
      %v1329 = vld [vmem:[%s6 + $0x10] sm:$0xff]
      %v1330 = vld [vmem:[%s6 + $0x18] sm:$0xff]
      %v1331 = vld [vmem:[%s7] sm:$0x1]
      %v1333 = vlaneseq
      %v1334 = vshrl.u32 %v1333, 7
      %v1335 = vsub.s32 0, %v1334
      %v1336 = vrot.slane %v1331, %v1335
      %v1339 = vsel %vm469, %v1326, 0
      %1341 = vmatprep.subr.mxu0 0.0
      %1342 = vmatpush1.msra.mxu0 0.0
      %1343 = vmatprep.subr.mxu0 0.0
      %1344 = vmatpush1.msra.mxu0 0.0
      %1345 = vmatprep.subr.mxu0 0.0
      %1346 = vmatpush1.msra.mxu0 0.0
      %1347 = vmatprep.subr.mxu0 0.0
      %1348 = vmatpush1.msra.mxu0 0.0
      %1349 = vmatprep.subr.mxu0 0.0
      %1350 = vmatpush1.msra.mxu0 0.0
      %1351 = vmatprep.subr.mxu0 0.0
      %1352 = vmatpush1.msra.mxu0 0.0
      %1353 = vmatprep.subr.mxu0 0.0
      %1354 = vmatpush1.msra.mxu0 0.0
      %1355 = vmatprep.subr.mxu0 0.0
      %1356 = vmatpush1.msra.mxu0 0.0
      %1357 = vmatprep.subr.mxu0 0.0
      %1358 = vmatpush1.msra.mxu0 0.0
      %1359 = vmatprep.subr.mxu0 0.0
      %1360 = vmatpush1.msra.mxu0 0.0
      %1361 = vmatprep.subr.mxu0 0.0
      %1362 = vmatpush1.msra.mxu0 0.0
      %1363 = vmatprep.subr.mxu0 0.0
      %1364 = vmatpush1.msra.mxu0 0.0
      %1365 = vmatprep.subr.mxu0 0.0
      %1366 = vmatpush1.msra.mxu0 %v1330
      %1367 = vmatprep.subr.mxu0 0.0
      %1368 = vmatpush1.msra.mxu0 %v1329
      %1369 = vmatprep.subr.mxu0 0.0
      %1370 = vmatpush1.msra.mxu0 %v1328
      %1371 = vmatprep.subr.mxu0 0.0
      %1372 = vmatpush1.msra.mxu0 %v1327
      %1373 = vmatprep.subr.mxu0 0.0
      %1374 = vmatpush2.msra.mxu0 0.0
      %1375 = vmatprep.subr.mxu0 0.0
      %1376 = vmatpush2.msra.mxu0 0.0
      %1377 = vmatprep.subr.mxu0 0.0
      %1378 = vmatpush2.msra.mxu0 0.0
      %1379 = vmatprep.subr.mxu0 0.0
      %1380 = vmatpush2.msra.mxu0 0.0
      %1381 = vmatprep.subr.mxu0 0.0
      %1382 = vmatpush2.msra.mxu0 0.0
      %1383 = vmatprep.subr.mxu0 0.0
      %1384 = vmatpush2.msra.mxu0 0.0
      %1385 = vmatprep.subr.mxu0 0.0
      %1386 = vmatpush2.msra.mxu0 0.0
      %1387 = vmatprep.subr.mxu0 0.0
      %1388 = vmatpush2.msra.mxu0 0.0
      %1389 = vmatprep.subr.mxu0 0.0
      %1390 = vmatpush2.msra.mxu0 0.0
      %1391 = vmatprep.subr.mxu0 0.0
      %1392 = vmatpush2.msra.mxu0 0.0
      %1393 = vmatprep.subr.mxu0 0.0
      %1394 = vmatpush2.msra.mxu0 0.0
      %1395 = vmatprep.subr.mxu0 0.0
      %1396 = vmatpush2.msra.mxu0 0.0
      %1397 = vmatprep.subr.mxu0 0.0
      %1398 = vmatpush2.msra.mxu0 0.0
      %1399 = vmatprep.subr.mxu0 0.0
      %1400 = vmatpush2.msra.mxu0 0.0
      %1401 = vmatprep.subr.mxu0 0.0
      %1402 = vmatpush2.msra.mxu0 0.0
      %1403 = vmatprep.subr.mxu0 0.0
      %1404 = vmatpush2.msra.mxu0 0.0
      %1405 = vmatprep.mubr.f32.mxu0 0.0
      %1406 = vmatmul.mubr.f32.gmra.mxu0 %v1339
      %v1407 = vpop.f32.mrf.mxu0
      %v1408 = vadd.f32 %v1336, %v1407
      %v1409 = vpop.f32.mrf.mxu0
      %1410 = vdwg.mxu0
      %v1411 = vadd.f32 %v1408, %v457
      %v1412 = vld [vmem:[%s8] sm:$0x1]
      %v1413 = vld [vmem:[%s9] sm:$0x1]
      %v1414 = vsel %vm469, %v1411, 0.0
      %1415 = vadd.xlane.f32.xlu0 %v1414
      %v1416 = vpop.xlane.xlu0 %1415
      %v1417 = vrcp.pop 32.0
      %v1418 = vmul.f32 %v1416, %v1417
      %v1419 = vsub.f32 %v1411, %v1418
      %v1420 = vmul.f32 %v1419, %v1419
      %v1421 = vsel %vm469, %v1420, 0.0
      %1422 = vadd.xlane.f32.xlu0 %v1421
      %v1423 = vpop.xlane.xlu0 %1422
      %v1424 = vmul.f32 %v1423, %v1417
      %v1425 = vadd.f32 %v1424, 1e-05
      %v1426 = vrsqrt.pop %v1425
      %v1427 = vmul.f32 %v1419, %v1426
      %v1429 = vlaneseq
      %v1430 = vshrl.u32 %v1429, 7
      %v1431 = vsub.s32 0, %v1430
      %v1432 = vrot.slane %v1412, %v1431
      %v1434 = vmul.f32 %v1427, %v1432
      %v1436 = vlaneseq
      %v1437 = vshrl.u32 %v1436, 7
      %v1438 = vsub.s32 0, %v1437
      %v1439 = vrot.slane %v1413, %v1438
      %v1441 = vadd.f32 %v1434, %v1439
      %v1442 = vld [vmem:[%s452] sm:$0xff]
      %1444 = vset.pattern.permute.xlu0 0
      %1445 = vperm.xlu0 %1444, %v1442
      %v1446 = vpop.permute.xlu0 %1445
      %v1448 = vmul.f32 %v1441, %v1446
      %1449 = vst.msk [vmem:[%s456] sm:$0xff] %vm469, %v1448
      %p1450 = scmp.lt.s32.totalorder %s23, 1
      %s1451 = scalar_select %p1450, %s23, 1
      %s1452 = smul.addr %s1451, 8
      %s1453 = scalar_lea.vmem %s12, %s1452
      // Predicated region
      $region69: #{decoder_forward.7} parent=67 // pred_check
        %p1454 = pneg %p313
      $region70: #{decoder_forward.7} parent=67 // pred_check_branch
        %1456 = sbr.rel (%p1454) target = $region72
      $region71: #{decoder_forward.7} parent=67 // pred_region
        _
      $region72: #{decoder_forward.7} parent=67 // pred_fallthru
        _
    $region68: #{decoder_forward.7} parent=5 // pred_fallthru
      _
    %p1457 = scmp.le.s32.totalorder 2, %s18
    // Predicated region
    $region73: #{decoder_forward.7} parent=5 // pred_check
      %p1458 = pneg %p1457
    $region74: #{decoder_forward.7} parent=5 // pred_check_branch
      %1460 = sbr.rel (%p1458) target = $region76
    $region75: #{decoder_forward.7} parent=5 // pred_region
      %s1461 = ssub.s32 %s18, 2
      // Predicated region
      $region77: #{decoder_forward.7} parent=75 // pred_check
        %p1462 = pneg %p319
      $region78: #{decoder_forward.7} parent=75 // pred_check_branch
        %1464 = sbr.rel (%p1462) target = $region80
      $region79: #{decoder_forward.7} parent=75 // pred_region
        %p1465 = scmp.lt.s32.totalorder %s24, 1
        %s1466 = scalar_select %p1465, %s24, 1
        %s1467 = smul.addr %s1466, 8
        %s1468 = scalar_lea.vmem %s12, %s1467
      $region80: #{decoder_forward.7} parent=75 // pred_fallthru
        _
    $region76: #{decoder_forward.7} parent=5 // pred_fallthru
      _
  $region6: #{decoder_forward.7} parent=0 // loop_footer
    %s22 = sadd.s32 1, %s18
  $region7: #{decoder_forward.7} parent=0 // loop_footer_branch
    %17 = sbr.rel target = $region3
  $region8: #{decoder_forward.7} parent=0 // loop_exit
    _

</llo_original>
